<compile_context>
chip_gen: v7x
topology: tpu7x:2x2x1
jax: 0.10.0
libtpu: 0.0.40
codegen_flags: <defaults>
</compile_context>

<pallas_src>
import functools

import jax
import jax.numpy as jnp
import numpy as np
from jax.experimental import pallas as pl
from jax.experimental.pallas import tpu as pltpu

PAD = 4      # conv padding (both convs)
KSIZE = 8    # conv kernel size (both convs)
B2P = 8      # padded (fwd+rev) batch rows per position (sublane aligned)


# ----------------------------------------------------------------------------
# Fused kernel: conv1 (im2col matmul) -> conv2 (im2col matmul) -> LSTM -> head
# ----------------------------------------------------------------------------
def fused_kernel(x_ref, w1_ref, b1_ref, w2_ref, b2_ref,
                 wih_ref, whh_ref, bl_ref,
                 wf1_ref, bf1_ref, wf2_ref, bf2_ref,
                 o_ref,
                 h1_ref, tap_ref, *, b2p, ksize):
    """Everything is position-major: row index = position * b2p + batch.

    x_ref : (L_out1*b2p, K*C_in)   conv1 im2col (batch rows >= 2B are zero)
    w1_ref: (K*C_in, 32)  b1_ref: (1, 32)
    w2_ref: (K*32, 64)    b2_ref: (1, 64)      conv2 im2col weights
    wih_ref: (64, 4H)  whh_ref: (H, 4H) bf16   bl_ref: (1, 4H)
    wf1_ref: (H, 128)  bf1_ref: (1, 128)  wf2_ref: (128, C)  bf2_ref: (1, C)
    o_ref  : (B, C)  logits
    h1_ref : (L_pad2*b2p, 32) VMEM  position-padded conv1 output (conv2 input)
    tap_ref: (T*b2p, K*32)    VMEM  conv2 im2col tap buffer
    """
    H = whh_ref.shape[0]
    C1 = w1_ref.shape[1]
    B = o_ref.shape[0]
    n1 = x_ref.shape[0]                              # L_out1 * b2p
    rows_pad = (h1_ref.shape[0] - n1) // 2           # PAD * b2p (multiple of 8)
    TB = tap_ref.shape[0]                            # T * b2p
    T = TB // b2p

    # ---- conv1: one im2col matmul + bias + ReLU -----------------------------
    v1 = jnp.maximum(
        jnp.dot(x_ref[...], w1_ref[...], preferred_element_type=jnp.float32)
        + b1_ref[...], 0.0)                          # (L_out1*b2p, 32)

    # Zero only the two position-pad bands; batch-pad rows may hold relu(bias)
    # garbage -- it never mixes into the real batch rows downstream.
    h1_ref[pl.ds(0, rows_pad), :] = jnp.zeros((rows_pad, C1), jnp.float32)
    h1_ref[pl.ds(rows_pad + n1, rows_pad), :] = jnp.zeros((rows_pad, C1),
                                                          jnp.float32)
    h1_ref[pl.ds(rows_pad, n1), :] = v1

    # ---- conv2: in-kernel im2col (8 aligned tap copies) + ONE 256-deep matmul
    for k in range(ksize):                           # static unroll (K = 8)
        tap_ref[:, k * C1:(k + 1) * C1] = h1_ref[pl.ds(k * b2p, TB), :]
    v2 = jnp.maximum(
        jnp.dot(tap_ref[...], w2_ref[...], preferred_element_type=jnp.float32)
        + b2_ref[...], 0.0)                          # (T*b2p, 64)

    # ---- LSTM: hoisted input projection, kept in registers -------------------
    xw = jnp.dot(v2, wih_ref[...],
                 preferred_element_type=jnp.float32) + bl_ref[...]   # (T*b2p, 4H)

    whh = whh_ref[...]                               # bf16 (H, 4H), MXU operand
    h = jnp.zeros((b2p, H), jnp.float32)
    c = jnp.zeros((b2p, H), jnp.float32)
    for t in range(T):                               # static unroll (T = 18)
        g = xw[t * b2p:(t + 1) * b2p, :] + jnp.dot(
            h.astype(jnp.bfloat16), whh, preferred_element_type=jnp.float32)
        sg = jax.nn.sigmoid(g)                       # one full-width EUP dispatch
        tg = jnp.tanh(g)                             # one full-width EUP dispatch
        # gate order matches PyTorch: i, f, g, o
        c = sg[:, H:2 * H] * c + sg[:, 0:H] * tg[:, 2 * H:3 * H]
        h = sg[:, 3 * H:4 * H] * jnp.tanh(c)

    # ---- head: max(fwd, rev) of last hidden -> relu(fc1) -> fc2 ---------------
    comb = jnp.maximum(h[0:B, :], h[B:2 * B, :])     # (B, H)
    z = jnp.maximum(
        jnp.dot(comb, wf1_ref[...], preferred_element_type=jnp.float32)
        + bf1_ref[...], 0.0)
    out = jnp.dot(z, wf2_ref[...],
                  preferred_element_type=jnp.float32) + bf2_ref[...]
    o_ref[...] = out.astype(o_ref.dtype)


# ----------------------------------------------------------------------------
# Wrapper: one pallas_call, tiny (~KiB) JAX prolog for layout + conv1 im2col
# ----------------------------------------------------------------------------
@jax.jit
def model_forward(x, params):
    """x: (2, B, C_in, L) stacked (forward_seq, reverse_seq), PyTorch NCL."""
    two, B, C_in, L = x.shape
    B2 = two * B
    assert B2 <= B2P
    L_out1 = L + 2 * PAD - KSIZE + 1             # 17
    L_pad2 = L_out1 + 2 * PAD                    # 25
    T = L_pad2 - KSIZE + 1                       # 18
    C1 = params["w_c1"].shape[2]                 # 32
    C2 = params["w_c2"].shape[2]                 # 64
    C = params["w2"].shape[1]                    # num_classes

    # Input prep (<10 KiB of data): NCL -> position-major (l, batch) rows,
    # zero-pad batch rows up to B2P and positions by PAD, then conv1 im2col.
    # This fuses into one tiny XLA op ahead of the single Pallas launch.
    # TODO(synk): fold this im2col prolog into the kernel to drop one dispatch.
    xc = jnp.transpose(x.reshape(B2, C_in, L), (0, 2, 1))            # (B2, L, C_in)
    xp = jnp.pad(xc, ((0, B2P - B2), (PAD, PAD), (0, 0)))            # (B2P, L+2P, C_in)
    cols = jnp.concatenate([xp[:, k:k + L_out1, :] for k in range(KSIZE)],
                           axis=-1)                                  # (B2P, L_out1, K*C_in)
    im2col = jnp.transpose(cols, (1, 0, 2)).reshape(L_out1 * B2P, KSIZE * C_in)

    w1f = params["w_c1"].reshape(KSIZE * C_in, C1)                   # (K*C_in, 32)
    w2f = params["w_c2"].reshape(KSIZE * C1, C2)                     # (K*32, 64)
    whh_bf16 = params["w_hh"].astype(jnp.bfloat16)                   # MXU operand only

    kernel = functools.partial(fused_kernel, b2p=B2P, ksize=KSIZE)
    return pl.pallas_call(
        kernel,
        out_shape=jax.ShapeDtypeStruct((B, C), x.dtype),
        scratch_shapes=[
            pltpu.VMEM((L_pad2 * B2P, C1), jnp.float32),       # padded conv1 out
            pltpu.VMEM((T * B2P, KSIZE * C1), jnp.float32),    # conv2 im2col taps
        ],
    )(im2col, w1f, params["b_c1"].reshape(1, -1),
      w2f, params["b_c2"].reshape(1, -1),
      params["w_ih"], whh_bf16, params["b_lstm"].reshape(1, -1),
      params["w1"], params["b1"].reshape(1, -1),
      params["w2"], params["b2"].reshape(1, -1))


# ----------------------------------------------------------------------------
# Pure-JAX reference (sanity check)
# ----------------------------------------------------------------------------
def reference_forward(x, p):
    def conv_relu_ref(xc, w, b, pad=PAD):
        B, L, Cin = xc.shape
        K, _, Cout = w.shape
        xp = jnp.pad(xc, ((0, 0), (pad, pad), (0, 0)))
        L_out = L + 2 * pad - K + 1
        acc = jnp.zeros((B, L_out, Cout), jnp.float32) + b
        for k in range(K):
            acc = acc + jnp.einsum("blc,co->blo", xp[:, k:k + L_out, :], w[k])
        return jax.nn.relu(acc)

    def lstm_ref(seq, w_ih, w_hh, b):
        T, B, D = seq.shape
        H = w_hh.shape[0]
        h = jnp.zeros((B, H), jnp.float32)
        c = jnp.zeros((B, H), jnp.float32)
        for t in range(T):
            gates = seq[t] @ w_ih + h @ w_hh + b
            i = jax.nn.sigmoid(gates[:, :H])
            f = jax.nn.sigmoid(gates[:, H:2 * H])
            g = jnp.tanh(gates[:, 2 * H:3 * H])
            o = jax.nn.sigmoid(gates[:, 3 * H:])
            c = f * c + i * g
            h = o * jnp.tanh(c)
        return h

    def branch(x_ncl):
        xc = jnp.transpose(x_ncl, (0, 2, 1))
        h1 = conv_relu_ref(xc, p["w_c1"], p["b_c1"])
        h2 = conv_relu_ref(h1, p["w_c2"], p["b_c2"])
        return lstm_ref(jnp.transpose(h2, (1, 0, 2)), p["w_ih"], p["w_hh"],
                        p["b_lstm"])

    comb = jnp.maximum(branch(x[0]), branch(x[1]))
    h1 = jax.nn.relu(comb @ p["w1"] + p["b1"])
    return h1 @ p["w2"] + p["b2"]


# ----------------------------------------------------------------------------
# Main
# ----------------------------------------------------------------------------
if __name__ == "__main__":
    B = 2            # batch
    C_IN = 4         # input_size (one-hot nucleotides)
    L = 16           # window / sequence length
    H = 32           # hidden_size
    NUM_CLASSES = 2

    key = jax.random.PRNGKey(0)
    ks = jax.random.split(key, 16)
    s = 0.1
    # NOTE on loading real PyTorch weights into this convention:
    #   Conv1d.weight (C_out, C_in, K)      -> transpose to (K, C_in, C_out)
    #   lstm.weight_ih_l0 (4H, in)          -> transpose to (in, 4H)
    #   lstm.weight_hh_l0 (4H, H)           -> transpose to (H, 4H)
    #   b_lstm = bias_ih_l0 + bias_hh_l0    (gate order i, f, g, o)
    #   Linear.weight (out, in)             -> transpose to (in, out)
    params = {
        # conv1: in=C_IN out=32, k=8   (stored as (K, C_in, C_out))
        "w_c1": s * jax.random.normal(ks[0], (KSIZE, C_IN, 32), jnp.float32),
        "b_c1": s * jax.random.normal(ks[1], (32,), jnp.float32),
        # conv2: in=32 out=64, k=8
        "w_c2": s * jax.random.normal(ks[2], (KSIZE, 32, 64), jnp.float32),
        "b_c2": s * jax.random.normal(ks[3], (64,), jnp.float32),
        # LSTM(64 -> H), gates ordered i,f,g,o ; b_ih + b_hh folded together
        "w_ih": s * jax.random.normal(ks[4], (64, 4 * H), jnp.float32),
        "w_hh": s * jax.random.normal(ks[5], (H, 4 * H), jnp.float32),
        "b_lstm": s * jax.random.normal(ks[6], (4 * H,), jnp.float32),
        # fc1: H -> 128 ; fc2: 128 -> num_classes
        "w1": s * jax.random.normal(ks[7], (H, 128), jnp.float32),
        "b1": s * jax.random.normal(ks[8], (128,), jnp.float32),
        "w2": s * jax.random.normal(ks[9], (128, NUM_CLASSES), jnp.float32),
        "b2": s * jax.random.normal(ks[10], (NUM_CLASSES,), jnp.float32),
    }

    # x stacks (forward_seq, reverse_seq): shape (2, B, C_in, L)
    x = jax.random.normal(ks[11], (2, B, C_IN, L), jnp.float32)

    out = jax.block_until_ready(model_forward(x, params))
    ref = jax.block_until_ready(reference_forward(x, params))

    # Everything is f32 except the bf16 operands of the 18-step recurrence
    # matmul; 1e-2 gives ~10x margin over the expected bf16-induced error.
    np.testing.assert_allclose(np.asarray(out), np.asarray(ref),
                               rtol=1e-2, atol=1e-2)
    assert out.shape == (B, NUM_CLASSES)

    print("KERNEL_OK")
</pallas_src>

<mosaic_0001>
module attributes {stable_mosaic.version = 11 : i64} {
  func.func @fused_kernel(%arg0: memref<136x32xf32, #tpu.memory_space<vmem>>, %arg1: memref<32x32xf32, #tpu.memory_space<vmem>>, %arg2: memref<1x32xf32, #tpu.memory_space<vmem>>, %arg3: memref<256x64xf32, #tpu.memory_space<vmem>>, %arg4: memref<1x64xf32, #tpu.memory_space<vmem>>, %arg5: memref<64x128xf32, #tpu.memory_space<vmem>>, %arg6: memref<32x128xbf16, #tpu.memory_space<vmem>>, %arg7: memref<1x128xf32, #tpu.memory_space<vmem>>, %arg8: memref<32x128xf32, #tpu.memory_space<vmem>>, %arg9: memref<1x128xf32, #tpu.memory_space<vmem>>, %arg10: memref<128x2xf32, #tpu.memory_space<vmem>>, %arg11: memref<1x2xf32, #tpu.memory_space<vmem>>, %arg12: memref<2x2xf32, #tpu.memory_space<vmem>>, %arg13: memref<200x32xf32, #tpu.memory_space<vmem>>, %arg14: memref<144x256xf32, #tpu.memory_space<vmem>>) attributes {dimension_semantics = [], scalar_prefetch = 0 : i64, scratch_operands = 2 : i64, tpu.core_type = #tpu.core_type<tc>} {
    %c0 = arith.constant 0 : index
    %c0_0 = arith.constant 0 : index
    %0 = vector.load %arg0[%c0, %c0_0] : memref<136x32xf32, #tpu.memory_space<vmem>>, vector<136x32xf32>
    %c0_1 = arith.constant 0 : index
    %c0_2 = arith.constant 0 : index
    %1 = vector.load %arg1[%c0_1, %c0_2] : memref<32x32xf32, #tpu.memory_space<vmem>>, vector<32x32xf32>
    %cst = arith.constant dense<0.000000e+00> : vector<136x32xf32>
    %2 = tpu.matmul %0, %1, %cst {dimension_numbers = #tpu.dot_dimension_numbers<[1], [0], [0], [1], [0, 0, 1, 1], [], []>} : vector<136x32xf32>, vector<32x32xf32>, vector<136x32xf32> -> vector<136x32xf32>
    %c0_3 = arith.constant 0 : index
    %c0_4 = arith.constant 0 : index
    %3 = vector.load %arg2[%c0_3, %c0_4] : memref<1x32xf32, #tpu.memory_space<vmem>>, vector<1x32xf32>
    %4 = vector.broadcast %3 : vector<1x32xf32> to vector<136x32xf32>
    %5 = arith.addf %2, %4 : vector<136x32xf32>
    %cst_5 = arith.constant 0.000000e+00 : f32
    %6 = vector.broadcast %cst_5 : f32 to vector<136x32xf32>
    %7 = arith.maximumf %5, %6 : vector<136x32xf32>
    %cst_6 = arith.constant 0.000000e+00 : f32
    %8 = vector.broadcast %cst_6 : f32 to vector<32x32xf32>
    %c0_7 = arith.constant 0 : index
    %c0_8 = arith.constant 0 : index
    %9 = vector.load %arg13[%c0_7, %c0_8] : memref<200x32xf32, #tpu.memory_space<vmem>>, vector<32x32xf32>
    tpu.vector_store %arg13[%c0_7, %c0_8], %8 {strides = array<i32>} : memref<200x32xf32, #tpu.memory_space<vmem>>, vector<32x32xf32>,
    %cst_9 = arith.constant 0.000000e+00 : f32
    %10 = vector.broadcast %cst_9 : f32 to vector<32x32xf32>
    %c168 = arith.constant 168 : index
    %c0_10 = arith.constant 0 : index
    %11 = vector.load %arg13[%c168, %c0_10] : memref<200x32xf32, #tpu.memory_space<vmem>>, vector<32x32xf32>
    tpu.vector_store %arg13[%c168, %c0_10], %10 {strides = array<i32>} : memref<200x32xf32, #tpu.memory_space<vmem>>, vector<32x32xf32>,
    %c32 = arith.constant 32 : index
    %c0_11 = arith.constant 0 : index
    %12 = vector.load %arg13[%c32, %c0_11] : memref<200x32xf32, #tpu.memory_space<vmem>>, vector<136x32xf32>
    tpu.vector_store %arg13[%c32, %c0_11], %7 {strides = array<i32>} : memref<200x32xf32, #tpu.memory_space<vmem>>, vector<136x32xf32>,
    %c0_12 = arith.constant 0 : index
    %c0_13 = arith.constant 0 : index
    %13 = vector.load %arg13[%c0_12, %c0_13] : memref<200x32xf32, #tpu.memory_space<vmem>>, vector<144x32xf32>
    %c0_14 = arith.constant 0 : index
    %c0_15 = arith.constant 0 : index
    %14 = vector.load %arg14[%c0_14, %c0_15] : memref<144x256xf32, #tpu.memory_space<vmem>>, vector<144x32xf32>
    tpu.vector_store %arg14[%c0_14, %c0_15], %13 {strides = array<i32>} : memref<144x256xf32, #tpu.memory_space<vmem>>, vector<144x32xf32>,
    %c8 = arith.constant 8 : index
    %c0_16 = arith.constant 0 : index
    %15 = vector.load %arg13[%c8, %c0_16] : memref<200x32xf32, #tpu.memory_space<vmem>>, vector<144x32xf32>
    %c0_17 = arith.constant 0 : index
    %c32_18 = arith.constant 32 : index
    %16 = vector.load %arg14[%c0_17, %c32_18] : memref<144x256xf32, #tpu.memory_space<vmem>>, vector<144x32xf32>
    tpu.vector_store %arg14[%c0_17, %c32_18], %15 {strides = array<i32>} : memref<144x256xf32, #tpu.memory_space<vmem>>, vector<144x32xf32>,
    %c16 = arith.constant 16 : index
    %c0_19 = arith.constant 0 : index
    %17 = vector.load %arg13[%c16, %c0_19] : memref<200x32xf32, #tpu.memory_space<vmem>>, vector<144x32xf32>
    %c0_20 = arith.constant 0 : index
    %c64 = arith.constant 64 : index
    %18 = vector.load %arg14[%c0_20, %c64] : memref<144x256xf32, #tpu.memory_space<vmem>>, vector<144x32xf32>
    tpu.vector_store %arg14[%c0_20, %c64], %17 {strides = array<i32>} : memref<144x256xf32, #tpu.memory_space<vmem>>, vector<144x32xf32>,
    %c24 = arith.constant 24 : index
    %c0_21 = arith.constant 0 : index
    %19 = vector.load %arg13[%c24, %c0_21] : memref<200x32xf32, #tpu.memory_space<vmem>>, vector<144x32xf32>
    %c0_22 = arith.constant 0 : index
    %c96 = arith.constant 96 : index
    %20 = vector.load %arg14[%c0_22, %c96] : memref<144x256xf32, #tpu.memory_space<vmem>>, vector<144x32xf32>
    tpu.vector_store %arg14[%c0_22, %c96], %19 {strides = array<i32>} : memref<144x256xf32, #tpu.memory_space<vmem>>, vector<144x32xf32>,
    %c32_23 = arith.constant 32 : index
    %c0_24 = arith.constant 0 : index
    %21 = vector.load %arg13[%c32_23, %c0_24] : memref<200x32xf32, #tpu.memory_space<vmem>>, vector<144x32xf32>
    %c0_25 = arith.constant 0 : index
    %c128 = arith.constant 128 : index
    %22 = vector.load %arg14[%c0_25, %c128] : memref<144x256xf32, #tpu.memory_space<vmem>>, vector<144x32xf32>
    tpu.vector_store %arg14[%c0_25, %c128], %21 {strides = array<i32>} : memref<144x256xf32, #tpu.memory_space<vmem>>, vector<144x32xf32>,
    %c40 = arith.constant 40 : index
    %c0_26 = arith.constant 0 : index
    %23 = vector.load %arg13[%c40, %c0_26] : memref<200x32xf32, #tpu.memory_space<vmem>>, vector<144x32xf32>
    %c0_27 = arith.constant 0 : index
    %c160 = arith.constant 160 : index
    %24 = vector.load %arg14[%c0_27, %c160] : memref<144x256xf32, #tpu.memory_space<vmem>>, vector<144x32xf32>
    tpu.vector_store %arg14[%c0_27, %c160], %23 {strides = array<i32>} : memref<144x256xf32, #tpu.memory_space<vmem>>, vector<144x32xf32>,
    %c48 = arith.constant 48 : index
    %c0_28 = arith.constant 0 : index
    %25 = vector.load %arg13[%c48, %c0_28] : memref<200x32xf32, #tpu.memory_space<vmem>>, vector<144x32xf32>
    %c0_29 = arith.constant 0 : index
    %c192 = arith.constant 192 : index
    %26 = vector.load %arg14[%c0_29, %c192] : memref<144x256xf32, #tpu.memory_space<vmem>>, vector<144x32xf32>
    tpu.vector_store %arg14[%c0_29, %c192], %25 {strides = array<i32>} : memref<144x256xf32, #tpu.memory_space<vmem>>, vector<144x32xf32>,
    %c56 = arith.constant 56 : index
    %c0_30 = arith.constant 0 : index
    %27 = vector.load %arg13[%c56, %c0_30] : memref<200x32xf32, #tpu.memory_space<vmem>>, vector<144x32xf32>
    %c0_31 = arith.constant 0 : index
    %c224 = arith.constant 224 : index
    %28 = vector.load %arg14[%c0_31, %c224] : memref<144x256xf32, #tpu.memory_space<vmem>>, vector<144x32xf32>
    tpu.vector_store %arg14[%c0_31, %c224], %27 {strides = array<i32>} : memref<144x256xf32, #tpu.memory_space<vmem>>, vector<144x32xf32>,
    %c0_32 = arith.constant 0 : index
    %c0_33 = arith.constant 0 : index
    %29 = vector.load %arg14[%c0_32, %c0_33] : memref<144x256xf32, #tpu.memory_space<vmem>>, vector<144x256xf32>
    %c0_34 = arith.constant 0 : index
    %c0_35 = arith.constant 0 : index
    %30 = vector.load %arg3[%c0_34, %c0_35] : memref<256x64xf32, #tpu.memory_space<vmem>>, vector<256x64xf32>
    %cst_36 = arith.constant dense<0.000000e+00> : vector<144x64xf32>
    %31 = tpu.matmul %29, %30, %cst_36 {dimension_numbers = #tpu.dot_dimension_numbers<[1], [0], [0], [1], [0, 0, 1, 1], [], []>} : vector<144x256xf32>, vector<256x64xf32>, vector<144x64xf32> -> vector<144x64xf32>
    %c0_37 = arith.constant 0 : index
    %c0_38 = arith.constant 0 : index
    %32 = vector.load %arg4[%c0_37, %c0_38] : memref<1x64xf32, #tpu.memory_space<vmem>>, vector<1x64xf32>
    %33 = vector.broadcast %32 : vector<1x64xf32> to vector<144x64xf32>
    %34 = arith.addf %31, %33 : vector<144x64xf32>
    %cst_39 = arith.constant 0.000000e+00 : f32
    %35 = vector.broadcast %cst_39 : f32 to vector<144x64xf32>
    %36 = arith.maximumf %34, %35 : vector<144x64xf32>
    %c0_40 = arith.constant 0 : index
    %c0_41 = arith.constant 0 : index
    %37 = vector.load %arg5[%c0_40, %c0_41] : memref<64x128xf32, #tpu.memory_space<vmem>>, vector<64x128xf32>
    %cst_42 = arith.constant dense<0.000000e+00> : vector<144x128xf32>
    %38 = tpu.matmul %36, %37, %cst_42 {dimension_numbers = #tpu.dot_dimension_numbers<[1], [0], [0], [1], [0, 0, 1, 1], [], []>} : vector<144x64xf32>, vector<64x128xf32>, vector<144x128xf32> -> vector<144x128xf32>
    %c0_43 = arith.constant 0 : index
    %c0_44 = arith.constant 0 : index
    %39 = vector.load %arg7[%c0_43, %c0_44] : memref<1x128xf32, #tpu.memory_space<vmem>>, vector<1x128xf32>
    %40 = vector.broadcast %39 : vector<1x128xf32> to vector<144x128xf32>
    %41 = arith.addf %38, %40 : vector<144x128xf32>
    %c0_45 = arith.constant 0 : index
    %c0_46 = arith.constant 0 : index
    %42 = vector.load %arg6[%c0_45, %c0_46] : memref<32x128xbf16, #tpu.memory_space<vmem>>, vector<32x128xbf16>
    %cst_47 = arith.constant 0.000000e+00 : f32
    %43 = vector.broadcast %cst_47 : f32 to vector<8x32xf32>
    %cst_48 = arith.constant 0.000000e+00 : f32
    %44 = vector.broadcast %cst_48 : f32 to vector<8x32xf32>
    %45 = vector.extract_strided_slice %41 {offsets = [0, 0], sizes = [8, 128], strides = [1, 1]} : vector<144x128xf32> to vector<8x128xf32>
    %46 = arith.truncf %43 : vector<8x32xf32> to vector<8x32xbf16>
    %cst_49 = arith.constant dense<0.000000e+00> : vector<8x128xf32>
    %47 = tpu.matmul %46, %42, %cst_49 {dimension_numbers = #tpu.dot_dimension_numbers<[1], [0], [0], [1], [0, 0, 1, 1], [], []>} : vector<8x32xbf16>, vector<32x128xbf16>, vector<8x128xf32> -> vector<8x128xf32>
    %48 = arith.addf %45, %47 : vector<8x128xf32>
    %49 = arith.negf %48 : vector<8x128xf32>
    %50 = math.exp %49 : vector<8x128xf32>
    %cst_50 = arith.constant 1.000000e+00 : f32
    %51 = vector.broadcast %cst_50 : f32 to vector<8x128xf32>
    %52 = arith.addf %51, %50 : vector<8x128xf32>
    %53 = arith.divf %51, %52 : vector<8x128xf32>
    %54 = math.tanh %48 : vector<8x128xf32>
    %55 = vector.extract_strided_slice %53 {offsets = [0, 32], sizes = [8, 32], strides = [1, 1]} : vector<8x128xf32> to vector<8x32xf32>
    %56 = arith.mulf %55, %44 : vector<8x32xf32>
    %57 = vector.extract_strided_slice %53 {offsets = [0, 0], sizes = [8, 32], strides = [1, 1]} : vector<8x128xf32> to vector<8x32xf32>
    %58 = vector.extract_strided_slice %54 {offsets = [0, 64], sizes = [8, 32], strides = [1, 1]} : vector<8x128xf32> to vector<8x32xf32>
    %59 = arith.mulf %57, %58 : vector<8x32xf32>
    %60 = arith.addf %56, %59 : vector<8x32xf32>
    %61 = vector.extract_strided_slice %53 {offsets = [0, 96], sizes = [8, 32], strides = [1, 1]} : vector<8x128xf32> to vector<8x32xf32>
    %62 = math.tanh %60 : vector<8x32xf32>
    %63 = arith.mulf %61, %62 : vector<8x32xf32>
    %64 = vector.extract_strided_slice %41 {offsets = [8, 0], sizes = [8, 128], strides = [1, 1]} : vector<144x128xf32> to vector<8x128xf32>
    %65 = arith.truncf %63 : vector<8x32xf32> to vector<8x32xbf16>
    %cst_51 = arith.constant dense<0.000000e+00> : vector<8x128xf32>
    %66 = tpu.matmul %65, %42, %cst_51 {dimension_numbers = #tpu.dot_dimension_numbers<[1], [0], [0], [1], [0, 0, 1, 1], [], []>} : vector<8x32xbf16>, vector<32x128xbf16>, vector<8x128xf32> -> vector<8x128xf32>
    %67 = arith.addf %64, %66 : vector<8x128xf32>
    %68 = arith.negf %67 : vector<8x128xf32>
    %69 = math.exp %68 : vector<8x128xf32>
    %cst_52 = arith.constant 1.000000e+00 : f32
    %70 = vector.broadcast %cst_52 : f32 to vector<8x128xf32>
    %71 = arith.addf %70, %69 : vector<8x128xf32>
    %72 = arith.divf %70, %71 : vector<8x128xf32>
    %73 = math.tanh %67 : vector<8x128xf32>
    %74 = vector.extract_strided_slice %72 {offsets = [0, 32], sizes = [8, 32], strides = [1, 1]} : vector<8x128xf32> to vector<8x32xf32>
    %75 = arith.mulf %74, %60 : vector<8x32xf32>
    %76 = vector.extract_strided_slice %72 {offsets = [0, 0], sizes = [8, 32], strides = [1, 1]} : vector<8x128xf32> to vector<8x32xf32>
    %77 = vector.extract_strided_slice %73 {offsets = [0, 64], sizes = [8, 32], strides = [1, 1]} : vector<8x128xf32> to vector<8x32xf32>
    %78 = arith.mulf %76, %77 : vector<8x32xf32>
    %79 = arith.addf %75, %78 : vector<8x32xf32>
    %80 = vector.extract_strided_slice %72 {offsets = [0, 96], sizes = [8, 32], strides = [1, 1]} : vector<8x128xf32> to vector<8x32xf32>
    %81 = math.tanh %79 : vector<8x32xf32>
    %82 = arith.mulf %80, %81 : vector<8x32xf32>
    %83 = vector.extract_strided_slice %41 {offsets = [16, 0], sizes = [8, 128], strides = [1, 1]} : vector<144x128xf32> to vector<8x128xf32>
    %84 = arith.truncf %82 : vector<8x32xf32> to vector<8x32xbf16>
    %cst_53 = arith.constant dense<0.000000e+00> : vector<8x128xf32>
    %85 = tpu.matmul %84, %42, %cst_53 {dimension_numbers = #tpu.dot_dimension_numbers<[1], [0], [0], [1], [0, 0, 1, 1], [], []>} : vector<8x32xbf16>, vector<32x128xbf16>, vector<8x128xf32> -> vector<8x128xf32>
    %86 = arith.addf %83, %85 : vector<8x128xf32>
    %87 = arith.negf %86 : vector<8x128xf32>
    %88 = math.exp %87 : vector<8x128xf32>
    %cst_54 = arith.constant 1.000000e+00 : f32
    %89 = vector.broadcast %cst_54 : f32 to vector<8x128xf32>
    %90 = arith.addf %89, %88 : vector<8x128xf32>
    %91 = arith.divf %89, %90 : vector<8x128xf32>
    %92 = math.tanh %86 : vector<8x128xf32>
    %93 = vector.extract_strided_slice %91 {offsets = [0, 32], sizes = [8, 32], strides = [1, 1]} : vector<8x128xf32> to vector<8x32xf32>
    %94 = arith.mulf %93, %79 : vector<8x32xf32>
    %95 = vector.extract_strided_slice %91 {offsets = [0, 0], sizes = [8, 32], strides = [1, 1]} : vector<8x128xf32> to vector<8x32xf32>
    %96 = vector.extract_strided_slice %92 {offsets = [0, 64], sizes = [8, 32], strides = [1, 1]} : vector<8x128xf32> to vector<8x32xf32>
    %97 = arith.mulf %95, %96 : vector<8x32xf32>
    %98 = arith.addf %94, %97 : vector<8x32xf32>
    %99 = vector.extract_strided_slice %91 {offsets = [0, 96], sizes = [8, 32], strides = [1, 1]} : vector<8x128xf32> to vector<8x32xf32>
    %100 = math.tanh %98 : vector<8x32xf32>
    %101 = arith.mulf %99, %100 : vector<8x32xf32>
    %102 = vector.extract_strided_slice %41 {offsets = [24, 0], sizes = [8, 128], strides = [1, 1]} : vector<144x128xf32> to vector<8x128xf32>
    %103 = arith.truncf %101 : vector<8x32xf32> to vector<8x32xbf16>
    %cst_55 = arith.constant dense<0.000000e+00> : vector<8x128xf32>
    %104 = tpu.matmul %103, %42, %cst_55 {dimension_numbers = #tpu.dot_dimension_numbers<[1], [0], [0], [1], [0, 0, 1, 1], [], []>} : vector<8x32xbf16>, vector<32x128xbf16>, vector<8x128xf32> -> vector<8x128xf32>
    %105 = arith.addf %102, %104 : vector<8x128xf32>
    %106 = arith.negf %105 : vector<8x128xf32>
    %107 = math.exp %106 : vector<8x128xf32>
    %cst_56 = arith.constant 1.000000e+00 : f32
    %108 = vector.broadcast %cst_56 : f32 to vector<8x128xf32>
    %109 = arith.addf %108, %107 : vector<8x128xf32>
    %110 = arith.divf %108, %109 : vector<8x128xf32>
    %111 = math.tanh %105 : vector<8x128xf32>
    %112 = vector.extract_strided_slice %110 {offsets = [0, 32], sizes = [8, 32], strides = [1, 1]} : vector<8x128xf32> to vector<8x32xf32>
    %113 = arith.mulf %112, %98 : vector<8x32xf32>
    %114 = vector.extract_strided_slice %110 {offsets = [0, 0], sizes = [8, 32], strides = [1, 1]} : vector<8x128xf32> to vector<8x32xf32>
    %115 = vector.extract_strided_slice %111 {offsets = [0, 64], sizes = [8, 32], strides = [1, 1]} : vector<8x128xf32> to vector<8x32xf32>
    %116 = arith.mulf %114, %115 : vector<8x32xf32>
    %117 = arith.addf %113, %116 : vector<8x32xf32>
    %118 = vector.extract_strided_slice %110 {offsets = [0, 96], sizes = [8, 32], strides = [1, 1]} : vector<8x128xf32> to vector<8x32xf32>
    %119 = math.tanh %117 : vector<8x32xf32>
    %120 = arith.mulf %118, %119 : vector<8x32xf32>
    %121 = vector.extract_strided_slice %41 {offsets = [32, 0], sizes = [8, 128], strides = [1, 1]} : vector<144x128xf32> to vector<8x128xf32>
    %122 = arith.truncf %120 : vector<8x32xf32> to vector<8x32xbf16>
    %cst_57 = arith.constant dense<0.000000e+00> : vector<8x128xf32>
    %123 = tpu.matmul %122, %42, %cst_57 {dimension_numbers = #tpu.dot_dimension_numbers<[1], [0], [0], [1], [0, 0, 1, 1], [], []>} : vector<8x32xbf16>, vector<32x128xbf16>, vector<8x128xf32> -> vector<8x128xf32>
    %124 = arith.addf %121, %123 : vector<8x128xf32>
    %125 = arith.negf %124 : vector<8x128xf32>
    %126 = math.exp %125 : vector<8x128xf32>
    %cst_58 = arith.constant 1.000000e+00 : f32
    %127 = vector.broadcast %cst_58 : f32 to vector<8x128xf32>
    %128 = arith.addf %127, %126 : vector<8x128xf32>
    %129 = arith.divf %127, %128 : vector<8x128xf32>
    %130 = math.tanh %124 : vector<8x128xf32>
    %131 = vector.extract_strided_slice %129 {offsets = [0, 32], sizes = [8, 32], strides = [1, 1]} : vector<8x128xf32> to vector<8x32xf32>
    %132 = arith.mulf %131, %117 : vector<8x32xf32>
    %133 = vector.extract_strided_slice %129 {offsets = [0, 0], sizes = [8, 32], strides = [1, 1]} : vector<8x128xf32> to vector<8x32xf32>
    %134 = vector.extract_strided_slice %130 {offsets = [0, 64], sizes = [8, 32], strides = [1, 1]} : vector<8x128xf32> to vector<8x32xf32>
    %135 = arith.mulf %133, %134 : vector<8x32xf32>
    %136 = arith.addf %132, %135 : vector<8x32xf32>
    %137 = vector.extract_strided_slice %129 {offsets = [0, 96], sizes = [8, 32], strides = [1, 1]} : vector<8x128xf32> to vector<8x32xf32>
    %138 = math.tanh %136 : vector<8x32xf32>
    %139 = arith.mulf %137, %138 : vector<8x32xf32>
    %140 = vector.extract_strided_slice %41 {offsets = [40, 0], sizes = [8, 128], strides = [1, 1]} : vector<144x128xf32> to vector<8x128xf32>
    %141 = arith.truncf %139 : vector<8x32xf32> to vector<8x32xbf16>
    %cst_59 = arith.constant dense<0.000000e+00> : vector<8x128xf32>
    %142 = tpu.matmul %141, %42, %cst_59 {dimension_numbers = #tpu.dot_dimension_numbers<[1], [0], [0], [1], [0, 0, 1, 1], [], []>} : vector<8x32xbf16>, vector<32x128xbf16>, vector<8x128xf32> -> vector<8x128xf32>
    %143 = arith.addf %140, %142 : vector<8x128xf32>
    %144 = arith.negf %143 : vector<8x128xf32>
    %145 = math.exp %144 : vector<8x128xf32>
    %cst_60 = arith.constant 1.000000e+00 : f32
    %146 = vector.broadcast %cst_60 : f32 to vector<8x128xf32>
    %147 = arith.addf %146, %145 : vector<8x128xf32>
    %148 = arith.divf %146, %147 : vector<8x128xf32>
    %149 = math.tanh %143 : vector<8x128xf32>
    %150 = vector.extract_strided_slice %148 {offsets = [0, 32], sizes = [8, 32], strides = [1, 1]} : vector<8x128xf32> to vector<8x32xf32>
    %151 = arith.mulf %150, %136 : vector<8x32xf32>
    %152 = vector.extract_strided_slice %148 {offsets = [0, 0], sizes = [8, 32], strides = [1, 1]} : vector<8x128xf32> to vector<8x32xf32>
    %153 = vector.extract_strided_slice %149 {offsets = [0, 64], sizes = [8, 32], strides = [1, 1]} : vector<8x128xf32> to vector<8x32xf32>
    %154 = arith.mulf %152, %153 : vector<8x32xf32>
    %155 = arith.addf %151, %154 : vector<8x32xf32>
    %156 = vector.extract_strided_slice %148 {offsets = [0, 96], sizes = [8, 32], strides = [1, 1]} : vector<8x128xf32> to vector<8x32xf32>
    %157 = math.tanh %155 : vector<8x32xf32>
    %158 = arith.mulf %156, %157 : vector<8x32xf32>
    %159 = vector.extract_strided_slice %41 {offsets = [48, 0], sizes = [8, 128], strides = [1, 1]} : vector<144x128xf32> to vector<8x128xf32>
    %160 = arith.truncf %158 : vector<8x32xf32> to vector<8x32xbf16>
    %cst_61 = arith.constant dense<0.000000e+00> : vector<8x128xf32>
    %161 = tpu.matmul %160, %42, %cst_61 {dimension_numbers = #tpu.dot_dimension_numbers<[1], [0], [0], [1], [0, 0, 1, 1], [], []>} : vector<8x32xbf16>, vector<32x128xbf16>, vector<8x128xf32> -> vector<8x128xf32>
    %162 = arith.addf %159, %161 : vector<8x128xf32>
    %163 = arith.negf %162 : vector<8x128xf32>
    %164 = math.exp %163 : vector<8x128xf32>
    %cst_62 = arith.constant 1.000000e+00 : f32
    %165 = vector.broadcast %cst_62 : f32 to vector<8x128xf32>
    %166 = arith.addf %165, %164 : vector<8x128xf32>
    %167 = arith.divf %165, %166 : vector<8x128xf32>
    %168 = math.tanh %162 : vector<8x128xf32>
    %169 = vector.extract_strided_slice %167 {offsets = [0, 32], sizes = [8, 32], strides = [1, 1]} : vector<8x128xf32> to vector<8x32xf32>
    %170 = arith.mulf %169, %155 : vector<8x32xf32>
    %171 = vector.extract_strided_slice %167 {offsets = [0, 0], sizes = [8, 32], strides = [1, 1]} : vector<8x128xf32> to vector<8x32xf32>
    %172 = vector.extract_strided_slice %168 {offsets = [0, 64], sizes = [8, 32], strides = [1, 1]} : vector<8x128xf32> to vector<8x32xf32>
    %173 = arith.mulf %171, %172 : vector<8x32xf32>
    %174 = arith.addf %170, %173 : vector<8x32xf32>
    %175 = vector.extract_strided_slice %167 {offsets = [0, 96], sizes = [8, 32], strides = [1, 1]} : vector<8x128xf32> to vector<8x32xf32>
    %176 = math.tanh %174 : vector<8x32xf32>
    %177 = arith.mulf %175, %176 : vector<8x32xf32>
    %178 = vector.extract_strided_slice %41 {offsets = [56, 0], sizes = [8, 128], strides = [1, 1]} : vector<144x128xf32> to vector<8x128xf32>
    %179 = arith.truncf %177 : vector<8x32xf32> to vector<8x32xbf16>
    %cst_63 = arith.constant dense<0.000000e+00> : vector<8x128xf32>
    %180 = tpu.matmul %179, %42, %cst_63 {dimension_numbers = #tpu.dot_dimension_numbers<[1], [0], [0], [1], [0, 0, 1, 1], [], []>} : vector<8x32xbf16>, vector<32x128xbf16>, vector<8x128xf32> -> vector<8x128xf32>
    %181 = arith.addf %178, %180 : vector<8x128xf32>
    %182 = arith.negf %181 : vector<8x128xf32>
    %183 = math.exp %182 : vector<8x128xf32>
    %cst_64 = arith.constant 1.000000e+00 : f32
    %184 = vector.broadcast %cst_64 : f32 to vector<8x128xf32>
    %185 = arith.addf %184, %183 : vector<8x128xf32>
    %186 = arith.divf %184, %185 : vector<8x128xf32>
    %187 = math.tanh %181 : vector<8x128xf32>
    %188 = vector.extract_strided_slice %186 {offsets = [0, 32], sizes = [8, 32], strides = [1, 1]} : vector<8x128xf32> to vector<8x32xf32>
    %189 = arith.mulf %188, %174 : vector<8x32xf32>
    %190 = vector.extract_strided_slice %186 {offsets = [0, 0], sizes = [8, 32], strides = [1, 1]} : vector<8x128xf32> to vector<8x32xf32>
    %191 = vector.extract_strided_slice %187 {offsets = [0, 64], sizes = [8, 32], strides = [1, 1]} : vector<8x128xf32> to vector<8x32xf32>
    %192 = arith.mulf %190, %191 : vector<8x32xf32>
    %193 = arith.addf %189, %192 : vector<8x32xf32>
    %194 = vector.extract_strided_slice %186 {offsets = [0, 96], sizes = [8, 32], strides = [1, 1]} : vector<8x128xf32> to vector<8x32xf32>
    %195 = math.tanh %193 : vector<8x32xf32>
    %196 = arith.mulf %194, %195 : vector<8x32xf32>
    %197 = vector.extract_strided_slice %41 {offsets = [64, 0], sizes = [8, 128], strides = [1, 1]} : vector<144x128xf32> to vector<8x128xf32>
    %198 = arith.truncf %196 : vector<8x32xf32> to vector<8x32xbf16>
    %cst_65 = arith.constant dense<0.000000e+00> : vector<8x128xf32>
    %199 = tpu.matmul %198, %42, %cst_65 {dimension_numbers = #tpu.dot_dimension_numbers<[1], [0], [0], [1], [0, 0, 1, 1], [], []>} : vector<8x32xbf16>, vector<32x128xbf16>, vector<8x128xf32> -> vector<8x128xf32>
    %200 = arith.addf %197, %199 : vector<8x128xf32>
    %201 = arith.negf %200 : vector<8x128xf32>
    %202 = math.exp %201 : vector<8x128xf32>
    %cst_66 = arith.constant 1.000000e+00 : f32
    %203 = vector.broadcast %cst_66 : f32 to vector<8x128xf32>
    %204 = arith.addf %203, %202 : vector<8x128xf32>
    %205 = arith.divf %203, %204 : vector<8x128xf32>
    %206 = math.tanh %200 : vector<8x128xf32>
    %207 = vector.extract_strided_slice %205 {offsets = [0, 32], sizes = [8, 32], strides = [1, 1]} : vector<8x128xf32> to vector<8x32xf32>
    %208 = arith.mulf %207, %193 : vector<8x32xf32>
    %209 = vector.extract_strided_slice %205 {offsets = [0, 0], sizes = [8, 32], strides = [1, 1]} : vector<8x128xf32> to vector<8x32xf32>
    %210 = vector.extract_strided_slice %206 {offsets = [0, 64], sizes = [8, 32], strides = [1, 1]} : vector<8x128xf32> to vector<8x32xf32>
    %211 = arith.mulf %209, %210 : vector<8x32xf32>
    %212 = arith.addf %208, %211 : vector<8x32xf32>
    %213 = vector.extract_strided_slice %205 {offsets = [0, 96], sizes = [8, 32], strides = [1, 1]} : vector<8x128xf32> to vector<8x32xf32>
    %214 = math.tanh %212 : vector<8x32xf32>
    %215 = arith.mulf %213, %214 : vector<8x32xf32>
    %216 = vector.extract_strided_slice %41 {offsets = [72, 0], sizes = [8, 128], strides = [1, 1]} : vector<144x128xf32> to vector<8x128xf32>
    %217 = arith.truncf %215 : vector<8x32xf32> to vector<8x32xbf16>
    %cst_67 = arith.constant dense<0.000000e+00> : vector<8x128xf32>
    %218 = tpu.matmul %217, %42, %cst_67 {dimension_numbers = #tpu.dot_dimension_numbers<[1], [0], [0], [1], [0, 0, 1, 1], [], []>} : vector<8x32xbf16>, vector<32x128xbf16>, vector<8x128xf32> -> vector<8x128xf32>
    %219 = arith.addf %216, %218 : vector<8x128xf32>
    %220 = arith.negf %219 : vector<8x128xf32>
    %221 = math.exp %220 : vector<8x128xf32>
    %cst_68 = arith.constant 1.000000e+00 : f32
    %222 = vector.broadcast %cst_68 : f32 to vector<8x128xf32>
    %223 = arith.addf %222, %221 : vector<8x128xf32>
    %224 = arith.divf %222, %223 : vector<8x128xf32>
    %225 = math.tanh %219 : vector<8x128xf32>
    %226 = vector.extract_strided_slice %224 {offsets = [0, 32], sizes = [8, 32], strides = [1, 1]} : vector<8x128xf32> to vector<8x32xf32>
    %227 = arith.mulf %226, %212 : vector<8x32xf32>
    %228 = vector.extract_strided_slice %224 {offsets = [0, 0], sizes = [8, 32], strides = [1, 1]} : vector<8x128xf32> to vector<8x32xf32>
    %229 = vector.extract_strided_slice %225 {offsets = [0, 64], sizes = [8, 32], strides = [1, 1]} : vector<8x128xf32> to vector<8x32xf32>
    %230 = arith.mulf %228, %229 : vector<8x32xf32>
    %231 = arith.addf %227, %230 : vector<8x32xf32>
    %232 = vector.extract_strided_slice %224 {offsets = [0, 96], sizes = [8, 32], strides = [1, 1]} : vector<8x128xf32> to vector<8x32xf32>
    %233 = math.tanh %231 : vector<8x32xf32>
    %234 = arith.mulf %232, %233 : vector<8x32xf32>
    %235 = vector.extract_strided_slice %41 {offsets = [80, 0], sizes = [8, 128], strides = [1, 1]} : vector<144x128xf32> to vector<8x128xf32>
    %236 = arith.truncf %234 : vector<8x32xf32> to vector<8x32xbf16>
    %cst_69 = arith.constant dense<0.000000e+00> : vector<8x128xf32>
    %237 = tpu.matmul %236, %42, %cst_69 {dimension_numbers = #tpu.dot_dimension_numbers<[1], [0], [0], [1], [0, 0, 1, 1], [], []>} : vector<8x32xbf16>, vector<32x128xbf16>, vector<8x128xf32> -> vector<8x128xf32>
    %238 = arith.addf %235, %237 : vector<8x128xf32>
    %239 = arith.negf %238 : vector<8x128xf32>
    %240 = math.exp %239 : vector<8x128xf32>
    %cst_70 = arith.constant 1.000000e+00 : f32
    %241 = vector.broadcast %cst_70 : f32 to vector<8x128xf32>
    %242 = arith.addf %241, %240 : vector<8x128xf32>
    %243 = arith.divf %241, %242 : vector<8x128xf32>
    %244 = math.tanh %238 : vector<8x128xf32>
    %245 = vector.extract_strided_slice %243 {offsets = [0, 32], sizes = [8, 32], strides = [1, 1]} : vector<8x128xf32> to vector<8x32xf32>
    %246 = arith.mulf %245, %231 : vector<8x32xf32>
    %247 = vector.extract_strided_slice %243 {offsets = [0, 0], sizes = [8, 32], strides = [1, 1]} : vector<8x128xf32> to vector<8x32xf32>
    %248 = vector.extract_strided_slice %244 {offsets = [0, 64], sizes = [8, 32], strides = [1, 1]} : vector<8x128xf32> to vector<8x32xf32>
    %249 = arith.mulf %247, %248 : vector<8x32xf32>
    %250 = arith.addf %246, %249 : vector<8x32xf32>
    %251 = vector.extract_strided_slice %243 {offsets = [0, 96], sizes = [8, 32], strides = [1, 1]} : vector<8x128xf32> to vector<8x32xf32>
    %252 = math.tanh %250 : vector<8x32xf32>
    %253 = arith.mulf %251, %252 : vector<8x32xf32>
    %254 = vector.extract_strided_slice %41 {offsets = [88, 0], sizes = [8, 128], strides = [1, 1]} : vector<144x128xf32> to vector<8x128xf32>
    %255 = arith.truncf %253 : vector<8x32xf32> to vector<8x32xbf16>
    %cst_71 = arith.constant dense<0.000000e+00> : vector<8x128xf32>
    %256 = tpu.matmul %255, %42, %cst_71 {dimension_numbers = #tpu.dot_dimension_numbers<[1], [0], [0], [1], [0, 0, 1, 1], [], []>} : vector<8x32xbf16>, vector<32x128xbf16>, vector<8x128xf32> -> vector<8x128xf32>
    %257 = arith.addf %254, %256 : vector<8x128xf32>
    %258 = arith.negf %257 : vector<8x128xf32>
    %259 = math.exp %258 : vector<8x128xf32>
    %cst_72 = arith.constant 1.000000e+00 : f32
    %260 = vector.broadcast %cst_72 : f32 to vector<8x128xf32>
    %261 = arith.addf %260, %259 : vector<8x128xf32>
    %262 = arith.divf %260, %261 : vector<8x128xf32>
    %263 = math.tanh %257 : vector<8x128xf32>
    %264 = vector.extract_strided_slice %262 {offsets = [0, 32], sizes = [8, 32], strides = [1, 1]} : vector<8x128xf32> to vector<8x32xf32>
    %265 = arith.mulf %264, %250 : vector<8x32xf32>
    %266 = vector.extract_strided_slice %262 {offsets = [0, 0], sizes = [8, 32], strides = [1, 1]} : vector<8x128xf32> to vector<8x32xf32>
    %267 = vector.extract_strided_slice %263 {offsets = [0, 64], sizes = [8, 32], strides = [1, 1]} : vector<8x128xf32> to vector<8x32xf32>
    %268 = arith.mulf %266, %267 : vector<8x32xf32>
    %269 = arith.addf %265, %268 : vector<8x32xf32>
    %270 = vector.extract_strided_slice %262 {offsets = [0, 96], sizes = [8, 32], strides = [1, 1]} : vector<8x128xf32> to vector<8x32xf32>
    %271 = math.tanh %269 : vector<8x32xf32>
    %272 = arith.mulf %270, %271 : vector<8x32xf32>
    %273 = vector.extract_strided_slice %41 {offsets = [96, 0], sizes = [8, 128], strides = [1, 1]} : vector<144x128xf32> to vector<8x128xf32>
    %274 = arith.truncf %272 : vector<8x32xf32> to vector<8x32xbf16>
    %cst_73 = arith.constant dense<0.000000e+00> : vector<8x128xf32>
    %275 = tpu.matmul %274, %42, %cst_73 {dimension_numbers = #tpu.dot_dimension_numbers<[1], [0], [0], [1], [0, 0, 1, 1], [], []>} : vector<8x32xbf16>, vector<32x128xbf16>, vector<8x128xf32> -> vector<8x128xf32>
    %276 = arith.addf %273, %275 : vector<8x128xf32>
    %277 = arith.negf %276 : vector<8x128xf32>
    %278 = math.exp %277 : vector<8x128xf32>
    %cst_74 = arith.constant 1.000000e+00 : f32
    %279 = vector.broadcast %cst_74 : f32 to vector<8x128xf32>
    %280 = arith.addf %279, %278 : vector<8x128xf32>
    %281 = arith.divf %279, %280 : vector<8x128xf32>
    %282 = math.tanh %276 : vector<8x128xf32>
    %283 = vector.extract_strided_slice %281 {offsets = [0, 32], sizes = [8, 32], strides = [1, 1]} : vector<8x128xf32> to vector<8x32xf32>
    %284 = arith.mulf %283, %269 : vector<8x32xf32>
    %285 = vector.extract_strided_slice %281 {offsets = [0, 0], sizes = [8, 32], strides = [1, 1]} : vector<8x128xf32> to vector<8x32xf32>
    %286 = vector.extract_strided_slice %282 {offsets = [0, 64], sizes = [8, 32], strides = [1, 1]} : vector<8x128xf32> to vector<8x32xf32>
    %287 = arith.mulf %285, %286 : vector<8x32xf32>
    %288 = arith.addf %284, %287 : vector<8x32xf32>
    %289 = vector.extract_strided_slice %281 {offsets = [0, 96], sizes = [8, 32], strides = [1, 1]} : vector<8x128xf32> to vector<8x32xf32>
    %290 = math.tanh %288 : vector<8x32xf32>
    %291 = arith.mulf %289, %290 : vector<8x32xf32>
    %292 = vector.extract_strided_slice %41 {offsets = [104, 0], sizes = [8, 128], strides = [1, 1]} : vector<144x128xf32> to vector<8x128xf32>
    %293 = arith.truncf %291 : vector<8x32xf32> to vector<8x32xbf16>
    %cst_75 = arith.constant dense<0.000000e+00> : vector<8x128xf32>
    %294 = tpu.matmul %293, %42, %cst_75 {dimension_numbers = #tpu.dot_dimension_numbers<[1], [0], [0], [1], [0, 0, 1, 1], [], []>} : vector<8x32xbf16>, vector<32x128xbf16>, vector<8x128xf32> -> vector<8x128xf32>
    %295 = arith.addf %292, %294 : vector<8x128xf32>
    %296 = arith.negf %295 : vector<8x128xf32>
    %297 = math.exp %296 : vector<8x128xf32>
    %cst_76 = arith.constant 1.000000e+00 : f32
    %298 = vector.broadcast %cst_76 : f32 to vector<8x128xf32>
    %299 = arith.addf %298, %297 : vector<8x128xf32>
    %300 = arith.divf %298, %299 : vector<8x128xf32>
    %301 = math.tanh %295 : vector<8x128xf32>
    %302 = vector.extract_strided_slice %300 {offsets = [0, 32], sizes = [8, 32], strides = [1, 1]} : vector<8x128xf32> to vector<8x32xf32>
    %303 = arith.mulf %302, %288 : vector<8x32xf32>
    %304 = vector.extract_strided_slice %300 {offsets = [0, 0], sizes = [8, 32], strides = [1, 1]} : vector<8x128xf32> to vector<8x32xf32>
    %305 = vector.extract_strided_slice %301 {offsets = [0, 64], sizes = [8, 32], strides = [1, 1]} : vector<8x128xf32> to vector<8x32xf32>
    %306 = arith.mulf %304, %305 : vector<8x32xf32>
    %307 = arith.addf %303, %306 : vector<8x32xf32>
    %308 = vector.extract_strided_slice %300 {offsets = [0, 96], sizes = [8, 32], strides = [1, 1]} : vector<8x128xf32> to vector<8x32xf32>
    %309 = math.tanh %307 : vector<8x32xf32>
    %310 = arith.mulf %308, %309 : vector<8x32xf32>
    %311 = vector.extract_strided_slice %41 {offsets = [112, 0], sizes = [8, 128], strides = [1, 1]} : vector<144x128xf32> to vector<8x128xf32>
    %312 = arith.truncf %310 : vector<8x32xf32> to vector<8x32xbf16>
    %cst_77 = arith.constant dense<0.000000e+00> : vector<8x128xf32>
    %313 = tpu.matmul %312, %42, %cst_77 {dimension_numbers = #tpu.dot_dimension_numbers<[1], [0], [0], [1], [0, 0, 1, 1], [], []>} : vector<8x32xbf16>, vector<32x128xbf16>, vector<8x128xf32> -> vector<8x128xf32>
    %314 = arith.addf %311, %313 : vector<8x128xf32>
    %315 = arith.negf %314 : vector<8x128xf32>
    %316 = math.exp %315 : vector<8x128xf32>
    %cst_78 = arith.constant 1.000000e+00 : f32
    %317 = vector.broadcast %cst_78 : f32 to vector<8x128xf32>
    %318 = arith.addf %317, %316 : vector<8x128xf32>
    %319 = arith.divf %317, %318 : vector<8x128xf32>
    %320 = math.tanh %314 : vector<8x128xf32>
    %321 = vector.extract_strided_slice %319 {offsets = [0, 32], sizes = [8, 32], strides = [1, 1]} : vector<8x128xf32> to vector<8x32xf32>
    %322 = arith.mulf %321, %307 : vector<8x32xf32>
    %323 = vector.extract_strided_slice %319 {offsets = [0, 0], sizes = [8, 32], strides = [1, 1]} : vector<8x128xf32> to vector<8x32xf32>
    %324 = vector.extract_strided_slice %320 {offsets = [0, 64], sizes = [8, 32], strides = [1, 1]} : vector<8x128xf32> to vector<8x32xf32>
    %325 = arith.mulf %323, %324 : vector<8x32xf32>
    %326 = arith.addf %322, %325 : vector<8x32xf32>
    %327 = vector.extract_strided_slice %319 {offsets = [0, 96], sizes = [8, 32], strides = [1, 1]} : vector<8x128xf32> to vector<8x32xf32>
    %328 = math.tanh %326 : vector<8x32xf32>
    %329 = arith.mulf %327, %328 : vector<8x32xf32>
    %330 = vector.extract_strided_slice %41 {offsets = [120, 0], sizes = [8, 128], strides = [1, 1]} : vector<144x128xf32> to vector<8x128xf32>
    %331 = arith.truncf %329 : vector<8x32xf32> to vector<8x32xbf16>
    %cst_79 = arith.constant dense<0.000000e+00> : vector<8x128xf32>
    %332 = tpu.matmul %331, %42, %cst_79 {dimension_numbers = #tpu.dot_dimension_numbers<[1], [0], [0], [1], [0, 0, 1, 1], [], []>} : vector<8x32xbf16>, vector<32x128xbf16>, vector<8x128xf32> -> vector<8x128xf32>
    %333 = arith.addf %330, %332 : vector<8x128xf32>
    %334 = arith.negf %333 : vector<8x128xf32>
    %335 = math.exp %334 : vector<8x128xf32>
    %cst_80 = arith.constant 1.000000e+00 : f32
    %336 = vector.broadcast %cst_80 : f32 to vector<8x128xf32>
    %337 = arith.addf %336, %335 : vector<8x128xf32>
    %338 = arith.divf %336, %337 : vector<8x128xf32>
    %339 = math.tanh %333 : vector<8x128xf32>
    %340 = vector.extract_strided_slice %338 {offsets = [0, 32], sizes = [8, 32], strides = [1, 1]} : vector<8x128xf32> to vector<8x32xf32>
    %341 = arith.mulf %340, %326 : vector<8x32xf32>
    %342 = vector.extract_strided_slice %338 {offsets = [0, 0], sizes = [8, 32], strides = [1, 1]} : vector<8x128xf32> to vector<8x32xf32>
    %343 = vector.extract_strided_slice %339 {offsets = [0, 64], sizes = [8, 32], strides = [1, 1]} : vector<8x128xf32> to vector<8x32xf32>
    %344 = arith.mulf %342, %343 : vector<8x32xf32>
    %345 = arith.addf %341, %344 : vector<8x32xf32>
    %346 = vector.extract_strided_slice %338 {offsets = [0, 96], sizes = [8, 32], strides = [1, 1]} : vector<8x128xf32> to vector<8x32xf32>
    %347 = math.tanh %345 : vector<8x32xf32>
    %348 = arith.mulf %346, %347 : vector<8x32xf32>
    %349 = vector.extract_strided_slice %41 {offsets = [128, 0], sizes = [8, 128], strides = [1, 1]} : vector<144x128xf32> to vector<8x128xf32>
    %350 = arith.truncf %348 : vector<8x32xf32> to vector<8x32xbf16>
    %cst_81 = arith.constant dense<0.000000e+00> : vector<8x128xf32>
    %351 = tpu.matmul %350, %42, %cst_81 {dimension_numbers = #tpu.dot_dimension_numbers<[1], [0], [0], [1], [0, 0, 1, 1], [], []>} : vector<8x32xbf16>, vector<32x128xbf16>, vector<8x128xf32> -> vector<8x128xf32>
    %352 = arith.addf %349, %351 : vector<8x128xf32>
    %353 = arith.negf %352 : vector<8x128xf32>
    %354 = math.exp %353 : vector<8x128xf32>
    %cst_82 = arith.constant 1.000000e+00 : f32
    %355 = vector.broadcast %cst_82 : f32 to vector<8x128xf32>
    %356 = arith.addf %355, %354 : vector<8x128xf32>
    %357 = arith.divf %355, %356 : vector<8x128xf32>
    %358 = math.tanh %352 : vector<8x128xf32>
    %359 = vector.extract_strided_slice %357 {offsets = [0, 32], sizes = [8, 32], strides = [1, 1]} : vector<8x128xf32> to vector<8x32xf32>
    %360 = arith.mulf %359, %345 : vector<8x32xf32>
    %361 = vector.extract_strided_slice %357 {offsets = [0, 0], sizes = [8, 32], strides = [1, 1]} : vector<8x128xf32> to vector<8x32xf32>
    %362 = vector.extract_strided_slice %358 {offsets = [0, 64], sizes = [8, 32], strides = [1, 1]} : vector<8x128xf32> to vector<8x32xf32>
    %363 = arith.mulf %361, %362 : vector<8x32xf32>
    %364 = arith.addf %360, %363 : vector<8x32xf32>
    %365 = vector.extract_strided_slice %357 {offsets = [0, 96], sizes = [8, 32], strides = [1, 1]} : vector<8x128xf32> to vector<8x32xf32>
    %366 = math.tanh %364 : vector<8x32xf32>
    %367 = arith.mulf %365, %366 : vector<8x32xf32>
    %368 = vector.extract_strided_slice %41 {offsets = [136, 0], sizes = [8, 128], strides = [1, 1]} : vector<144x128xf32> to vector<8x128xf32>
    %369 = arith.truncf %367 : vector<8x32xf32> to vector<8x32xbf16>
    %cst_83 = arith.constant dense<0.000000e+00> : vector<8x128xf32>
    %370 = tpu.matmul %369, %42, %cst_83 {dimension_numbers = #tpu.dot_dimension_numbers<[1], [0], [0], [1], [0, 0, 1, 1], [], []>} : vector<8x32xbf16>, vector<32x128xbf16>, vector<8x128xf32> -> vector<8x128xf32>
    %371 = arith.addf %368, %370 : vector<8x128xf32>
    %372 = arith.negf %371 : vector<8x128xf32>
    %373 = math.exp %372 : vector<8x128xf32>
    %cst_84 = arith.constant 1.000000e+00 : f32
    %374 = vector.broadcast %cst_84 : f32 to vector<8x128xf32>
    %375 = arith.addf %374, %373 : vector<8x128xf32>
    %376 = arith.divf %374, %375 : vector<8x128xf32>
    %377 = math.tanh %371 : vector<8x128xf32>
    %378 = vector.extract_strided_slice %376 {offsets = [0, 32], sizes = [8, 32], strides = [1, 1]} : vector<8x128xf32> to vector<8x32xf32>
    %379 = arith.mulf %378, %364 : vector<8x32xf32>
    %380 = vector.extract_strided_slice %376 {offsets = [0, 0], sizes = [8, 32], strides = [1, 1]} : vector<8x128xf32> to vector<8x32xf32>
    %381 = vector.extract_strided_slice %377 {offsets = [0, 64], sizes = [8, 32], strides = [1, 1]} : vector<8x128xf32> to vector<8x32xf32>
    %382 = arith.mulf %380, %381 : vector<8x32xf32>
    %383 = arith.addf %379, %382 : vector<8x32xf32>
    %384 = vector.extract_strided_slice %376 {offsets = [0, 96], sizes = [8, 32], strides = [1, 1]} : vector<8x128xf32> to vector<8x32xf32>
    %385 = math.tanh %383 : vector<8x32xf32>
    %386 = arith.mulf %384, %385 : vector<8x32xf32>
    %387 = vector.extract_strided_slice %386 {offsets = [0, 0], sizes = [2, 32], strides = [1, 1]} : vector<8x32xf32> to vector<2x32xf32>
    %388 = vector.extract_strided_slice %386 {offsets = [2, 0], sizes = [2, 32], strides = [1, 1]} : vector<8x32xf32> to vector<2x32xf32>
    %389 = arith.maximumf %387, %388 : vector<2x32xf32>
    %c0_85 = arith.constant 0 : index
    %c0_86 = arith.constant 0 : index
    %390 = vector.load %arg8[%c0_85, %c0_86] : memref<32x128xf32, #tpu.memory_space<vmem>>, vector<32x128xf32>
    %cst_87 = arith.constant dense<0.000000e+00> : vector<2x128xf32>
    %391 = tpu.matmul %389, %390, %cst_87 {dimension_numbers = #tpu.dot_dimension_numbers<[1], [0], [0], [1], [0, 0, 1, 1], [], []>} : vector<2x32xf32>, vector<32x128xf32>, vector<2x128xf32> -> vector<2x128xf32>
    %c0_88 = arith.constant 0 : index
    %c0_89 = arith.constant 0 : index
    %392 = vector.load %arg9[%c0_88, %c0_89] : memref<1x128xf32, #tpu.memory_space<vmem>>, vector<1x128xf32>
    %393 = vector.broadcast %392 : vector<1x128xf32> to vector<2x128xf32>
    %394 = arith.addf %391, %393 : vector<2x128xf32>
    %cst_90 = arith.constant 0.000000e+00 : f32
    %395 = vector.broadcast %cst_90 : f32 to vector<2x128xf32>
    %396 = arith.maximumf %394, %395 : vector<2x128xf32>
    %c0_91 = arith.constant 0 : index
    %c0_92 = arith.constant 0 : index
    %397 = vector.load %arg10[%c0_91, %c0_92] : memref<128x2xf32, #tpu.memory_space<vmem>>, vector<128x2xf32>
    %cst_93 = arith.constant dense<0.000000e+00> : vector<2x2xf32>
    %398 = tpu.matmul %396, %397, %cst_93 {dimension_numbers = #tpu.dot_dimension_numbers<[1], [0], [0], [1], [0, 0, 1, 1], [], []>} : vector<2x128xf32>, vector<128x2xf32>, vector<2x2xf32> -> vector<2x2xf32>
    %c0_94 = arith.constant 0 : index
    %c0_95 = arith.constant 0 : index
    %399 = vector.load %arg11[%c0_94, %c0_95] : memref<1x2xf32, #tpu.memory_space<vmem>>, vector<1x2xf32>
    %400 = vector.broadcast %399 : vector<1x2xf32> to vector<2x2xf32>
    %401 = arith.addf %398, %400 : vector<2x2xf32>
    %c0_96 = arith.constant 0 : index
    %c0_97 = arith.constant 0 : index
    %402 = vector.load %arg12[%c0_96, %c0_97] : memref<2x2xf32, #tpu.memory_space<vmem>>, vector<2x2xf32>
    tpu.vector_store %arg12[%c0_96, %c0_97], %401 {strides = array<i32>} : memref<2x2xf32, #tpu.memory_space<vmem>>, vector<2x2xf32>,
    return
  }
}

</mosaic_0001>

<llo_original>
// kernel: model_forward.1
$region0: #{model_forward.1}
  #allocation0 [shape = 'u32[]', space=smem, size = 0x4, offset = 0x4, fixed_abs, tag = 'smem constant byte address 0x4 - core index']
  #allocation1 [shape = 'u32[144,128]{1,0:T(1,128)}', space=vmem, size = 0x12000, scoped, tag = 'internal scratch']
  #allocation2 [shape = 'f32[200,32]{1,0:T(8,128)}', space=vmem, size = 0x19000, scoped, tag = 'scratch operand']
  #allocation3 [shape = 'f32[144,256]{1,0:T(8,128)}', space=vmem, size = 0x24000, scoped, tag = 'scratch operand']
  %s0 = inlined_call_operand.vmem [shape: f32[136,32], index: 0, kind: input, shape index: {}]
  %s1 = inlined_call_operand.vmem [shape: f32[32,32], index: 1, kind: input, shape index: {}]
  %s2 = inlined_call_operand.vmem [shape: f32[1,32], index: 2, kind: input, shape index: {}]
  %s3 = inlined_call_operand.vmem [shape: f32[256,64], index: 3, kind: input, shape index: {}]
  %s4 = inlined_call_operand.vmem [shape: f32[1,64], index: 4, kind: input, shape index: {}]
  %s5 = inlined_call_operand.vmem [shape: f32[64,128], index: 5, kind: input, shape index: {}]
  %s6 = inlined_call_operand.vmem [shape: bf16[32,128], index: 6, kind: input, shape index: {}]
  %s7 = inlined_call_operand.vmem [shape: f32[1,128], index: 7, kind: input, shape index: {}]
  %s8 = inlined_call_operand.vmem [shape: f32[32,128], index: 8, kind: input, shape index: {}]
  %s9 = inlined_call_operand.vmem [shape: f32[1,128], index: 9, kind: input, shape index: {}]
  %s10 = inlined_call_operand.vmem [shape: f32[128,2], index: 10, kind: input, shape index: {}]
  %s11 = inlined_call_operand.vmem [shape: f32[1,2], index: 11, kind: input, shape index: {}]
  %s12 = inlined_call_operand.hbm [shape: f32[2,2], index: 12, kind: output, shape index: {}]
  %s13 = sld [smem:[#allocation0]]
  $region58: #{model_forward.1} parent=0
    _
  %s15 = ssub.s32 1, %s13
  %s16 = scalar_select 0, %s15, %s13
  $region1: #{model_forward.1} parent=0
    #allocation4 [shape = 'u8[1024]{0}', space=vmem, size = 0x400, scoped, tag = 'output window, operand 0, single buffered']
    #allocation5 [shape = 's32[1]{0}', space=sflag, size = 0x4, scoped, tag = 'scoped memory for model_forward.1']
    %17 = vsyncpa [#allocation5], 0
    // Predicated region
    $region2: #{model_forward.1} parent=1 // pred_check
      _
    $region3: #{model_forward.1} parent=1 // pred_check_branch
      %19 = sbr.rel (0) target = $region5
    $region4: #{model_forward.1} parent=1 // pred_region
      _
    $region5: #{model_forward.1} parent=1 // pred_fallthru
      _
    // Predicated region
    $region6: #{model_forward.1} parent=1 // pred_check
      _
    $region7: #{model_forward.1} parent=1 // pred_check_branch
      %21 = sbr.rel (0) target = $region9
    $region8: #{model_forward.1} parent=1 // pred_region
      _
    $region9: #{model_forward.1} parent=1 // pred_fallthru
      _
    // Predicated region
    $region10: #{model_forward.1} parent=1 // pred_check
      _
    $region11: #{model_forward.1} parent=1 // pred_check_branch
      %23 = sbr.rel (0) target = $region13
    $region12: #{model_forward.1} parent=1 // pred_region
      _
    $region13: #{model_forward.1} parent=1 // pred_fallthru
      _
    // Predicated region
    $region14: #{model_forward.1} parent=1 // pred_check
      _
    $region15: #{model_forward.1} parent=1 // pred_check_branch
      %25 = sbr.rel (0) target = $region17
    $region16: #{model_forward.1} parent=1 // pred_region
      _
    $region17: #{model_forward.1} parent=1 // pred_fallthru
      _
    // Predicated region
    $region18: #{model_forward.1} parent=1 // pred_check
      _
    $region19: #{model_forward.1} parent=1 // pred_check_branch
      %27 = sbr.rel (0) target = $region21
    $region20: #{model_forward.1} parent=1 // pred_region
      _
    $region21: #{model_forward.1} parent=1 // pred_fallthru
      _
    // Predicated region
    $region22: #{model_forward.1} parent=1 // pred_check
      _
    $region23: #{model_forward.1} parent=1 // pred_check_branch
      %29 = sbr.rel (0) target = $region25
    $region24: #{model_forward.1} parent=1 // pred_region
      _
    $region25: #{model_forward.1} parent=1 // pred_fallthru
      _
    // Predicated region
    $region26: #{model_forward.1} parent=1 // pred_check
      _
    $region27: #{model_forward.1} parent=1 // pred_check_branch
      %31 = sbr.rel (0) target = $region29
    $region28: #{model_forward.1} parent=1 // pred_region
      _
    $region29: #{model_forward.1} parent=1 // pred_fallthru
      _
    // Predicated region
    $region30: #{model_forward.1} parent=1 // pred_check
      _
    $region31: #{model_forward.1} parent=1 // pred_check_branch
      %33 = sbr.rel (0) target = $region33
    $region32: #{model_forward.1} parent=1 // pred_region
      _
    $region33: #{model_forward.1} parent=1 // pred_fallthru
      _
    // Predicated region
    $region34: #{model_forward.1} parent=1 // pred_check
      _
    $region35: #{model_forward.1} parent=1 // pred_check_branch
      %35 = sbr.rel (0) target = $region37
    $region36: #{model_forward.1} parent=1 // pred_region
      _
    $region37: #{model_forward.1} parent=1 // pred_fallthru
      _
    // Predicated region
    $region38: #{model_forward.1} parent=1 // pred_check
      _
    $region39: #{model_forward.1} parent=1 // pred_check_branch
      %37 = sbr.rel (0) target = $region41
    $region40: #{model_forward.1} parent=1 // pred_region
      _
    $region41: #{model_forward.1} parent=1 // pred_fallthru
      _
    // Predicated region
    $region42: #{model_forward.1} parent=1 // pred_check
      _
    $region43: #{model_forward.1} parent=1 // pred_check_branch
      %39 = sbr.rel (0) target = $region45
    $region44: #{model_forward.1} parent=1 // pred_region
      _
    $region45: #{model_forward.1} parent=1 // pred_fallthru
      _
    // Predicated region
    $region46: #{model_forward.1} parent=1 // pred_check
      _
    $region47: #{model_forward.1} parent=1 // pred_check_branch
      %41 = sbr.rel (0) target = $region49
    $region48: #{model_forward.1} parent=1 // pred_region
      _
    $region49: #{model_forward.1} parent=1 // pred_fallthru
      _
    %v43 = vld [vmem:[%s0] sm:$0xff]
    %v44 = vld [vmem:[%s0 + $0x8] sm:$0xff]
    %v45 = vld [vmem:[%s0 + $0x10] sm:$0xff]
    %v46 = vld [vmem:[%s0 + $0x18] sm:$0xff]
    %v47 = vld [vmem:[%s0 + $0x20] sm:$0xff]
    %v48 = vld [vmem:[%s0 + $0x28] sm:$0xff]
    %v49 = vld [vmem:[%s0 + $0x30] sm:$0xff]
    %v50 = vld [vmem:[%s0 + $0x38] sm:$0xff]
    %v51 = vld [vmem:[%s0 + $0x40] sm:$0xff]
    %v52 = vld [vmem:[%s0 + $0x48] sm:$0xff]
    %v53 = vld [vmem:[%s0 + $0x50] sm:$0xff]
    %v54 = vld [vmem:[%s0 + $0x58] sm:$0xff]
    %v55 = vld [vmem:[%s0 + $0x60] sm:$0xff]
    %v56 = vld [vmem:[%s0 + $0x68] sm:$0xff]
    %v57 = vld [vmem:[%s0 + $0x70] sm:$0xff]
    %v58 = vld [vmem:[%s0 + $0x78] sm:$0xff]
    %v59 = vld [vmem:[%s0 + $0x80] sm:$0xff]
    %v60 = vld [vmem:[%s1] sm:$0xff]
    %v61 = vld [vmem:[%s1 + $0x8] sm:$0xff]
    %v62 = vld [vmem:[%s1 + $0x10] sm:$0xff]
    %v63 = vld [vmem:[%s1 + $0x18] sm:$0xff]
    %v64 = vld [vmem:[%s2] sm:$0x1]
    %v66 = vlaneseq
    %v67 = vshrl.u32 %v66, 7
    %v68 = vsub.s32 0, %v67
    %v69 = vrot.slane %v64, %v68
    %vm71 = vcmask 261120
    %v73 = vsel %vm71, %v43, 0
    %v76 = vsel %vm71, %v44, 0
    %v79 = vsel %vm71, %v45, 0
    %v82 = vsel %vm71, %v46, 0
    %v85 = vsel %vm71, %v47, 0
    %v88 = vsel %vm71, %v48, 0
    %v91 = vsel %vm71, %v49, 0
    %v94 = vsel %vm71, %v50, 0
    %v97 = vsel %vm71, %v51, 0
    %v100 = vsel %vm71, %v52, 0
    %v103 = vsel %vm71, %v53, 0
    %v106 = vsel %vm71, %v54, 0
    %v109 = vsel %vm71, %v55, 0
    %v112 = vsel %vm71, %v56, 0
    %v115 = vsel %vm71, %v57, 0
    %v118 = vsel %vm71, %v58, 0
    %v121 = vsel %vm71, %v59, 0
    %123 = vmatprep.subr.mxu0 0.0
    %124 = vmatpush1.msra.mxu0 %v60
    %125 = vmatprep.subr.mxu0 0.0
    %126 = vmatpush1.msra.mxu0 %v61
    %127 = vmatprep.subr.mxu0 0.0
    %128 = vmatpush1.msra.mxu0 %v62
    %129 = vmatprep.subr.mxu0 0.0
    %130 = vmatpush1.msra.mxu0 %v63
    %131 = vmatprep.subr.mxu0 0.0
    %132 = vmatpush1.msra.mxu0 0.0
    %133 = vmatprep.subr.mxu0 0.0
    %134 = vmatpush1.msra.mxu0 0.0
    %135 = vmatprep.subr.mxu0 0.0
    %136 = vmatpush1.msra.mxu0 0.0
    %137 = vmatprep.subr.mxu0 0.0
    %138 = vmatpush1.msra.mxu0 0.0
    %139 = vmatprep.subr.mxu0 0.0
    %140 = vmatpush1.msra.mxu0 0.0
    %141 = vmatprep.subr.mxu0 0.0
    %142 = vmatpush1.msra.mxu0 0.0
    %143 = vmatprep.subr.mxu0 0.0
    %144 = vmatpush1.msra.mxu0 0.0
    %145 = vmatprep.subr.mxu0 0.0
    %146 = vmatpush1.msra.mxu0 0.0
    %147 = vmatprep.subr.mxu0 0.0
    %148 = vmatpush1.msra.mxu0 0.0
    %149 = vmatprep.subr.mxu0 0.0
    %150 = vmatpush1.msra.mxu0 0.0
    %151 = vmatprep.subr.mxu0 0.0
    %152 = vmatpush1.msra.mxu0 0.0
    %153 = vmatprep.subr.mxu0 0.0
    %154 = vmatpush1.msra.mxu0 0.0
    %155 = vmatprep.subr.mxu0 0.0
    %156 = vmatpush1.msra.mxu0 0.0
    %157 = vmatprep.subr.mxu0 0.0
    %158 = vmatpush1.msra.mxu0 0.0
    %159 = vmatprep.subr.mxu0 0.0
    %160 = vmatpush1.msra.mxu0 0.0
    %161 = vmatprep.subr.mxu0 0.0
    %162 = vmatpush1.msra.mxu0 0.0
    %163 = vmatprep.subr.mxu0 0.0
    %164 = vmatpush1.msra.mxu0 0.0
    %165 = vmatprep.subr.mxu0 0.0
    %166 = vmatpush1.msra.mxu0 0.0
    %167 = vmatprep.subr.mxu0 0.0
    %168 = vmatpush1.msra.mxu0 0.0
    %169 = vmatprep.subr.mxu0 0.0
    %170 = vmatpush1.msra.mxu0 0.0
    %171 = vmatprep.subr.mxu0 0.0
    %172 = vmatpush1.msra.mxu0 0.0
    %173 = vmatprep.subr.mxu0 0.0
    %174 = vmatpush1.msra.mxu0 0.0
    %175 = vmatprep.subr.mxu0 0.0
    %176 = vmatpush1.msra.mxu0 0.0
    %177 = vmatprep.subr.mxu0 0.0
    %178 = vmatpush1.msra.mxu0 0.0
    %179 = vmatprep.subr.mxu0 0.0
    %180 = vmatpush1.msra.mxu0 0.0
    %181 = vmatprep.subr.mxu0 0.0
    %182 = vmatpush1.msra.mxu0 0.0
    %183 = vmatprep.subr.mxu0 0.0
    %184 = vmatpush1.msra.mxu0 0.0
    %185 = vmatprep.subr.mxu0 0.0
    %186 = vmatpush1.msra.mxu0 0.0
    %187 = vmatprep.mubr.f32.mxu0 0.0
    %188 = vmatmul.mubr.f32.gmra.mrb[0].mxu0 %v73
    %v189 = vpop.f32.mrb[0].mxu0
    %v190 = vadd.f32 %v69, %v189
    %v191 = vpop.f32.mrb[0].mxu0
    %192 = vmatprep.mubr.f32.mxu0 0.0
    %193 = vmatmul.mubr.f32.gmra.mrb[0].mxu0 %v76
    %v194 = vpop.f32.mrb[0].mxu0
    %v195 = vadd.f32 %v69, %v194
    %v196 = vpop.f32.mrb[0].mxu0
    %197 = vmatprep.mubr.f32.mxu0 0.0
    %198 = vmatmul.mubr.f32.gmra.mrb[0].mxu0 %v79
    %v199 = vpop.f32.mrb[0].mxu0
    %v200 = vadd.f32 %v69, %v199
    %v201 = vpop.f32.mrb[0].mxu0
    %202 = vmatprep.mubr.f32.mxu0 0.0
    %203 = vmatmul.mubr.f32.gmra.mrb[0].mxu0 %v82
    %v204 = vpop.f32.mrb[0].mxu0
    %v205 = vadd.f32 %v69, %v204
    %v206 = vpop.f32.mrb[0].mxu0
    %207 = vmatprep.mubr.f32.mxu0 0.0
    %208 = vmatmul.mubr.f32.gmra.mrb[0].mxu0 %v85
    %v209 = vpop.f32.mrb[0].mxu0
    %v210 = vadd.f32 %v69, %v209
    %v211 = vpop.f32.mrb[0].mxu0
    %212 = vmatprep.mubr.f32.mxu0 0.0
    %213 = vmatmul.mubr.f32.gmra.mrb[0].mxu0 %v88
    %v214 = vpop.f32.mrb[0].mxu0
    %v215 = vadd.f32 %v69, %v214
    %v216 = vpop.f32.mrb[0].mxu0
    %217 = vmatprep.mubr.f32.mxu0 0.0
    %218 = vmatmul.mubr.f32.gmra.mrb[0].mxu0 %v91
    %v219 = vpop.f32.mrb[0].mxu0
    %v220 = vadd.f32 %v69, %v219
    %v221 = vpop.f32.mrb[0].mxu0
    %222 = vmatprep.mubr.f32.mxu0 0.0
    %223 = vmatmul.mubr.f32.gmra.mrb[0].mxu0 %v94
    %v224 = vpop.f32.mrb[0].mxu0
    %v225 = vadd.f32 %v69, %v224
    %v226 = vpop.f32.mrb[0].mxu0
    %227 = vmatprep.mubr.f32.mxu0 0.0
    %228 = vmatmul.mubr.f32.gmra.mrb[0].mxu0 %v97
    %v229 = vpop.f32.mrb[0].mxu0
    %v230 = vadd.f32 %v69, %v229
    %v231 = vpop.f32.mrb[0].mxu0
    %232 = vmatprep.mubr.f32.mxu0 0.0
    %233 = vmatmul.mubr.f32.gmra.mrb[0].mxu0 %v100
    %v234 = vpop.f32.mrb[0].mxu0
    %v235 = vadd.f32 %v69, %v234
    %v236 = vpop.f32.mrb[0].mxu0
    %237 = vmatprep.mubr.f32.mxu0 0.0
    %238 = vmatmul.mubr.f32.gmra.mrb[0].mxu0 %v103
    %v239 = vpop.f32.mrb[0].mxu0
    %v240 = vadd.f32 %v69, %v239
    %v241 = vpop.f32.mrb[0].mxu0
    %242 = vmatprep.mubr.f32.mxu0 0.0
    %243 = vmatmul.mubr.f32.gmra.mrb[0].mxu0 %v106
    %v244 = vpop.f32.mrb[0].mxu0
    %v245 = vadd.f32 %v69, %v244
    %v246 = vpop.f32.mrb[0].mxu0
    %247 = vmatprep.mubr.f32.mxu0 0.0
    %248 = vmatmul.mubr.f32.gmra.mrb[0].mxu0 %v109
    %v249 = vpop.f32.mrb[0].mxu0
    %v250 = vadd.f32 %v69, %v249
    %v251 = vpop.f32.mrb[0].mxu0
    %252 = vmatprep.mubr.f32.mxu0 0.0
    %253 = vmatmul.mubr.f32.gmra.mrb[0].mxu0 %v112
    %v254 = vpop.f32.mrb[0].mxu0
    %v255 = vadd.f32 %v69, %v254
    %v256 = vpop.f32.mrb[0].mxu0
    %257 = vmatprep.mubr.f32.mxu0 0.0
    %258 = vmatmul.mubr.f32.gmra.mrb[0].mxu0 %v115
    %v259 = vpop.f32.mrb[0].mxu0
    %v260 = vadd.f32 %v69, %v259
    %v261 = vpop.f32.mrb[0].mxu0
    %262 = vmatprep.mubr.f32.mxu0 0.0
    %263 = vmatmul.mubr.f32.gmra.mrb[0].mxu0 %v118
    %v264 = vpop.f32.mrb[0].mxu0
    %v265 = vadd.f32 %v69, %v264
    %v266 = vpop.f32.mrb[0].mxu0
    %267 = vmatprep.mubr.f32.mxu0 0.0
    %268 = vmatmul.mubr.f32.gmra.mrb[0].mxu0 %v121
    %v269 = vpop.f32.mrb[0].mxu0
    %v270 = vadd.f32 %v69, %v269
    %v271 = vpop.f32.mrb[0].mxu0
    %272 = vdwg.mxu0
    %v273 = vmax.f32 %v190, 0.0
    %v274 = vmax.f32 %v195, 0.0
    %v275 = vmax.f32 %v200, 0.0
    %v276 = vmax.f32 %v205, 0.0
    %v277 = vmax.f32 %v210, 0.0
    %v278 = vmax.f32 %v215, 0.0
    %v279 = vmax.f32 %v220, 0.0
    %v280 = vmax.f32 %v225, 0.0
    %v281 = vmax.f32 %v230, 0.0
    %v282 = vmax.f32 %v235, 0.0
    %v283 = vmax.f32 %v240, 0.0
    %v284 = vmax.f32 %v245, 0.0
    %v285 = vmax.f32 %v250, 0.0
    %v286 = vmax.f32 %v255, 0.0
    %v287 = vmax.f32 %v260, 0.0
    %v288 = vmax.f32 %v265, 0.0
    %v289 = vmax.f32 %v270, 0.0
    %290 = vst.msk [vmem:[#allocation2] sm:$0xff] %vm71, 0.0
    %291 = vst.msk [vmem:[#allocation2 + $0x8] sm:$0xff] %vm71, 0.0
    %292 = vst.msk [vmem:[#allocation2 + $0x10] sm:$0xff] %vm71, 0.0
    %293 = vst.msk [vmem:[#allocation2 + $0x18] sm:$0xff] %vm71, 0.0
    %294 = vst.msk [vmem:[#allocation2 + $0xa8] sm:$0xff] %vm71, 0.0
    %295 = vst.msk [vmem:[#allocation2 + $0xb0] sm:$0xff] %vm71, 0.0
    %296 = vst.msk [vmem:[#allocation2 + $0xb8] sm:$0xff] %vm71, 0.0
    %297 = vst.msk [vmem:[#allocation2 + $0xc0] sm:$0xff] %vm71, 0.0
    %298 = vst.msk [vmem:[#allocation2 + $0x20] sm:$0xff] %vm71, %v273
    %299 = vst.msk [vmem:[#allocation2 + $0x28] sm:$0xff] %vm71, %v274
    %300 = vst.msk [vmem:[#allocation2 + $0x30] sm:$0xff] %vm71, %v275
    %301 = vst.msk [vmem:[#allocation2 + $0x38] sm:$0xff] %vm71, %v276
    %302 = vst.msk [vmem:[#allocation2 + $0x40] sm:$0xff] %vm71, %v277
    %303 = vst.msk [vmem:[#allocation2 + $0x48] sm:$0xff] %vm71, %v278
    %304 = vst.msk [vmem:[#allocation2 + $0x50] sm:$0xff] %vm71, %v279
    %305 = vst.msk [vmem:[#allocation2 + $0x58] sm:$0xff] %vm71, %v280
    %306 = vst.msk [vmem:[#allocation2 + $0x60] sm:$0xff] %vm71, %v281
    %307 = vst.msk [vmem:[#allocation2 + $0x68] sm:$0xff] %vm71, %v282
    %308 = vst.msk [vmem:[#allocation2 + $0x70] sm:$0xff] %vm71, %v283
    %309 = vst.msk [vmem:[#allocation2 + $0x78] sm:$0xff] %vm71, %v284
    %310 = vst.msk [vmem:[#allocation2 + $0x80] sm:$0xff] %vm71, %v285
    %311 = vst.msk [vmem:[#allocation2 + $0x88] sm:$0xff] %vm71, %v286
    %312 = vst.msk [vmem:[#allocation2 + $0x90] sm:$0xff] %vm71, %v287
    %313 = vst.msk [vmem:[#allocation2 + $0x98] sm:$0xff] %vm71, %v288
    %314 = vst.msk [vmem:[#allocation2 + $0xa0] sm:$0xff] %vm71, %v289
    %v315 = vld [vmem:[#allocation2] sm:$0xff]
    %v316 = vld [vmem:[#allocation2 + $0x8] sm:$0xff]
    %v317 = vld [vmem:[#allocation2 + $0x10] sm:$0xff]
    %v318 = vld [vmem:[#allocation2 + $0x18] sm:$0xff]
    %v319 = vld [vmem:[#allocation2 + $0x20] sm:$0xff]
    %v320 = vld [vmem:[#allocation2 + $0x28] sm:$0xff]
    %v321 = vld [vmem:[#allocation2 + $0x30] sm:$0xff]
    %v322 = vld [vmem:[#allocation2 + $0x38] sm:$0xff]
    %v323 = vld [vmem:[#allocation2 + $0x40] sm:$0xff]
    %v324 = vld [vmem:[#allocation2 + $0x48] sm:$0xff]
    %v325 = vld [vmem:[#allocation2 + $0x50] sm:$0xff]
    %v326 = vld [vmem:[#allocation2 + $0x58] sm:$0xff]
    %v327 = vld [vmem:[#allocation2 + $0x60] sm:$0xff]
    %v328 = vld [vmem:[#allocation2 + $0x68] sm:$0xff]
    %v329 = vld [vmem:[#allocation2 + $0x70] sm:$0xff]
    %v330 = vld [vmem:[#allocation2 + $0x78] sm:$0xff]
    %v331 = vld [vmem:[#allocation2 + $0x80] sm:$0xff]
    %v332 = vld [vmem:[#allocation2 + $0x88] sm:$0xff]
    %333 = vst.msk [vmem:[#allocation3] sm:$0xff] %vm71, %v315
    %334 = vst.msk [vmem:[#allocation3 + $0x10] sm:$0xff] %vm71, %v316
    %335 = vst.msk [vmem:[#allocation3 + $0x20] sm:$0xff] %vm71, %v317
    %336 = vst.msk [vmem:[#allocation3 + $0x30] sm:$0xff] %vm71, %v318
    %337 = vst.msk [vmem:[#allocation3 + $0x40] sm:$0xff] %vm71, %v319
    %338 = vst.msk [vmem:[#allocation3 + $0x50] sm:$0xff] %vm71, %v320
    %339 = vst.msk [vmem:[#allocation3 + $0x60] sm:$0xff] %vm71, %v321
    %340 = vst.msk [vmem:[#allocation3 + $0x70] sm:$0xff] %vm71, %v322
    %341 = vst.msk [vmem:[#allocation3 + $0x80] sm:$0xff] %vm71, %v323
    %342 = vst.msk [vmem:[#allocation3 + $0x90] sm:$0xff] %vm71, %v324
    %343 = vst.msk [vmem:[#allocation3 + $0xa0] sm:$0xff] %vm71, %v325
    %344 = vst.msk [vmem:[#allocation3 + $0xb0] sm:$0xff] %vm71, %v326
    %345 = vst.msk [vmem:[#allocation3 + $0xc0] sm:$0xff] %vm71, %v327
    %346 = vst.msk [vmem:[#allocation3 + $0xd0] sm:$0xff] %vm71, %v328
    %347 = vst.msk [vmem:[#allocation3 + $0xe0] sm:$0xff] %vm71, %v329
    %348 = vst.msk [vmem:[#allocation3 + $0xf0] sm:$0xff] %vm71, %v330
    %349 = vst.msk [vmem:[#allocation3 + $0x100] sm:$0xff] %vm71, %v331
    %350 = vst.msk [vmem:[#allocation3 + $0x110] sm:$0xff] %vm71, %v332
    %v351 = vld [vmem:[#allocation2 + $0x8] sm:$0xff]
    %v352 = vld [vmem:[#allocation2 + $0x10] sm:$0xff]
    %v353 = vld [vmem:[#allocation2 + $0x18] sm:$0xff]
    %v354 = vld [vmem:[#allocation2 + $0x20] sm:$0xff]
    %v355 = vld [vmem:[#allocation2 + $0x28] sm:$0xff]
    %v356 = vld [vmem:[#allocation2 + $0x30] sm:$0xff]
    %v357 = vld [vmem:[#allocation2 + $0x38] sm:$0xff]
    %v358 = vld [vmem:[#allocation2 + $0x40] sm:$0xff]
    %v359 = vld [vmem:[#allocation2 + $0x48] sm:$0xff]
    %v360 = vld [vmem:[#allocation2 + $0x50] sm:$0xff]
    %v361 = vld [vmem:[#allocation2 + $0x58] sm:$0xff]
    %v362 = vld [vmem:[#allocation2 + $0x60] sm:$0xff]
    %v363 = vld [vmem:[#allocation2 + $0x68] sm:$0xff]
    %v364 = vld [vmem:[#allocation2 + $0x70] sm:$0xff]
    %v365 = vld [vmem:[#allocation2 + $0x78] sm:$0xff]
    %v366 = vld [vmem:[#allocation2 + $0x80] sm:$0xff]
    %v367 = vld [vmem:[#allocation2 + $0x88] sm:$0xff]
    %v368 = vld [vmem:[#allocation2 + $0x90] sm:$0xff]
    %387 = vrot.lane.b32.xlu0 %v351, 32
    %v388 = vpop.permute.xlu0 %387
    %389 = vrot.lane.b32.xlu0 %v352, 32
    %v390 = vpop.permute.xlu0 %389
    %391 = vrot.lane.b32.xlu0 %v353, 32
    %v392 = vpop.permute.xlu0 %391
    %393 = vrot.lane.b32.xlu0 %v354, 32
    %v394 = vpop.permute.xlu0 %393
    %395 = vrot.lane.b32.xlu0 %v355, 32
    %v396 = vpop.permute.xlu0 %395
    %397 = vrot.lane.b32.xlu0 %v356, 32
    %v398 = vpop.permute.xlu0 %397
    %399 = vrot.lane.b32.xlu0 %v357, 32
    %v400 = vpop.permute.xlu0 %399
    %401 = vrot.lane.b32.xlu0 %v358, 32
    %v402 = vpop.permute.xlu0 %401
    %403 = vrot.lane.b32.xlu0 %v359, 32
    %v404 = vpop.permute.xlu0 %403
    %405 = vrot.lane.b32.xlu0 %v360, 32
    %v406 = vpop.permute.xlu0 %405
    %407 = vrot.lane.b32.xlu0 %v361, 32
    %v408 = vpop.permute.xlu0 %407
    %409 = vrot.lane.b32.xlu0 %v362, 32
    %v410 = vpop.permute.xlu0 %409
    %411 = vrot.lane.b32.xlu0 %v363, 32
    %v412 = vpop.permute.xlu0 %411
    %413 = vrot.lane.b32.xlu0 %v364, 32
    %v414 = vpop.permute.xlu0 %413
    %415 = vrot.lane.b32.xlu0 %v365, 32
    %v416 = vpop.permute.xlu0 %415
    %417 = vrot.lane.b32.xlu0 %v366, 32
    %v418 = vpop.permute.xlu0 %417
    %419 = vrot.lane.b32.xlu0 %v367, 32
    %v420 = vpop.permute.xlu0 %419
    %421 = vrot.lane.b32.xlu0 %v368, 32
    %v422 = vpop.permute.xlu0 %421
    %vm441 = vcmask 523520
    %442 = vst.msk [vmem:[#allocation3] sm:$0xff] %vm441, %v388
    %443 = vst.msk [vmem:[#allocation3 + $0x10] sm:$0xff] %vm441, %v390
    %444 = vst.msk [vmem:[#allocation3 + $0x20] sm:$0xff] %vm441, %v392
    %445 = vst.msk [vmem:[#allocation3 + $0x30] sm:$0xff] %vm441, %v394
    %446 = vst.msk [vmem:[#allocation3 + $0x40] sm:$0xff] %vm441, %v396
    %447 = vst.msk [vmem:[#allocation3 + $0x50] sm:$0xff] %vm441, %v398
    %448 = vst.msk [vmem:[#allocation3 + $0x60] sm:$0xff] %vm441, %v400
    %449 = vst.msk [vmem:[#allocation3 + $0x70] sm:$0xff] %vm441, %v402
    %450 = vst.msk [vmem:[#allocation3 + $0x80] sm:$0xff] %vm441, %v404
    %451 = vst.msk [vmem:[#allocation3 + $0x90] sm:$0xff] %vm441, %v406
    %452 = vst.msk [vmem:[#allocation3 + $0xa0] sm:$0xff] %vm441, %v408
    %453 = vst.msk [vmem:[#allocation3 + $0xb0] sm:$0xff] %vm441, %v410
    %454 = vst.msk [vmem:[#allocation3 + $0xc0] sm:$0xff] %vm441, %v412
    %455 = vst.msk [vmem:[#allocation3 + $0xd0] sm:$0xff] %vm441, %v414
    %456 = vst.msk [vmem:[#allocation3 + $0xe0] sm:$0xff] %vm441, %v416
    %457 = vst.msk [vmem:[#allocation3 + $0xf0] sm:$0xff] %vm441, %v418
    %458 = vst.msk [vmem:[#allocation3 + $0x100] sm:$0xff] %vm441, %v420
    %459 = vst.msk [vmem:[#allocation3 + $0x110] sm:$0xff] %vm441, %v422
    %v460 = vld [vmem:[#allocation2 + $0x10] sm:$0xff]
    %v461 = vld [vmem:[#allocation2 + $0x18] sm:$0xff]
    %v462 = vld [vmem:[#allocation2 + $0x20] sm:$0xff]
    %v463 = vld [vmem:[#allocation2 + $0x28] sm:$0xff]
    %v464 = vld [vmem:[#allocation2 + $0x30] sm:$0xff]
    %v465 = vld [vmem:[#allocation2 + $0x38] sm:$0xff]
    %v466 = vld [vmem:[#allocation2 + $0x40] sm:$0xff]
    %v467 = vld [vmem:[#allocation2 + $0x48] sm:$0xff]
    %v468 = vld [vmem:[#allocation2 + $0x50] sm:$0xff]
    %v469 = vld [vmem:[#allocation2 + $0x58] sm:$0xff]
    %v470 = vld [vmem:[#allocation2 + $0x60] sm:$0xff]
    %v471 = vld [vmem:[#allocation2 + $0x68] sm:$0xff]
    %v472 = vld [vmem:[#allocation2 + $0x70] sm:$0xff]
    %v473 = vld [vmem:[#allocation2 + $0x78] sm:$0xff]
    %v474 = vld [vmem:[#allocation2 + $0x80] sm:$0xff]
    %v475 = vld [vmem:[#allocation2 + $0x88] sm:$0xff]
    %v476 = vld [vmem:[#allocation2 + $0x90] sm:$0xff]
    %v477 = vld [vmem:[#allocation2 + $0x98] sm:$0xff]
    %496 = vrot.lane.b32.xlu0 %v460, 64
    %v497 = vpop.permute.xlu0 %496
    %498 = vrot.lane.b32.xlu0 %v461, 64
    %v499 = vpop.permute.xlu0 %498
    %500 = vrot.lane.b32.xlu0 %v462, 64
    %v501 = vpop.permute.xlu0 %500
    %502 = vrot.lane.b32.xlu0 %v463, 64
    %v503 = vpop.permute.xlu0 %502
    %504 = vrot.lane.b32.xlu0 %v464, 64
    %v505 = vpop.permute.xlu0 %504
    %506 = vrot.lane.b32.xlu0 %v465, 64
    %v507 = vpop.permute.xlu0 %506
    %508 = vrot.lane.b32.xlu0 %v466, 64
    %v509 = vpop.permute.xlu0 %508
    %510 = vrot.lane.b32.xlu0 %v467, 64
    %v511 = vpop.permute.xlu0 %510
    %512 = vrot.lane.b32.xlu0 %v468, 64
    %v513 = vpop.permute.xlu0 %512
    %514 = vrot.lane.b32.xlu0 %v469, 64
    %v515 = vpop.permute.xlu0 %514
    %516 = vrot.lane.b32.xlu0 %v470, 64
    %v517 = vpop.permute.xlu0 %516
    %518 = vrot.lane.b32.xlu0 %v471, 64
    %v519 = vpop.permute.xlu0 %518
    %520 = vrot.lane.b32.xlu0 %v472, 64
    %v521 = vpop.permute.xlu0 %520
    %522 = vrot.lane.b32.xlu0 %v473, 64
    %v523 = vpop.permute.xlu0 %522
    %524 = vrot.lane.b32.xlu0 %v474, 64
    %v525 = vpop.permute.xlu0 %524
    %526 = vrot.lane.b32.xlu0 %v475, 64
    %v527 = vpop.permute.xlu0 %526
    %528 = vrot.lane.b32.xlu0 %v476, 64
    %v529 = vpop.permute.xlu0 %528
    %530 = vrot.lane.b32.xlu0 %v477, 64
    %v531 = vpop.permute.xlu0 %530
    %vm550 = vcmask 785920
    %551 = vst.msk [vmem:[#allocation3] sm:$0xff] %vm550, %v497
    %552 = vst.msk [vmem:[#allocation3 + $0x10] sm:$0xff] %vm550, %v499
    %553 = vst.msk [vmem:[#allocation3 + $0x20] sm:$0xff] %vm550, %v501
    %554 = vst.msk [vmem:[#allocation3 + $0x30] sm:$0xff] %vm550, %v503
    %555 = vst.msk [vmem:[#allocation3 + $0x40] sm:$0xff] %vm550, %v505
    %556 = vst.msk [vmem:[#allocation3 + $0x50] sm:$0xff] %vm550, %v507
    %557 = vst.msk [vmem:[#allocation3 + $0x60] sm:$0xff] %vm550, %v509
    %558 = vst.msk [vmem:[#allocation3 + $0x70] sm:$0xff] %vm550, %v511
    %559 = vst.msk [vmem:[#allocation3 + $0x80] sm:$0xff] %vm550, %v513
    %560 = vst.msk [vmem:[#allocation3 + $0x90] sm:$0xff] %vm550, %v515
    %561 = vst.msk [vmem:[#allocation3 + $0xa0] sm:$0xff] %vm550, %v517
    %562 = vst.msk [vmem:[#allocation3 + $0xb0] sm:$0xff] %vm550, %v519
    %563 = vst.msk [vmem:[#allocation3 + $0xc0] sm:$0xff] %vm550, %v521
    %564 = vst.msk [vmem:[#allocation3 + $0xd0] sm:$0xff] %vm550, %v523
    %565 = vst.msk [vmem:[#allocation3 + $0xe0] sm:$0xff] %vm550, %v525
    %566 = vst.msk [vmem:[#allocation3 + $0xf0] sm:$0xff] %vm550, %v527
    %567 = vst.msk [vmem:[#allocation3 + $0x100] sm:$0xff] %vm550, %v529
    %568 = vst.msk [vmem:[#allocation3 + $0x110] sm:$0xff] %vm550, %v531
    %v569 = vld [vmem:[#allocation2 + $0x18] sm:$0xff]
    %v570 = vld [vmem:[#allocation2 + $0x20] sm:$0xff]
    %v571 = vld [vmem:[#allocation2 + $0x28] sm:$0xff]
    %v572 = vld [vmem:[#allocation2 + $0x30] sm:$0xff]
    %v573 = vld [vmem:[#allocation2 + $0x38] sm:$0xff]
    %v574 = vld [vmem:[#allocation2 + $0x40] sm:$0xff]
    %v575 = vld [vmem:[#allocation2 + $0x48] sm:$0xff]
    %v576 = vld [vmem:[#allocation2 + $0x50] sm:$0xff]
    %v577 = vld [vmem:[#allocation2 + $0x58] sm:$0xff]
    %v578 = vld [vmem:[#allocation2 + $0x60] sm:$0xff]
    %v579 = vld [vmem:[#allocation2 + $0x68] sm:$0xff]
    %v580 = vld [vmem:[#allocation2 + $0x70] sm:$0xff]
    %v581 = vld [vmem:[#allocation2 + $0x78] sm:$0xff]
    %v582 = vld [vmem:[#allocation2 + $0x80] sm:$0xff]
    %v583 = vld [vmem:[#allocation2 + $0x88] sm:$0xff]
    %v584 = vld [vmem:[#allocation2 + $0x90] sm:$0xff]
    %v585 = vld [vmem:[#allocation2 + $0x98] sm:$0xff]
    %v586 = vld [vmem:[#allocation2 + $0xa0] sm:$0xff]
    %605 = vrot.lane.b32.xlu0 %v569, 96
    %v606 = vpop.permute.xlu0 %605
    %607 = vrot.lane.b32.xlu0 %v570, 96
    %v608 = vpop.permute.xlu0 %607
    %609 = vrot.lane.b32.xlu0 %v571, 96
    %v610 = vpop.permute.xlu0 %609
    %611 = vrot.lane.b32.xlu0 %v572, 96
    %v612 = vpop.permute.xlu0 %611
    %613 = vrot.lane.b32.xlu0 %v573, 96
    %v614 = vpop.permute.xlu0 %613
    %615 = vrot.lane.b32.xlu0 %v574, 96
    %v616 = vpop.permute.xlu0 %615
    %617 = vrot.lane.b32.xlu0 %v575, 96
    %v618 = vpop.permute.xlu0 %617
    %619 = vrot.lane.b32.xlu0 %v576, 96
    %v620 = vpop.permute.xlu0 %619
    %621 = vrot.lane.b32.xlu0 %v577, 96
    %v622 = vpop.permute.xlu0 %621
    %623 = vrot.lane.b32.xlu0 %v578, 96
    %v624 = vpop.permute.xlu0 %623
    %625 = vrot.lane.b32.xlu0 %v579, 96
    %v626 = vpop.permute.xlu0 %625
    %627 = vrot.lane.b32.xlu0 %v580, 96
    %v628 = vpop.permute.xlu0 %627
    %629 = vrot.lane.b32.xlu0 %v581, 96
    %v630 = vpop.permute.xlu0 %629
    %631 = vrot.lane.b32.xlu0 %v582, 96
    %v632 = vpop.permute.xlu0 %631
    %633 = vrot.lane.b32.xlu0 %v583, 96
    %v634 = vpop.permute.xlu0 %633
    %635 = vrot.lane.b32.xlu0 %v584, 96
    %v636 = vpop.permute.xlu0 %635
    %637 = vrot.lane.b32.xlu0 %v585, 96
    %v638 = vpop.permute.xlu0 %637
    %639 = vrot.lane.b32.xlu0 %v586, 96
    %v640 = vpop.permute.xlu0 %639
    %vm659 = vcmask 1048320
    %660 = vst.msk [vmem:[#allocation3] sm:$0xff] %vm659, %v606
    %661 = vst.msk [vmem:[#allocation3 + $0x10] sm:$0xff] %vm659, %v608
    %662 = vst.msk [vmem:[#allocation3 + $0x20] sm:$0xff] %vm659, %v610
    %663 = vst.msk [vmem:[#allocation3 + $0x30] sm:$0xff] %vm659, %v612
    %664 = vst.msk [vmem:[#allocation3 + $0x40] sm:$0xff] %vm659, %v614
    %665 = vst.msk [vmem:[#allocation3 + $0x50] sm:$0xff] %vm659, %v616
    %666 = vst.msk [vmem:[#allocation3 + $0x60] sm:$0xff] %vm659, %v618
    %667 = vst.msk [vmem:[#allocation3 + $0x70] sm:$0xff] %vm659, %v620
    %668 = vst.msk [vmem:[#allocation3 + $0x80] sm:$0xff] %vm659, %v622
    %669 = vst.msk [vmem:[#allocation3 + $0x90] sm:$0xff] %vm659, %v624
    %670 = vst.msk [vmem:[#allocation3 + $0xa0] sm:$0xff] %vm659, %v626
    %671 = vst.msk [vmem:[#allocation3 + $0xb0] sm:$0xff] %vm659, %v628
    %672 = vst.msk [vmem:[#allocation3 + $0xc0] sm:$0xff] %vm659, %v630
    %673 = vst.msk [vmem:[#allocation3 + $0xd0] sm:$0xff] %vm659, %v632
    %674 = vst.msk [vmem:[#allocation3 + $0xe0] sm:$0xff] %vm659, %v634
    %675 = vst.msk [vmem:[#allocation3 + $0xf0] sm:$0xff] %vm659, %v636
    %676 = vst.msk [vmem:[#allocation3 + $0x100] sm:$0xff] %vm659, %v638
    %677 = vst.msk [vmem:[#allocation3 + $0x110] sm:$0xff] %vm659, %v640
    %v678 = vld [vmem:[#allocation2 + $0x20] sm:$0xff]
    %v679 = vld [vmem:[#allocation2 + $0x28] sm:$0xff]
    %v680 = vld [vmem:[#allocation2 + $0x30] sm:$0xff]
    %v681 = vld [vmem:[#allocation2 + $0x38] sm:$0xff]
    %v682 = vld [vmem:[#allocation2 + $0x40] sm:$0xff]
    %v683 = vld [vmem:[#allocation2 + $0x48] sm:$0xff]
    %v684 = vld [vmem:[#allocation2 + $0x50] sm:$0xff]
    %v685 = vld [vmem:[#allocation2 + $0x58] sm:$0xff]
    %v686 = vld [vmem:[#allocation2 + $0x60] sm:$0xff]
    %v687 = vld [vmem:[#allocation2 + $0x68] sm:$0xff]
    %v688 = vld [vmem:[#allocation2 + $0x70] sm:$0xff]
    %v689 = vld [vmem:[#allocation2 + $0x78] sm:$0xff]
    %v690 = vld [vmem:[#allocation2 + $0x80] sm:$0xff]
    %v691 = vld [vmem:[#allocation2 + $0x88] sm:$0xff]
    %v692 = vld [vmem:[#allocation2 + $0x90] sm:$0xff]
    %v693 = vld [vmem:[#allocation2 + $0x98] sm:$0xff]
    %v694 = vld [vmem:[#allocation2 + $0xa0] sm:$0xff]
    %v695 = vld [vmem:[#allocation2 + $0xa8] sm:$0xff]
    %696 = vst.msk [vmem:[#allocation3 + $0x8] sm:$0xff] %vm71, %v678
    %697 = vst.msk [vmem:[#allocation3 + $0x18] sm:$0xff] %vm71, %v679
    %698 = vst.msk [vmem:[#allocation3 + $0x28] sm:$0xff] %vm71, %v680
    %699 = vst.msk [vmem:[#allocation3 + $0x38] sm:$0xff] %vm71, %v681
    %700 = vst.msk [vmem:[#allocation3 + $0x48] sm:$0xff] %vm71, %v682
    %701 = vst.msk [vmem:[#allocation3 + $0x58] sm:$0xff] %vm71, %v683
    %702 = vst.msk [vmem:[#allocation3 + $0x68] sm:$0xff] %vm71, %v684
    %703 = vst.msk [vmem:[#allocation3 + $0x78] sm:$0xff] %vm71, %v685
    %704 = vst.msk [vmem:[#allocation3 + $0x88] sm:$0xff] %vm71, %v686
    %705 = vst.msk [vmem:[#allocation3 + $0x98] sm:$0xff] %vm71, %v687
    %706 = vst.msk [vmem:[#allocation3 + $0xa8] sm:$0xff] %vm71, %v688
    %707 = vst.msk [vmem:[#allocation3 + $0xb8] sm:$0xff] %vm71, %v689
    %708 = vst.msk [vmem:[#allocation3 + $0xc8] sm:$0xff] %vm71, %v690
    %709 = vst.msk [vmem:[#allocation3 + $0xd8] sm:$0xff] %vm71, %v691
    %710 = vst.msk [vmem:[#allocation3 + $0xe8] sm:$0xff] %vm71, %v692
    %711 = vst.msk [vmem:[#allocation3 + $0xf8] sm:$0xff] %vm71, %v693
    %712 = vst.msk [vmem:[#allocation3 + $0x108] sm:$0xff] %vm71, %v694
    %713 = vst.msk [vmem:[#allocation3 + $0x118] sm:$0xff] %vm71, %v695
    %v714 = vld [vmem:[#allocation2 + $0x28] sm:$0xff]
    %v715 = vld [vmem:[#allocation2 + $0x30] sm:$0xff]
    %v716 = vld [vmem:[#allocation2 + $0x38] sm:$0xff]
    %v717 = vld [vmem:[#allocation2 + $0x40] sm:$0xff]
    %v718 = vld [vmem:[#allocation2 + $0x48] sm:$0xff]
    %v719 = vld [vmem:[#allocation2 + $0x50] sm:$0xff]
    %v720 = vld [vmem:[#allocation2 + $0x58] sm:$0xff]
    %v721 = vld [vmem:[#allocation2 + $0x60] sm:$0xff]
    %v722 = vld [vmem:[#allocation2 + $0x68] sm:$0xff]
    %v723 = vld [vmem:[#allocation2 + $0x70] sm:$0xff]
    %v724 = vld [vmem:[#allocation2 + $0x78] sm:$0xff]
    %v725 = vld [vmem:[#allocation2 + $0x80] sm:$0xff]
    %v726 = vld [vmem:[#allocation2 + $0x88] sm:$0xff]
    %v727 = vld [vmem:[#allocation2 + $0x90] sm:$0xff]
    %v728 = vld [vmem:[#allocation2 + $0x98] sm:$0xff]
    %v729 = vld [vmem:[#allocation2 + $0xa0] sm:$0xff]
    %v730 = vld [vmem:[#allocation2 + $0xa8] sm:$0xff]
    %v731 = vld [vmem:[#allocation2 + $0xb0] sm:$0xff]
    %750 = vrot.lane.b32.xlu0 %v714, 32
    %v751 = vpop.permute.xlu0 %750
    %752 = vrot.lane.b32.xlu0 %v715, 32
    %v753 = vpop.permute.xlu0 %752
    %754 = vrot.lane.b32.xlu0 %v716, 32
    %v755 = vpop.permute.xlu0 %754
    %756 = vrot.lane.b32.xlu0 %v717, 32
    %v757 = vpop.permute.xlu0 %756
    %758 = vrot.lane.b32.xlu0 %v718, 32
    %v759 = vpop.permute.xlu0 %758
    %760 = vrot.lane.b32.xlu0 %v719, 32
    %v761 = vpop.permute.xlu0 %760
    %762 = vrot.lane.b32.xlu0 %v720, 32
    %v763 = vpop.permute.xlu0 %762
    %764 = vrot.lane.b32.xlu0 %v721, 32
    %v765 = vpop.permute.xlu0 %764
    %766 = vrot.lane.b32.xlu0 %v722, 32
    %v767 = vpop.permute.xlu0 %766
    %768 = vrot.lane.b32.xlu0 %v723, 32
    %v769 = vpop.permute.xlu0 %768
    %770 = vrot.lane.b32.xlu0 %v724, 32
    %v771 = vpop.permute.xlu0 %770
    %772 = vrot.lane.b32.xlu0 %v725, 32
    %v773 = vpop.permute.xlu0 %772
    %774 = vrot.lane.b32.xlu0 %v726, 32
    %v775 = vpop.permute.xlu0 %774
    %776 = vrot.lane.b32.xlu0 %v727, 32
    %v777 = vpop.permute.xlu0 %776
    %778 = vrot.lane.b32.xlu0 %v728, 32
    %v779 = vpop.permute.xlu0 %778
    %780 = vrot.lane.b32.xlu0 %v729, 32
    %v781 = vpop.permute.xlu0 %780
    %782 = vrot.lane.b32.xlu0 %v730, 32
    %v783 = vpop.permute.xlu0 %782
    %784 = vrot.lane.b32.xlu0 %v731, 32
    %v785 = vpop.permute.xlu0 %784
    %804 = vst.msk [vmem:[#allocation3 + $0x8] sm:$0xff] %vm441, %v751
    %805 = vst.msk [vmem:[#allocation3 + $0x18] sm:$0xff] %vm441, %v753
    %806 = vst.msk [vmem:[#allocation3 + $0x28] sm:$0xff] %vm441, %v755
    %807 = vst.msk [vmem:[#allocation3 + $0x38] sm:$0xff] %vm441, %v757
    %808 = vst.msk [vmem:[#allocation3 + $0x48] sm:$0xff] %vm441, %v759
    %809 = vst.msk [vmem:[#allocation3 + $0x58] sm:$0xff] %vm441, %v761
    %810 = vst.msk [vmem:[#allocation3 + $0x68] sm:$0xff] %vm441, %v763
    %811 = vst.msk [vmem:[#allocation3 + $0x78] sm:$0xff] %vm441, %v765
    %812 = vst.msk [vmem:[#allocation3 + $0x88] sm:$0xff] %vm441, %v767
    %813 = vst.msk [vmem:[#allocation3 + $0x98] sm:$0xff] %vm441, %v769
    %814 = vst.msk [vmem:[#allocation3 + $0xa8] sm:$0xff] %vm441, %v771
    %815 = vst.msk [vmem:[#allocation3 + $0xb8] sm:$0xff] %vm441, %v773
    %816 = vst.msk [vmem:[#allocation3 + $0xc8] sm:$0xff] %vm441, %v775
    %817 = vst.msk [vmem:[#allocation3 + $0xd8] sm:$0xff] %vm441, %v777
    %818 = vst.msk [vmem:[#allocation3 + $0xe8] sm:$0xff] %vm441, %v779
    %819 = vst.msk [vmem:[#allocation3 + $0xf8] sm:$0xff] %vm441, %v781
    %820 = vst.msk [vmem:[#allocation3 + $0x108] sm:$0xff] %vm441, %v783
    %821 = vst.msk [vmem:[#allocation3 + $0x118] sm:$0xff] %vm441, %v785
    %v822 = vld [vmem:[#allocation2 + $0x30] sm:$0xff]
    %v823 = vld [vmem:[#allocation2 + $0x38] sm:$0xff]
    %v824 = vld [vmem:[#allocation2 + $0x40] sm:$0xff]
    %v825 = vld [vmem:[#allocation2 + $0x48] sm:$0xff]
    %v826 = vld [vmem:[#allocation2 + $0x50] sm:$0xff]
    %v827 = vld [vmem:[#allocation2 + $0x58] sm:$0xff]
    %v828 = vld [vmem:[#allocation2 + $0x60] sm:$0xff]
    %v829 = vld [vmem:[#allocation2 + $0x68] sm:$0xff]
    %v830 = vld [vmem:[#allocation2 + $0x70] sm:$0xff]
    %v831 = vld [vmem:[#allocation2 + $0x78] sm:$0xff]
    %v832 = vld [vmem:[#allocation2 + $0x80] sm:$0xff]
    %v833 = vld [vmem:[#allocation2 + $0x88] sm:$0xff]
    %v834 = vld [vmem:[#allocation2 + $0x90] sm:$0xff]
    %v835 = vld [vmem:[#allocation2 + $0x98] sm:$0xff]
    %v836 = vld [vmem:[#allocation2 + $0xa0] sm:$0xff]
    %v837 = vld [vmem:[#allocation2 + $0xa8] sm:$0xff]
    %v838 = vld [vmem:[#allocation2 + $0xb0] sm:$0xff]
    %v839 = vld [vmem:[#allocation2 + $0xb8] sm:$0xff]
    %858 = vrot.lane.b32.xlu0 %v822, 64
    %v859 = vpop.permute.xlu0 %858
    %860 = vrot.lane.b32.xlu0 %v823, 64
    %v861 = vpop.permute.xlu0 %860
    %862 = vrot.lane.b32.xlu0 %v824, 64
    %v863 = vpop.permute.xlu0 %862
    %864 = vrot.lane.b32.xlu0 %v825, 64
    %v865 = vpop.permute.xlu0 %864
    %866 = vrot.lane.b32.xlu0 %v826, 64
    %v867 = vpop.permute.xlu0 %866
    %868 = vrot.lane.b32.xlu0 %v827, 64
    %v869 = vpop.permute.xlu0 %868
    %870 = vrot.lane.b32.xlu0 %v828, 64
    %v871 = vpop.permute.xlu0 %870
    %872 = vrot.lane.b32.xlu0 %v829, 64
    %v873 = vpop.permute.xlu0 %872
    %874 = vrot.lane.b32.xlu0 %v830, 64
    %v875 = vpop.permute.xlu0 %874
    %876 = vrot.lane.b32.xlu0 %v831, 64
    %v877 = vpop.permute.xlu0 %876
    %878 = vrot.lane.b32.xlu0 %v832, 64
    %v879 = vpop.permute.xlu0 %878
    %880 = vrot.lane.b32.xlu0 %v833, 64
    %v881 = vpop.permute.xlu0 %880
    %882 = vrot.lane.b32.xlu0 %v834, 64
    %v883 = vpop.permute.xlu0 %882
    %884 = vrot.lane.b32.xlu0 %v835, 64
    %v885 = vpop.permute.xlu0 %884
    %886 = vrot.lane.b32.xlu0 %v836, 64
    %v887 = vpop.permute.xlu0 %886
    %888 = vrot.lane.b32.xlu0 %v837, 64
    %v889 = vpop.permute.xlu0 %888
    %890 = vrot.lane.b32.xlu0 %v838, 64
    %v891 = vpop.permute.xlu0 %890
    %892 = vrot.lane.b32.xlu0 %v839, 64
    %v893 = vpop.permute.xlu0 %892
    %912 = vst.msk [vmem:[#allocation3 + $0x8] sm:$0xff] %vm550, %v859
    %913 = vst.msk [vmem:[#allocation3 + $0x18] sm:$0xff] %vm550, %v861
    %914 = vst.msk [vmem:[#allocation3 + $0x28] sm:$0xff] %vm550, %v863
    %915 = vst.msk [vmem:[#allocation3 + $0x38] sm:$0xff] %vm550, %v865
    %916 = vst.msk [vmem:[#allocation3 + $0x48] sm:$0xff] %vm550, %v867
    %917 = vst.msk [vmem:[#allocation3 + $0x58] sm:$0xff] %vm550, %v869
    %918 = vst.msk [vmem:[#allocation3 + $0x68] sm:$0xff] %vm550, %v871
    %919 = vst.msk [vmem:[#allocation3 + $0x78] sm:$0xff] %vm550, %v873
    %920 = vst.msk [vmem:[#allocation3 + $0x88] sm:$0xff] %vm550, %v875
    %921 = vst.msk [vmem:[#allocation3 + $0x98] sm:$0xff] %vm550, %v877
    %922 = vst.msk [vmem:[#allocation3 + $0xa8] sm:$0xff] %vm550, %v879
    %923 = vst.msk [vmem:[#allocation3 + $0xb8] sm:$0xff] %vm550, %v881
    %924 = vst.msk [vmem:[#allocation3 + $0xc8] sm:$0xff] %vm550, %v883
    %925 = vst.msk [vmem:[#allocation3 + $0xd8] sm:$0xff] %vm550, %v885
    %926 = vst.msk [vmem:[#allocation3 + $0xe8] sm:$0xff] %vm550, %v887
    %927 = vst.msk [vmem:[#allocation3 + $0xf8] sm:$0xff] %vm550, %v889
    %928 = vst.msk [vmem:[#allocation3 + $0x108] sm:$0xff] %vm550, %v891
    %929 = vst.msk [vmem:[#allocation3 + $0x118] sm:$0xff] %vm550, %v893
    %v930 = vld [vmem:[#allocation2 + $0x38] sm:$0xff]
    %v931 = vld [vmem:[#allocation2 + $0x40] sm:$0xff]
    %v932 = vld [vmem:[#allocation2 + $0x48] sm:$0xff]
    %v933 = vld [vmem:[#allocation2 + $0x50] sm:$0xff]
    %v934 = vld [vmem:[#allocation2 + $0x58] sm:$0xff]
    %v935 = vld [vmem:[#allocation2 + $0x60] sm:$0xff]
    %v936 = vld [vmem:[#allocation2 + $0x68] sm:$0xff]
    %v937 = vld [vmem:[#allocation2 + $0x70] sm:$0xff]
    %v938 = vld [vmem:[#allocation2 + $0x78] sm:$0xff]
    %v939 = vld [vmem:[#allocation2 + $0x80] sm:$0xff]
    %v940 = vld [vmem:[#allocation2 + $0x88] sm:$0xff]
    %v941 = vld [vmem:[#allocation2 + $0x90] sm:$0xff]
    %v942 = vld [vmem:[#allocation2 + $0x98] sm:$0xff]
    %v943 = vld [vmem:[#allocation2 + $0xa0] sm:$0xff]
    %v944 = vld [vmem:[#allocation2 + $0xa8] sm:$0xff]
    %v945 = vld [vmem:[#allocation2 + $0xb0] sm:$0xff]
    %v946 = vld [vmem:[#allocation2 + $0xb8] sm:$0xff]
    %v947 = vld [vmem:[#allocation2 + $0xc0] sm:$0xff]
    %966 = vrot.lane.b32.xlu0 %v930, 96
    %v967 = vpop.permute.xlu0 %966
    %968 = vrot.lane.b32.xlu0 %v931, 96
    %v969 = vpop.permute.xlu0 %968
    %970 = vrot.lane.b32.xlu0 %v932, 96
    %v971 = vpop.permute.xlu0 %970
    %972 = vrot.lane.b32.xlu0 %v933, 96
    %v973 = vpop.permute.xlu0 %972
    %974 = vrot.lane.b32.xlu0 %v934, 96
    %v975 = vpop.permute.xlu0 %974
    %976 = vrot.lane.b32.xlu0 %v935, 96
    %v977 = vpop.permute.xlu0 %976
    %978 = vrot.lane.b32.xlu0 %v936, 96
    %v979 = vpop.permute.xlu0 %978
    %980 = vrot.lane.b32.xlu0 %v937, 96
    %v981 = vpop.permute.xlu0 %980
    %982 = vrot.lane.b32.xlu0 %v938, 96
    %v983 = vpop.permute.xlu0 %982
    %984 = vrot.lane.b32.xlu0 %v939, 96
    %v985 = vpop.permute.xlu0 %984
    %986 = vrot.lane.b32.xlu0 %v940, 96
    %v987 = vpop.permute.xlu0 %986
    %988 = vrot.lane.b32.xlu0 %v941, 96
    %v989 = vpop.permute.xlu0 %988
    %990 = vrot.lane.b32.xlu0 %v942, 96
    %v991 = vpop.permute.xlu0 %990
    %992 = vrot.lane.b32.xlu0 %v943, 96
    %v993 = vpop.permute.xlu0 %992
    %994 = vrot.lane.b32.xlu0 %v944, 96
    %v995 = vpop.permute.xlu0 %994
    %996 = vrot.lane.b32.xlu0 %v945, 96
    %v997 = vpop.permute.xlu0 %996
    %998 = vrot.lane.b32.xlu0 %v946, 96
    %v999 = vpop.permute.xlu0 %998
    %1000 = vrot.lane.b32.xlu0 %v947, 96
    %v1001 = vpop.permute.xlu0 %1000
    %1020 = vst.msk [vmem:[#allocation3 + $0x8] sm:$0xff] %vm659, %v967
    %1021 = vst.msk [vmem:[#allocation3 + $0x18] sm:$0xff] %vm659, %v969
    %1022 = vst.msk [vmem:[#allocation3 + $0x28] sm:$0xff] %vm659, %v971
    %1023 = vst.msk [vmem:[#allocation3 + $0x38] sm:$0xff] %vm659, %v973
    %1024 = vst.msk [vmem:[#allocation3 + $0x48] sm:$0xff] %vm659, %v975
    %1025 = vst.msk [vmem:[#allocation3 + $0x58] sm:$0xff] %vm659, %v977
    %1026 = vst.msk [vmem:[#allocation3 + $0x68] sm:$0xff] %vm659, %v979
    %1027 = vst.msk [vmem:[#allocation3 + $0x78] sm:$0xff] %vm659, %v981
    %1028 = vst.msk [vmem:[#allocation3 + $0x88] sm:$0xff] %vm659, %v983
    %1029 = vst.msk [vmem:[#allocation3 + $0x98] sm:$0xff] %vm659, %v985
    %1030 = vst.msk [vmem:[#allocation3 + $0xa8] sm:$0xff] %vm659, %v987
    %1031 = vst.msk [vmem:[#allocation3 + $0xb8] sm:$0xff] %vm659, %v989
    %1032 = vst.msk [vmem:[#allocation3 + $0xc8] sm:$0xff] %vm659, %v991
    %1033 = vst.msk [vmem:[#allocation3 + $0xd8] sm:$0xff] %vm659, %v993
    %1034 = vst.msk [vmem:[#allocation3 + $0xe8] sm:$0xff] %vm659, %v995
    %1035 = vst.msk [vmem:[#allocation3 + $0xf8] sm:$0xff] %vm659, %v997
    %1036 = vst.msk [vmem:[#allocation3 + $0x108] sm:$0xff] %vm659, %v999
    %1037 = vst.msk [vmem:[#allocation3 + $0x118] sm:$0xff] %vm659, %v1001
    %v1038 = vld [vmem:[#allocation3] sm:$0xff]
    %v1039 = vld [vmem:[#allocation3 + $0x8] sm:$0xff]
    %v1040 = vld [vmem:[#allocation3 + $0x10] sm:$0xff]
    %v1041 = vld [vmem:[#allocation3 + $0x18] sm:$0xff]
    %v1042 = vld [vmem:[#allocation3 + $0x20] sm:$0xff]
    %v1043 = vld [vmem:[#allocation3 + $0x28] sm:$0xff]
    %v1044 = vld [vmem:[#allocation3 + $0x30] sm:$0xff]
    %v1045 = vld [vmem:[#allocation3 + $0x38] sm:$0xff]
    %v1046 = vld [vmem:[#allocation3 + $0x40] sm:$0xff]
    %v1047 = vld [vmem:[#allocation3 + $0x48] sm:$0xff]
    %v1048 = vld [vmem:[#allocation3 + $0x50] sm:$0xff]
    %v1049 = vld [vmem:[#allocation3 + $0x58] sm:$0xff]
    %v1050 = vld [vmem:[#allocation3 + $0x60] sm:$0xff]
    %v1051 = vld [vmem:[#allocation3 + $0x68] sm:$0xff]
    %v1052 = vld [vmem:[#allocation3 + $0x70] sm:$0xff]
    %v1053 = vld [vmem:[#allocation3 + $0x78] sm:$0xff]
    %v1054 = vld [vmem:[#allocation3 + $0x80] sm:$0xff]
    %v1055 = vld [vmem:[#allocation3 + $0x88] sm:$0xff]
    %v1056 = vld [vmem:[#allocation3 + $0x90] sm:$0xff]
    %v1057 = vld [vmem:[#allocation3 + $0x98] sm:$0xff]
    %v1058 = vld [vmem:[#allocation3 + $0xa0] sm:$0xff]
    %v1059 = vld [vmem:[#allocation3 + $0xa8] sm:$0xff]
    %v1060 = vld [vmem:[#allocation3 + $0xb0] sm:$0xff]
    %v1061 = vld [vmem:[#allocation3 + $0xb8] sm:$0xff]
    %v1062 = vld [vmem:[#allocation3 + $0xc0] sm:$0xff]
    %v1063 = vld [vmem:[#allocation3 + $0xc8] sm:$0xff]
    %v1064 = vld [vmem:[#allocation3 + $0xd0] sm:$0xff]
    %v1065 = vld [vmem:[#allocation3 + $0xd8] sm:$0xff]
    %v1066 = vld [vmem:[#allocation3 + $0xe0] sm:$0xff]
    %v1067 = vld [vmem:[#allocation3 + $0xe8] sm:$0xff]
    %v1068 = vld [vmem:[#allocation3 + $0xf0] sm:$0xff]
    %v1069 = vld [vmem:[#allocation3 + $0xf8] sm:$0xff]
    %v1070 = vld [vmem:[#allocation3 + $0x100] sm:$0xff]
    %v1071 = vld [vmem:[#allocation3 + $0x108] sm:$0xff]
    %v1072 = vld [vmem:[#allocation3 + $0x110] sm:$0xff]
    %v1073 = vld [vmem:[#allocation3 + $0x118] sm:$0xff]
    %v1074 = vld [vmem:[%s3] sm:$0xff]
    %v1075 = vld [vmem:[%s3 + $0x8] sm:$0xff]
    %v1076 = vld [vmem:[%s3 + $0x10] sm:$0xff]
    %v1077 = vld [vmem:[%s3 + $0x18] sm:$0xff]
    %v1078 = vld [vmem:[%s3 + $0x20] sm:$0xff]
    %v1079 = vld [vmem:[%s3 + $0x28] sm:$0xff]
    %v1080 = vld [vmem:[%s3 + $0x30] sm:$0xff]
    %v1081 = vld [vmem:[%s3 + $0x38] sm:$0xff]
    %v1082 = vld [vmem:[%s3 + $0x40] sm:$0xff]
    %v1083 = vld [vmem:[%s3 + $0x48] sm:$0xff]
    %v1084 = vld [vmem:[%s3 + $0x50] sm:$0xff]
    %v1085 = vld [vmem:[%s3 + $0x58] sm:$0xff]
    %v1086 = vld [vmem:[%s3 + $0x60] sm:$0xff]
    %v1087 = vld [vmem:[%s3 + $0x68] sm:$0xff]
    %v1088 = vld [vmem:[%s3 + $0x70] sm:$0xff]
    %v1089 = vld [vmem:[%s3 + $0x78] sm:$0xff]
    %v1090 = vld [vmem:[%s3 + $0x80] sm:$0xff]
    %v1091 = vld [vmem:[%s3 + $0x88] sm:$0xff]
    %v1092 = vld [vmem:[%s3 + $0x90] sm:$0xff]
    %v1093 = vld [vmem:[%s3 + $0x98] sm:$0xff]
    %v1094 = vld [vmem:[%s3 + $0xa0] sm:$0xff]
    %v1095 = vld [vmem:[%s3 + $0xa8] sm:$0xff]
    %v1096 = vld [vmem:[%s3 + $0xb0] sm:$0xff]
    %v1097 = vld [vmem:[%s3 + $0xb8] sm:$0xff]
    %v1098 = vld [vmem:[%s3 + $0xc0] sm:$0xff]
    %v1099 = vld [vmem:[%s3 + $0xc8] sm:$0xff]
    %v1100 = vld [vmem:[%s3 + $0xd0] sm:$0xff]
    %v1101 = vld [vmem:[%s3 + $0xd8] sm:$0xff]
    %v1102 = vld [vmem:[%s3 + $0xe0] sm:$0xff]
    %v1103 = vld [vmem:[%s3 + $0xe8] sm:$0xff]
    %v1104 = vld [vmem:[%s3 + $0xf0] sm:$0xff]
    %v1105 = vld [vmem:[%s3 + $0xf8] sm:$0xff]
    %v1106 = vld [vmem:[%s4] sm:$0x1]
    %v1108 = vlaneseq
    %v1109 = vshrl.u32 %v1108, 7
    %v1110 = vsub.s32 0, %v1109
    %v1111 = vrot.slane %v1106, %v1110
    %1113 = vmatprep.subr.mxu0 0.0
    %1114 = vmatpush1.msra.mxu0 %v1074
    %1115 = vmatprep.subr.mxu0 0.0
    %1116 = vmatpush1.msra.mxu0 %v1075
    %1117 = vmatprep.subr.mxu0 0.0
    %1118 = vmatpush1.msra.mxu0 %v1076
    %1119 = vmatprep.subr.mxu0 0.0
    %1120 = vmatpush1.msra.mxu0 %v1077
    %1121 = vmatprep.subr.mxu0 0.0
    %1122 = vmatpush1.msra.mxu0 %v1078
    %1123 = vmatprep.subr.mxu0 0.0
    %1124 = vmatpush1.msra.mxu0 %v1079
    %1125 = vmatprep.subr.mxu0 0.0
    %1126 = vmatpush1.msra.mxu0 %v1080
    %1127 = vmatprep.subr.mxu0 0.0
    %1128 = vmatpush1.msra.mxu0 %v1081
    %1129 = vmatprep.subr.mxu0 0.0
    %1130 = vmatpush1.msra.mxu0 %v1082
    %1131 = vmatprep.subr.mxu0 0.0
    %1132 = vmatpush1.msra.mxu0 %v1083
    %1133 = vmatprep.subr.mxu0 0.0
    %1134 = vmatpush1.msra.mxu0 %v1084
    %1135 = vmatprep.subr.mxu0 0.0
    %1136 = vmatpush1.msra.mxu0 %v1085
    %1137 = vmatprep.subr.mxu0 0.0
    %1138 = vmatpush1.msra.mxu0 %v1086
    %1139 = vmatprep.subr.mxu0 0.0
    %1140 = vmatpush1.msra.mxu0 %v1087
    %1141 = vmatprep.subr.mxu0 0.0
    %1142 = vmatpush1.msra.mxu0 %v1088
    %1143 = vmatprep.subr.mxu0 0.0
    %1144 = vmatpush1.msra.mxu0 %v1089
    %1145 = vmatprep.subr.mxu0 0.0
    %1146 = vmatpush1.msra.mxu0 %v1090
    %1147 = vmatprep.subr.mxu0 0.0
    %1148 = vmatpush1.msra.mxu0 %v1091
    %1149 = vmatprep.subr.mxu0 0.0
    %1150 = vmatpush1.msra.mxu0 %v1092
    %1151 = vmatprep.subr.mxu0 0.0
    %1152 = vmatpush1.msra.mxu0 %v1093
    %1153 = vmatprep.subr.mxu0 0.0
    %1154 = vmatpush1.msra.mxu0 %v1094
    %1155 = vmatprep.subr.mxu0 0.0
    %1156 = vmatpush1.msra.mxu0 %v1095
    %1157 = vmatprep.subr.mxu0 0.0
    %1158 = vmatpush1.msra.mxu0 %v1096
    %1159 = vmatprep.subr.mxu0 0.0
    %1160 = vmatpush1.msra.mxu0 %v1097
    %1161 = vmatprep.subr.mxu0 0.0
    %1162 = vmatpush1.msra.mxu0 %v1098
    %1163 = vmatprep.subr.mxu0 0.0
    %1164 = vmatpush1.msra.mxu0 %v1099
    %1165 = vmatprep.subr.mxu0 0.0
    %1166 = vmatpush1.msra.mxu0 %v1100
    %1167 = vmatprep.subr.mxu0 0.0
    %1168 = vmatpush1.msra.mxu0 %v1101
    %1169 = vmatprep.subr.mxu0 0.0
    %1170 = vmatpush1.msra.mxu0 %v1102
    %1171 = vmatprep.subr.mxu0 0.0
    %1172 = vmatpush1.msra.mxu0 %v1103
    %1173 = vmatprep.subr.mxu0 0.0
    %1174 = vmatpush1.msra.mxu0 %v1104
    %1175 = vmatprep.subr.mxu0 0.0
    %1176 = vmatpush1.msra.mxu0 %v1105
    %1177 = vmatprep.mubr.f32.mxu0 %v1039
    %1178 = vmatmul.mubr.f32.gmra.mrb[0].mxu0 %v1038
    %v1179 = vpop.f32.mrb[0].mxu0
    %v1180 = vadd.f32 %v1111, %v1179
    %v1181 = vpop.f32.mrb[0].mxu0
    %1182 = vmatprep.mubr.f32.mxu0 %v1041
    %1183 = vmatmul.mubr.f32.gmra.mrb[0].mxu0 %v1040
    %v1184 = vpop.f32.mrb[0].mxu0
    %v1185 = vadd.f32 %v1111, %v1184
    %v1186 = vpop.f32.mrb[0].mxu0
    %1187 = vmatprep.mubr.f32.mxu0 %v1043
    %1188 = vmatmul.mubr.f32.gmra.mrb[0].mxu0 %v1042
    %v1189 = vpop.f32.mrb[0].mxu0
    %v1190 = vadd.f32 %v1111, %v1189
    %v1191 = vpop.f32.mrb[0].mxu0
    %1192 = vmatprep.mubr.f32.mxu0 %v1045
    %1193 = vmatmul.mubr.f32.gmra.mrb[0].mxu0 %v1044
    %v1194 = vpop.f32.mrb[0].mxu0
    %v1195 = vadd.f32 %v1111, %v1194
    %v1196 = vpop.f32.mrb[0].mxu0
    %1197 = vmatprep.mubr.f32.mxu0 %v1047
    %1198 = vmatmul.mubr.f32.gmra.mrb[0].mxu0 %v1046
    %v1199 = vpop.f32.mrb[0].mxu0
    %v1200 = vadd.f32 %v1111, %v1199
    %v1201 = vpop.f32.mrb[0].mxu0
    %1202 = vmatprep.mubr.f32.mxu0 %v1049
    %1203 = vmatmul.mubr.f32.gmra.mrb[0].mxu0 %v1048
    %v1204 = vpop.f32.mrb[0].mxu0
    %v1205 = vadd.f32 %v1111, %v1204
    %v1206 = vpop.f32.mrb[0].mxu0
    %1207 = vmatprep.mubr.f32.mxu0 %v1051
    %1208 = vmatmul.mubr.f32.gmra.mrb[0].mxu0 %v1050
    %v1209 = vpop.f32.mrb[0].mxu0
    %v1210 = vadd.f32 %v1111, %v1209
    %v1211 = vpop.f32.mrb[0].mxu0
    %1212 = vmatprep.mubr.f32.mxu0 %v1053
    %1213 = vmatmul.mubr.f32.gmra.mrb[0].mxu0 %v1052
    %v1214 = vpop.f32.mrb[0].mxu0
    %v1215 = vadd.f32 %v1111, %v1214
    %v1216 = vpop.f32.mrb[0].mxu0
    %1217 = vmatprep.mubr.f32.mxu0 %v1055
    %1218 = vmatmul.mubr.f32.gmra.mrb[0].mxu0 %v1054
    %v1219 = vpop.f32.mrb[0].mxu0
    %v1220 = vadd.f32 %v1111, %v1219
    %v1221 = vpop.f32.mrb[0].mxu0
    %1222 = vmatprep.mubr.f32.mxu0 %v1057
    %1223 = vmatmul.mubr.f32.gmra.mrb[0].mxu0 %v1056
    %v1224 = vpop.f32.mrb[0].mxu0
    %v1225 = vadd.f32 %v1111, %v1224
    %v1226 = vpop.f32.mrb[0].mxu0
    %1227 = vmatprep.mubr.f32.mxu0 %v1059
    %1228 = vmatmul.mubr.f32.gmra.mrb[0].mxu0 %v1058
    %v1229 = vpop.f32.mrb[0].mxu0
    %v1230 = vadd.f32 %v1111, %v1229
    %v1231 = vpop.f32.mrb[0].mxu0
    %1232 = vmatprep.mubr.f32.mxu0 %v1061
    %1233 = vmatmul.mubr.f32.gmra.mrb[0].mxu0 %v1060
    %v1234 = vpop.f32.mrb[0].mxu0
    %v1235 = vadd.f32 %v1111, %v1234
    %v1236 = vpop.f32.mrb[0].mxu0
    %1237 = vmatprep.mubr.f32.mxu0 %v1063
    %1238 = vmatmul.mubr.f32.gmra.mrb[0].mxu0 %v1062
    %v1239 = vpop.f32.mrb[0].mxu0
    %v1240 = vadd.f32 %v1111, %v1239
    %v1241 = vpop.f32.mrb[0].mxu0
    %1242 = vmatprep.mubr.f32.mxu0 %v1065
    %1243 = vmatmul.mubr.f32.gmra.mrb[0].mxu0 %v1064
    %v1244 = vpop.f32.mrb[0].mxu0
    %v1245 = vadd.f32 %v1111, %v1244
    %v1246 = vpop.f32.mrb[0].mxu0
    %1247 = vmatprep.mubr.f32.mxu0 %v1067
    %1248 = vmatmul.mubr.f32.gmra.mrb[0].mxu0 %v1066
    %v1249 = vpop.f32.mrb[0].mxu0
    %v1250 = vadd.f32 %v1111, %v1249
    %v1251 = vpop.f32.mrb[0].mxu0
    %1252 = vmatprep.mubr.f32.mxu0 %v1069
    %1253 = vmatmul.mubr.f32.gmra.mrb[0].mxu0 %v1068
    %v1254 = vpop.f32.mrb[0].mxu0
    %v1255 = vadd.f32 %v1111, %v1254
    %v1256 = vpop.f32.mrb[0].mxu0
    %1257 = vmatprep.mubr.f32.mxu0 %v1071
    %1258 = vmatmul.mubr.f32.gmra.mrb[0].mxu0 %v1070
    %v1259 = vpop.f32.mrb[0].mxu0
    %v1260 = vadd.f32 %v1111, %v1259
    %v1261 = vpop.f32.mrb[0].mxu0
    %1262 = vmatprep.mubr.f32.mxu0 %v1073
    %1263 = vmatmul.mubr.f32.gmra.mrb[0].mxu0 %v1072
    %v1264 = vpop.f32.mrb[0].mxu0
    %v1265 = vadd.f32 %v1111, %v1264
    %v1266 = vpop.f32.mrb[0].mxu0
    %1267 = vdwg.mxu0
    %v1268 = vmax.f32 %v1180, 0.0
    %v1269 = vmax.f32 %v1185, 0.0
    %v1270 = vmax.f32 %v1190, 0.0
    %v1271 = vmax.f32 %v1195, 0.0
    %v1272 = vmax.f32 %v1200, 0.0
    %v1273 = vmax.f32 %v1205, 0.0
    %v1274 = vmax.f32 %v1210, 0.0
    %v1275 = vmax.f32 %v1215, 0.0
    %v1276 = vmax.f32 %v1220, 0.0
    %v1277 = vmax.f32 %v1225, 0.0
    %v1278 = vmax.f32 %v1230, 0.0
    %v1279 = vmax.f32 %v1235, 0.0
    %v1280 = vmax.f32 %v1240, 0.0
    %v1281 = vmax.f32 %v1245, 0.0
    %v1282 = vmax.f32 %v1250, 0.0
    %v1283 = vmax.f32 %v1255, 0.0
    %v1284 = vmax.f32 %v1260, 0.0
    %v1285 = vmax.f32 %v1265, 0.0
    %v1286 = vld [vmem:[%s5] sm:$0xff]
    %v1287 = vld [vmem:[%s5 + $0x8] sm:$0xff]
    %v1288 = vld [vmem:[%s5 + $0x10] sm:$0xff]
    %v1289 = vld [vmem:[%s5 + $0x18] sm:$0xff]
    %v1290 = vld [vmem:[%s5 + $0x20] sm:$0xff]
    %v1291 = vld [vmem:[%s5 + $0x28] sm:$0xff]
    %v1292 = vld [vmem:[%s5 + $0x30] sm:$0xff]
    %v1293 = vld [vmem:[%s5 + $0x38] sm:$0xff]
    %v1294 = vld [vmem:[%s7] sm:$0x1]
    %v1296 = vlaneseq
    %v1297 = vshrl.u32 %v1296, 7
    %v1298 = vsub.s32 0, %v1297
    %v1299 = vrot.slane %v1294, %v1298
    %vm1301 = vcmask 523264
    %v1303 = vsel %vm1301, %v1268, 0
    %v1306 = vsel %vm1301, %v1269, 0
    %v1309 = vsel %vm1301, %v1270, 0
    %v1312 = vsel %vm1301, %v1271, 0
    %v1315 = vsel %vm1301, %v1272, 0
    %v1318 = vsel %vm1301, %v1273, 0
    %v1321 = vsel %vm1301, %v1274, 0
    %v1324 = vsel %vm1301, %v1275, 0
    %v1327 = vsel %vm1301, %v1276, 0
    %v1330 = vsel %vm1301, %v1277, 0
    %v1333 = vsel %vm1301, %v1278, 0
    %v1336 = vsel %vm1301, %v1279, 0
    %v1339 = vsel %vm1301, %v1280, 0
    %v1342 = vsel %vm1301, %v1281, 0
    %v1345 = vsel %vm1301, %v1282, 0
    %v1348 = vsel %vm1301, %v1283, 0
    %v1351 = vsel %vm1301, %v1284, 0
    %v1354 = vsel %vm1301, %v1285, 0
    %1356 = vmatprep.subr.mxu0 0.0
    %1357 = vmatpush1.msra.mxu0 %v1286
    %1358 = vmatprep.subr.mxu0 0.0
    %1359 = vmatpush1.msra.mxu0 %v1287
    %1360 = vmatprep.subr.mxu0 0.0
    %1361 = vmatpush1.msra.mxu0 %v1288
    %1362 = vmatprep.subr.mxu0 0.0
    %1363 = vmatpush1.msra.mxu0 %v1289
    %1364 = vmatprep.subr.mxu0 0.0
    %1365 = vmatpush1.msra.mxu0 %v1290
    %1366 = vmatprep.subr.mxu0 0.0
    %1367 = vmatpush1.msra.mxu0 %v1291
    %1368 = vmatprep.subr.mxu0 0.0
    %1369 = vmatpush1.msra.mxu0 %v1292
    %1370 = vmatprep.subr.mxu0 0.0
    %1371 = vmatpush1.msra.mxu0 %v1293
    %1372 = vmatprep.subr.mxu0 0.0
    %1373 = vmatpush1.msra.mxu0 0.0
    %1374 = vmatprep.subr.mxu0 0.0
    %1375 = vmatpush1.msra.mxu0 0.0
    %1376 = vmatprep.subr.mxu0 0.0
    %1377 = vmatpush1.msra.mxu0 0.0
    %1378 = vmatprep.subr.mxu0 0.0
    %1379 = vmatpush1.msra.mxu0 0.0
    %1380 = vmatprep.subr.mxu0 0.0
    %1381 = vmatpush1.msra.mxu0 0.0
    %1382 = vmatprep.subr.mxu0 0.0
    %1383 = vmatpush1.msra.mxu0 0.0
    %1384 = vmatprep.subr.mxu0 0.0
    %1385 = vmatpush1.msra.mxu0 0.0
    %1386 = vmatprep.subr.mxu0 0.0
    %1387 = vmatpush1.msra.mxu0 0.0
    %1388 = vmatprep.subr.mxu0 0.0
    %1389 = vmatpush1.msra.mxu0 0.0
    %1390 = vmatprep.subr.mxu0 0.0
    %1391 = vmatpush1.msra.mxu0 0.0
    %1392 = vmatprep.subr.mxu0 0.0
    %1393 = vmatpush1.msra.mxu0 0.0
    %1394 = vmatprep.subr.mxu0 0.0
    %1395 = vmatpush1.msra.mxu0 0.0
    %1396 = vmatprep.subr.mxu0 0.0
    %1397 = vmatpush1.msra.mxu0 0.0
    %1398 = vmatprep.subr.mxu0 0.0
    %1399 = vmatpush1.msra.mxu0 0.0
    %1400 = vmatprep.subr.mxu0 0.0
    %1401 = vmatpush1.msra.mxu0 0.0
    %1402 = vmatprep.subr.mxu0 0.0
    %1403 = vmatpush1.msra.mxu0 0.0
    %1404 = vmatprep.subr.mxu0 0.0
    %1405 = vmatpush1.msra.mxu0 0.0
    %1406 = vmatprep.subr.mxu0 0.0
    %1407 = vmatpush1.msra.mxu0 0.0
    %1408 = vmatprep.subr.mxu0 0.0
    %1409 = vmatpush1.msra.mxu0 0.0
    %1410 = vmatprep.subr.mxu0 0.0
    %1411 = vmatpush1.msra.mxu0 0.0
    %1412 = vmatprep.subr.mxu0 0.0
    %1413 = vmatpush1.msra.mxu0 0.0
    %1414 = vmatprep.subr.mxu0 0.0
    %1415 = vmatpush1.msra.mxu0 0.0
    %1416 = vmatprep.subr.mxu0 0.0
    %1417 = vmatpush1.msra.mxu0 0.0
    %1418 = vmatprep.subr.mxu0 0.0
    %1419 = vmatpush1.msra.mxu0 0.0
    %1420 = vmatprep.mubr.f32.mxu0 0.0
    %1421 = vmatmul.mubr.f32.gmra.mrb[0].mxu0 %v1303
    %v1422 = vpop.f32.mrb[0].mxu0
    %v1423 = vadd.f32 %v1299, %v1422
    %v1424 = vpop.f32.mrb[0].mxu0
    %1425 = vmatprep.mubr.f32.mxu0 0.0
    %1426 = vmatmul.mubr.f32.gmra.mrb[0].mxu0 %v1306
    %v1427 = vpop.f32.mrb[0].mxu0
    %v1428 = vadd.f32 %v1299, %v1427
    %v1429 = vpop.f32.mrb[0].mxu0
    %1430 = vmatprep.mubr.f32.mxu0 0.0
    %1431 = vmatmul.mubr.f32.gmra.mrb[0].mxu0 %v1309
    %v1432 = vpop.f32.mrb[0].mxu0
    %v1433 = vadd.f32 %v1299, %v1432
    %v1434 = vpop.f32.mrb[0].mxu0
    %1435 = vmatprep.mubr.f32.mxu0 0.0
    %1436 = vmatmul.mubr.f32.gmra.mrb[0].mxu0 %v1312
    %v1437 = vpop.f32.mrb[0].mxu0
    %v1438 = vadd.f32 %v1299, %v1437
    %v1439 = vpop.f32.mrb[0].mxu0
    %1440 = vmatprep.mubr.f32.mxu0 0.0
    %1441 = vmatmul.mubr.f32.gmra.mrb[0].mxu0 %v1315
    %v1442 = vpop.f32.mrb[0].mxu0
    %v1443 = vadd.f32 %v1299, %v1442
    %v1444 = vpop.f32.mrb[0].mxu0
    %1445 = vmatprep.mubr.f32.mxu0 0.0
    %1446 = vmatmul.mubr.f32.gmra.mrb[0].mxu0 %v1318
    %v1447 = vpop.f32.mrb[0].mxu0
    %v1448 = vadd.f32 %v1299, %v1447
    %v1449 = vpop.f32.mrb[0].mxu0
    %1450 = vmatprep.mubr.f32.mxu0 0.0
    %1451 = vmatmul.mubr.f32.gmra.mrb[0].mxu0 %v1321
    %v1452 = vpop.f32.mrb[0].mxu0
    %v1453 = vadd.f32 %v1299, %v1452
    %v1454 = vpop.f32.mrb[0].mxu0
    %1455 = vmatprep.mubr.f32.mxu0 0.0
    %1456 = vmatmul.mubr.f32.gmra.mrb[0].mxu0 %v1324
    %v1457 = vpop.f32.mrb[0].mxu0
    %v1458 = vadd.f32 %v1299, %v1457
    %v1459 = vpop.f32.mrb[0].mxu0
    %1460 = vmatprep.mubr.f32.mxu0 0.0
    %1461 = vmatmul.mubr.f32.gmra.mrb[0].mxu0 %v1327
    %v1462 = vpop.f32.mrb[0].mxu0
    %v1463 = vadd.f32 %v1299, %v1462
    %v1464 = vpop.f32.mrb[0].mxu0
    %1465 = vmatprep.mubr.f32.mxu0 0.0
    %1466 = vmatmul.mubr.f32.gmra.mrb[0].mxu0 %v1330
    %v1467 = vpop.f32.mrb[0].mxu0
    %v1468 = vadd.f32 %v1299, %v1467
    %v1469 = vpop.f32.mrb[0].mxu0
    %1470 = vmatprep.mubr.f32.mxu0 0.0
    %1471 = vmatmul.mubr.f32.gmra.mrb[0].mxu0 %v1333
    %v1472 = vpop.f32.mrb[0].mxu0
    %v1473 = vadd.f32 %v1299, %v1472
    %v1474 = vpop.f32.mrb[0].mxu0
    %1475 = vmatprep.mubr.f32.mxu0 0.0
    %1476 = vmatmul.mubr.f32.gmra.mrb[0].mxu0 %v1336
    %v1477 = vpop.f32.mrb[0].mxu0
    %v1478 = vadd.f32 %v1299, %v1477
    %v1479 = vpop.f32.mrb[0].mxu0
    %1480 = vmatprep.mubr.f32.mxu0 0.0
    %1481 = vmatmul.mubr.f32.gmra.mrb[0].mxu0 %v1339
    %v1482 = vpop.f32.mrb[0].mxu0
    %v1483 = vadd.f32 %v1299, %v1482
    %v1484 = vpop.f32.mrb[0].mxu0
    %1485 = vmatprep.mubr.f32.mxu0 0.0
    %1486 = vmatmul.mubr.f32.gmra.mrb[0].mxu0 %v1342
    %v1487 = vpop.f32.mrb[0].mxu0
    %v1488 = vadd.f32 %v1299, %v1487
    %v1489 = vpop.f32.mrb[0].mxu0
    %1490 = vmatprep.mubr.f32.mxu0 0.0
    %1491 = vmatmul.mubr.f32.gmra.mrb[0].mxu0 %v1345
    %v1492 = vpop.f32.mrb[0].mxu0
    %v1493 = vadd.f32 %v1299, %v1492
    %v1494 = vpop.f32.mrb[0].mxu0
    %1495 = vmatprep.mubr.f32.mxu0 0.0
    %1496 = vmatmul.mubr.f32.gmra.mrb[0].mxu0 %v1348
    %v1497 = vpop.f32.mrb[0].mxu0
    %v1498 = vadd.f32 %v1299, %v1497
    %v1499 = vpop.f32.mrb[0].mxu0
    %1500 = vmatprep.mubr.f32.mxu0 0.0
    %1501 = vmatmul.mubr.f32.gmra.mrb[0].mxu0 %v1351
    %v1502 = vpop.f32.mrb[0].mxu0
    %v1503 = vadd.f32 %v1299, %v1502
    %v1504 = vpop.f32.mrb[0].mxu0
    %1505 = vmatprep.mubr.f32.mxu0 0.0
    %1506 = vmatmul.mubr.f32.gmra.mrb[0].mxu0 %v1354
    %v1507 = vpop.f32.mrb[0].mxu0
    %v1508 = vadd.f32 %v1299, %v1507
    %v1509 = vpop.f32.mrb[0].mxu0
    %1510 = vdwg.mxu0
    %v1511 = vld [vmem:[%s6] sm:$0xf]
    %v1512 = vld [vmem:[%s6 + $0x4] sm:$0xf]
    %v1513 = vld [vmem:[%s6 + $0x8] sm:$0xf]
    %v1514 = vld [vmem:[%s6 + $0xc] sm:$0xf]
    %v1519 = vunpack.c.l.b16 %v1511
    %v1520 = vunpack.c.l.b16 %v1512
    %v1521 = vunpack.c.l.b16 %v1513
    %v1522 = vunpack.c.l.b16 %v1514
    %v1523 = vpack.c.b16 %v1520, %v1519
    %v1524 = vpack.c.b16 %v1522, %v1521
    %v1528 = vsel %vm71, 0, 0
    %1530 = vmatprep.subr.bf16.mxu0 0
    %1531 = vmatpush1.bf16.msra.mxu0 %v1523
    %1532 = vmatprep.subr.bf16.mxu0 0
    %1533 = vmatpush1.bf16.msra.mxu0 %v1524
    %1534 = vmatprep.subr.bf16.mxu0 0
    %1535 = vmatpush1.bf16.msra.mxu0 0
    %1536 = vmatprep.subr.bf16.mxu0 0
    %1537 = vmatpush1.bf16.msra.mxu0 0
    %1538 = vmatprep.subr.bf16.mxu0 0
    %1539 = vmatpush1.bf16.msra.mxu0 0
    %1540 = vmatprep.subr.bf16.mxu0 0
    %1541 = vmatpush1.bf16.msra.mxu0 0
    %1542 = vmatprep.subr.bf16.mxu0 0
    %1543 = vmatpush1.bf16.msra.mxu0 0
    %1544 = vmatprep.subr.bf16.mxu0 0
    %1545 = vmatpush1.bf16.msra.mxu0 0
    %1546 = vmatprep.subr.bf16.mxu0 0
    %1547 = vmatpush1.bf16.msra.mxu0 0
    %1548 = vmatprep.subr.bf16.mxu0 0
    %1549 = vmatpush1.bf16.msra.mxu0 0
    %1550 = vmatprep.subr.bf16.mxu0 0
    %1551 = vmatpush1.bf16.msra.mxu0 0
    %1552 = vmatprep.subr.bf16.mxu0 0
    %1553 = vmatpush1.bf16.msra.mxu0 0
    %1554 = vmatprep.subr.bf16.mxu0 0
    %1555 = vmatpush1.bf16.msra.mxu0 0
    %1556 = vmatprep.subr.bf16.mxu0 0
    %1557 = vmatpush1.bf16.msra.mxu0 0
    %1558 = vmatprep.subr.bf16.mxu0 0
    %1559 = vmatpush1.bf16.msra.mxu0 0
    %1560 = vmatprep.subr.bf16.mxu0 0
    %1561 = vmatpush1.bf16.msra.mxu0 0
    %1562 = vmatprep.mubr.bf16.mxu0 0
    %1563 = vmatmul.mubr.bf16.gmra.mrb[0].mxu0 %v1528
    %v1564 = vpop.f32.mrb[0].mxu0
    %v1565 = vadd.f32 0.0, %v1564
    %v1566 = vpop.f32.mrb[0].mxu0
    %v1567 = vpop.f32.mrb[0].mxu0
    %v1568 = vpop.f32.mrb[0].mxu0
    %1569 = vdwg.mxu0
    %v1570 = vadd.f32 %v1423, %v1565
    %v1571 = vxor.u32 %v1570, 2147483648
    %v1572 = vmul.f32 %v1571, 1.442695
    %v1573 = vpow.pop %v1572
    %v1574 = vadd.f32 %v1573, 1.0
    %v1575 = vrcp.pop %v1574
    %v1576 = vmul.f32 1.0, %v1575
    %v1577 = vtanh.pop %v1570
    %v1578 = vmul.f32 %v1576, 0.0
    %1580 = vrot.lane.b32.xlu0 %v1577, 64
    %v1581 = vpop.permute.xlu0 %1580
    %v1583 = vmul.f32 %v1576, %v1581
    %1585 = vrot.lane.b32.xlu0 %v1583, 32
    %v1586 = vpop.permute.xlu0 %1585
    %v1588 = vadd.f32 %v1578, %v1586
    %v1589 = vtanh.pop %v1588
    %1591 = vrot.lane.b32.xlu0 %v1589, 64
    %v1592 = vpop.permute.xlu0 %1591
    %v1594 = vmul.f32 %v1576, %v1592
    %v1595 = vpack.c.bf16 %v1594, %v1594
    %1597 = vrot.lane.b32.xlu0 %v1595, 32
    %v1598 = vpop.permute.xlu0 %1597
    %v1600 = vsel %vm71, %v1598, 0
    %1602 = vmatprep.subr.bf16.mxu0 0
    %1603 = vmatpush1.bf16.msra.mxu0 %v1523
    %1604 = vmatprep.subr.bf16.mxu0 0
    %1605 = vmatpush1.bf16.msra.mxu0 %v1524
    %1606 = vmatprep.subr.bf16.mxu0 0
    %1607 = vmatpush1.bf16.msra.mxu0 0
    %1608 = vmatprep.subr.bf16.mxu0 0
    %1609 = vmatpush1.bf16.msra.mxu0 0
    %1610 = vmatprep.subr.bf16.mxu0 0
    %1611 = vmatpush1.bf16.msra.mxu0 0
    %1612 = vmatprep.subr.bf16.mxu0 0
    %1613 = vmatpush1.bf16.msra.mxu0 0
    %1614 = vmatprep.subr.bf16.mxu0 0
    %1615 = vmatpush1.bf16.msra.mxu0 0
    %1616 = vmatprep.subr.bf16.mxu0 0
    %1617 = vmatpush1.bf16.msra.mxu0 0
    %1618 = vmatprep.subr.bf16.mxu0 0
    %1619 = vmatpush1.bf16.msra.mxu0 0
    %1620 = vmatprep.subr.bf16.mxu0 0
    %1621 = vmatpush1.bf16.msra.mxu0 0
    %1622 = vmatprep.subr.bf16.mxu0 0
    %1623 = vmatpush1.bf16.msra.mxu0 0
    %1624 = vmatprep.subr.bf16.mxu0 0
    %1625 = vmatpush1.bf16.msra.mxu0 0
    %1626 = vmatprep.subr.bf16.mxu0 0
    %1627 = vmatpush1.bf16.msra.mxu0 0
    %1628 = vmatprep.subr.bf16.mxu0 0
    %1629 = vmatpush1.bf16.msra.mxu0 0
    %1630 = vmatprep.subr.bf16.mxu0 0
    %1631 = vmatpush1.bf16.msra.mxu0 0
    %1632 = vmatprep.subr.bf16.mxu0 0
    %1633 = vmatpush1.bf16.msra.mxu0 0
    %1634 = vmatprep.mubr.bf16.mxu0 0
    %1635 = vmatmul.mubr.bf16.gmra.mrb[0].mxu0 %v1600
    %v1636 = vpop.f32.mrb[0].mxu0
    %v1637 = vadd.f32 0.0, %v1636
    %v1638 = vpop.f32.mrb[0].mxu0
    %v1639 = vpop.f32.mrb[0].mxu0
    %v1640 = vpop.f32.mrb[0].mxu0
    %1641 = vdwg.mxu0
    %v1642 = vadd.f32 %v1428, %v1637
    %v1643 = vxor.u32 %v1642, 2147483648
    %v1644 = vmul.f32 %v1643, 1.442695
    %v1645 = vpow.pop %v1644
    %v1646 = vadd.f32 %v1645, 1.0
    %v1647 = vrcp.pop %v1646
    %v1648 = vmul.f32 1.0, %v1647
    %v1649 = vtanh.pop %v1642
    %v1650 = vmul.f32 %v1648, %v1588
    %1652 = vrot.lane.b32.xlu0 %v1649, 64
    %v1653 = vpop.permute.xlu0 %1652
    %v1655 = vmul.f32 %v1648, %v1653
    %1657 = vrot.lane.b32.xlu0 %v1655, 32
    %v1658 = vpop.permute.xlu0 %1657
    %v1660 = vadd.f32 %v1650, %v1658
    %v1661 = vtanh.pop %v1660
    %1663 = vrot.lane.b32.xlu0 %v1661, 64
    %v1664 = vpop.permute.xlu0 %1663
    %v1666 = vmul.f32 %v1648, %v1664
    %v1667 = vpack.c.bf16 %v1666, %v1666
    %1669 = vrot.lane.b32.xlu0 %v1667, 32
    %v1670 = vpop.permute.xlu0 %1669
    %v1672 = vsel %vm71, %v1670, 0
    %1674 = vmatprep.subr.bf16.mxu0 0
    %1675 = vmatpush1.bf16.msra.mxu0 %v1523
    %1676 = vmatprep.subr.bf16.mxu0 0
    %1677 = vmatpush1.bf16.msra.mxu0 %v1524
    %1678 = vmatprep.subr.bf16.mxu0 0
    %1679 = vmatpush1.bf16.msra.mxu0 0
    %1680 = vmatprep.subr.bf16.mxu0 0
    %1681 = vmatpush1.bf16.msra.mxu0 0
    %1682 = vmatprep.subr.bf16.mxu0 0
    %1683 = vmatpush1.bf16.msra.mxu0 0
    %1684 = vmatprep.subr.bf16.mxu0 0
    %1685 = vmatpush1.bf16.msra.mxu0 0
    %1686 = vmatprep.subr.bf16.mxu0 0
    %1687 = vmatpush1.bf16.msra.mxu0 0
    %1688 = vmatprep.subr.bf16.mxu0 0
    %1689 = vmatpush1.bf16.msra.mxu0 0
    %1690 = vmatprep.subr.bf16.mxu0 0
    %1691 = vmatpush1.bf16.msra.mxu0 0
    %1692 = vmatprep.subr.bf16.mxu0 0
    %1693 = vmatpush1.bf16.msra.mxu0 0
    %1694 = vmatprep.subr.bf16.mxu0 0
    %1695 = vmatpush1.bf16.msra.mxu0 0
    %1696 = vmatprep.subr.bf16.mxu0 0
    %1697 = vmatpush1.bf16.msra.mxu0 0
    %1698 = vmatprep.subr.bf16.mxu0 0
    %1699 = vmatpush1.bf16.msra.mxu0 0
    %1700 = vmatprep.subr.bf16.mxu0 0
    %1701 = vmatpush1.bf16.msra.mxu0 0
    %1702 = vmatprep.subr.bf16.mxu0 0
    %1703 = vmatpush1.bf16.msra.mxu0 0
    %1704 = vmatprep.subr.bf16.mxu0 0
    %1705 = vmatpush1.bf16.msra.mxu0 0
    %1706 = vmatprep.mubr.bf16.mxu0 0
    %1707 = vmatmul.mubr.bf16.gmra.mrb[0].mxu0 %v1672
    %v1708 = vpop.f32.mrb[0].mxu0
    %v1709 = vadd.f32 0.0, %v1708
    %v1710 = vpop.f32.mrb[0].mxu0
    %v1711 = vpop.f32.mrb[0].mxu0
    %v1712 = vpop.f32.mrb[0].mxu0
    %1713 = vdwg.mxu0
    %v1714 = vadd.f32 %v1433, %v1709
    %v1715 = vxor.u32 %v1714, 2147483648
    %v1716 = vmul.f32 %v1715, 1.442695
    %v1717 = vpow.pop %v1716
    %v1718 = vadd.f32 %v1717, 1.0
    %v1719 = vrcp.pop %v1718
    %v1720 = vmul.f32 1.0, %v1719
    %v1721 = vtanh.pop %v1714
    %v1722 = vmul.f32 %v1720, %v1660
    %1724 = vrot.lane.b32.xlu0 %v1721, 64
    %v1725 = vpop.permute.xlu0 %1724
    %v1727 = vmul.f32 %v1720, %v1725
    %1729 = vrot.lane.b32.xlu0 %v1727, 32
    %v1730 = vpop.permute.xlu0 %1729
    %v1732 = vadd.f32 %v1722, %v1730
    %v1733 = vtanh.pop %v1732
    %1735 = vrot.lane.b32.xlu0 %v1733, 64
    %v1736 = vpop.permute.xlu0 %1735
    %v1738 = vmul.f32 %v1720, %v1736
    %v1739 = vpack.c.bf16 %v1738, %v1738
    %1741 = vrot.lane.b32.xlu0 %v1739, 32
    %v1742 = vpop.permute.xlu0 %1741
    %v1744 = vsel %vm71, %v1742, 0
    %1746 = vmatprep.subr.bf16.mxu0 0
    %1747 = vmatpush1.bf16.msra.mxu0 %v1523
    %1748 = vmatprep.subr.bf16.mxu0 0
    %1749 = vmatpush1.bf16.msra.mxu0 %v1524
    %1750 = vmatprep.subr.bf16.mxu0 0
    %1751 = vmatpush1.bf16.msra.mxu0 0
    %1752 = vmatprep.subr.bf16.mxu0 0
    %1753 = vmatpush1.bf16.msra.mxu0 0
    %1754 = vmatprep.subr.bf16.mxu0 0
    %1755 = vmatpush1.bf16.msra.mxu0 0
    %1756 = vmatprep.subr.bf16.mxu0 0
    %1757 = vmatpush1.bf16.msra.mxu0 0
    %1758 = vmatprep.subr.bf16.mxu0 0
    %1759 = vmatpush1.bf16.msra.mxu0 0
    %1760 = vmatprep.subr.bf16.mxu0 0
    %1761 = vmatpush1.bf16.msra.mxu0 0
    %1762 = vmatprep.subr.bf16.mxu0 0
    %1763 = vmatpush1.bf16.msra.mxu0 0
    %1764 = vmatprep.subr.bf16.mxu0 0
    %1765 = vmatpush1.bf16.msra.mxu0 0
    %1766 = vmatprep.subr.bf16.mxu0 0
    %1767 = vmatpush1.bf16.msra.mxu0 0
    %1768 = vmatprep.subr.bf16.mxu0 0
    %1769 = vmatpush1.bf16.msra.mxu0 0
    %1770 = vmatprep.subr.bf16.mxu0 0
    %1771 = vmatpush1.bf16.msra.mxu0 0
    %1772 = vmatprep.subr.bf16.mxu0 0
    %1773 = vmatpush1.bf16.msra.mxu0 0
    %1774 = vmatprep.subr.bf16.mxu0 0
    %1775 = vmatpush1.bf16.msra.mxu0 0
    %1776 = vmatprep.subr.bf16.mxu0 0
    %1777 = vmatpush1.bf16.msra.mxu0 0
    %1778 = vmatprep.mubr.bf16.mxu0 0
    %1779 = vmatmul.mubr.bf16.gmra.mrb[0].mxu0 %v1744
    %v1780 = vpop.f32.mrb[0].mxu0
    %v1781 = vadd.f32 0.0, %v1780
    %v1782 = vpop.f32.mrb[0].mxu0
    %v1783 = vpop.f32.mrb[0].mxu0
    %v1784 = vpop.f32.mrb[0].mxu0
    %1785 = vdwg.mxu0
    %v1786 = vadd.f32 %v1438, %v1781
    %v1787 = vxor.u32 %v1786, 2147483648
    %v1788 = vmul.f32 %v1787, 1.442695
    %v1789 = vpow.pop %v1788
    %v1790 = vadd.f32 %v1789, 1.0
    %v1791 = vrcp.pop %v1790
    %v1792 = vmul.f32 1.0, %v1791
    %v1793 = vtanh.pop %v1786
    %v1794 = vmul.f32 %v1792, %v1732
    %1796 = vrot.lane.b32.xlu0 %v1793, 64
    %v1797 = vpop.permute.xlu0 %1796
    %v1799 = vmul.f32 %v1792, %v1797
    %1801 = vrot.lane.b32.xlu0 %v1799, 32
    %v1802 = vpop.permute.xlu0 %1801
    %v1804 = vadd.f32 %v1794, %v1802
    %v1805 = vtanh.pop %v1804
    %1807 = vrot.lane.b32.xlu0 %v1805, 64
    %v1808 = vpop.permute.xlu0 %1807
    %v1810 = vmul.f32 %v1792, %v1808
    %v1811 = vpack.c.bf16 %v1810, %v1810
    %1813 = vrot.lane.b32.xlu0 %v1811, 32
    %v1814 = vpop.permute.xlu0 %1813
    %v1816 = vsel %vm71, %v1814, 0
    %1818 = vmatprep.subr.bf16.mxu0 0
    %1819 = vmatpush1.bf16.msra.mxu0 %v1523
    %1820 = vmatprep.subr.bf16.mxu0 0
    %1821 = vmatpush1.bf16.msra.mxu0 %v1524
    %1822 = vmatprep.subr.bf16.mxu0 0
    %1823 = vmatpush1.bf16.msra.mxu0 0
    %1824 = vmatprep.subr.bf16.mxu0 0
    %1825 = vmatpush1.bf16.msra.mxu0 0
    %1826 = vmatprep.subr.bf16.mxu0 0
    %1827 = vmatpush1.bf16.msra.mxu0 0
    %1828 = vmatprep.subr.bf16.mxu0 0
    %1829 = vmatpush1.bf16.msra.mxu0 0
    %1830 = vmatprep.subr.bf16.mxu0 0
    %1831 = vmatpush1.bf16.msra.mxu0 0
    %1832 = vmatprep.subr.bf16.mxu0 0
    %1833 = vmatpush1.bf16.msra.mxu0 0
    %1834 = vmatprep.subr.bf16.mxu0 0
    %1835 = vmatpush1.bf16.msra.mxu0 0
    %1836 = vmatprep.subr.bf16.mxu0 0
    %1837 = vmatpush1.bf16.msra.mxu0 0
    %1838 = vmatprep.subr.bf16.mxu0 0
    %1839 = vmatpush1.bf16.msra.mxu0 0
    %1840 = vmatprep.subr.bf16.mxu0 0
    %1841 = vmatpush1.bf16.msra.mxu0 0
    %1842 = vmatprep.subr.bf16.mxu0 0
    %1843 = vmatpush1.bf16.msra.mxu0 0
    %1844 = vmatprep.subr.bf16.mxu0 0
    %1845 = vmatpush1.bf16.msra.mxu0 0
    %1846 = vmatprep.subr.bf16.mxu0 0
    %1847 = vmatpush1.bf16.msra.mxu0 0
    %1848 = vmatprep.subr.bf16.mxu0 0
    %1849 = vmatpush1.bf16.msra.mxu0 0
    %1850 = vmatprep.mubr.bf16.mxu0 0
    %1851 = vmatmul.mubr.bf16.gmra.mrb[0].mxu0 %v1816
    %v1852 = vpop.f32.mrb[0].mxu0
    %v1853 = vadd.f32 0.0, %v1852
    %v1854 = vpop.f32.mrb[0].mxu0
    %v1855 = vpop.f32.mrb[0].mxu0
    %v1856 = vpop.f32.mrb[0].mxu0
    %1857 = vdwg.mxu0
    %v1858 = vadd.f32 %v1443, %v1853
    %v1859 = vxor.u32 %v1858, 2147483648
    %v1860 = vmul.f32 %v1859, 1.442695
    %v1861 = vpow.pop %v1860
    %v1862 = vadd.f32 %v1861, 1.0
    %v1863 = vrcp.pop %v1862
    %v1864 = vmul.f32 1.0, %v1863
    %v1865 = vtanh.pop %v1858
    %v1866 = vmul.f32 %v1864, %v1804
    %1868 = vrot.lane.b32.xlu0 %v1865, 64
    %v1869 = vpop.permute.xlu0 %1868
    %v1871 = vmul.f32 %v1864, %v1869
    %1873 = vrot.lane.b32.xlu0 %v1871, 32
    %v1874 = vpop.permute.xlu0 %1873
    %v1876 = vadd.f32 %v1866, %v1874
    %v1877 = vtanh.pop %v1876
    %1879 = vrot.lane.b32.xlu0 %v1877, 64
    %v1880 = vpop.permute.xlu0 %1879
    %v1882 = vmul.f32 %v1864, %v1880
    %v1883 = vpack.c.bf16 %v1882, %v1882
    %1885 = vrot.lane.b32.xlu0 %v1883, 32
    %v1886 = vpop.permute.xlu0 %1885
    %v1888 = vsel %vm71, %v1886, 0
    %1890 = vmatprep.subr.bf16.mxu0 0
    %1891 = vmatpush1.bf16.msra.mxu0 %v1523
    %1892 = vmatprep.subr.bf16.mxu0 0
    %1893 = vmatpush1.bf16.msra.mxu0 %v1524
    %1894 = vmatprep.subr.bf16.mxu0 0
    %1895 = vmatpush1.bf16.msra.mxu0 0
    %1896 = vmatprep.subr.bf16.mxu0 0
    %1897 = vmatpush1.bf16.msra.mxu0 0
    %1898 = vmatprep.subr.bf16.mxu0 0
    %1899 = vmatpush1.bf16.msra.mxu0 0
    %1900 = vmatprep.subr.bf16.mxu0 0
    %1901 = vmatpush1.bf16.msra.mxu0 0
    %1902 = vmatprep.subr.bf16.mxu0 0
    %1903 = vmatpush1.bf16.msra.mxu0 0
    %1904 = vmatprep.subr.bf16.mxu0 0
    %1905 = vmatpush1.bf16.msra.mxu0 0
    %1906 = vmatprep.subr.bf16.mxu0 0
    %1907 = vmatpush1.bf16.msra.mxu0 0
    %1908 = vmatprep.subr.bf16.mxu0 0
    %1909 = vmatpush1.bf16.msra.mxu0 0
    %1910 = vmatprep.subr.bf16.mxu0 0
    %1911 = vmatpush1.bf16.msra.mxu0 0
    %1912 = vmatprep.subr.bf16.mxu0 0
    %1913 = vmatpush1.bf16.msra.mxu0 0
    %1914 = vmatprep.subr.bf16.mxu0 0
    %1915 = vmatpush1.bf16.msra.mxu0 0
    %1916 = vmatprep.subr.bf16.mxu0 0
    %1917 = vmatpush1.bf16.msra.mxu0 0
    %1918 = vmatprep.subr.bf16.mxu0 0
    %1919 = vmatpush1.bf16.msra.mxu0 0
    %1920 = vmatprep.subr.bf16.mxu0 0
    %1921 = vmatpush1.bf16.msra.mxu0 0
    %1922 = vmatprep.mubr.bf16.mxu0 0
    %1923 = vmatmul.mubr.bf16.gmra.mrb[0].mxu0 %v1888
    %v1924 = vpop.f32.mrb[0].mxu0
    %v1925 = vadd.f32 0.0, %v1924
    %v1926 = vpop.f32.mrb[0].mxu0
    %v1927 = vpop.f32.mrb[0].mxu0
    %v1928 = vpop.f32.mrb[0].mxu0
    %1929 = vdwg.mxu0
    %v1930 = vadd.f32 %v1448, %v1925
    %v1931 = vxor.u32 %v1930, 2147483648
    %v1932 = vmul.f32 %v1931, 1.442695
    %v1933 = vpow.pop %v1932
    %v1934 = vadd.f32 %v1933, 1.0
    %v1935 = vrcp.pop %v1934
    %v1936 = vmul.f32 1.0, %v1935
    %v1937 = vtanh.pop %v1930
    %v1938 = vmul.f32 %v1936, %v1876
    %1940 = vrot.lane.b32.xlu0 %v1937, 64
    %v1941 = vpop.permute.xlu0 %1940
    %v1943 = vmul.f32 %v1936, %v1941
    %1945 = vrot.lane.b32.xlu0 %v1943, 32
    %v1946 = vpop.permute.xlu0 %1945
    %v1948 = vadd.f32 %v1938, %v1946
    %v1949 = vtanh.pop %v1948
    %1951 = vrot.lane.b32.xlu0 %v1949, 64
    %v1952 = vpop.permute.xlu0 %1951
    %v1954 = vmul.f32 %v1936, %v1952
    %v1955 = vpack.c.bf16 %v1954, %v1954
    %1957 = vrot.lane.b32.xlu0 %v1955, 32
    %v1958 = vpop.permute.xlu0 %1957
    %v1960 = vsel %vm71, %v1958, 0
    %1962 = vmatprep.subr.bf16.mxu0 0
    %1963 = vmatpush1.bf16.msra.mxu0 %v1523
    %1964 = vmatprep.subr.bf16.mxu0 0
    %1965 = vmatpush1.bf16.msra.mxu0 %v1524
    %1966 = vmatprep.subr.bf16.mxu0 0
    %1967 = vmatpush1.bf16.msra.mxu0 0
    %1968 = vmatprep.subr.bf16.mxu0 0
    %1969 = vmatpush1.bf16.msra.mxu0 0
    %1970 = vmatprep.subr.bf16.mxu0 0
    %1971 = vmatpush1.bf16.msra.mxu0 0
    %1972 = vmatprep.subr.bf16.mxu0 0
    %1973 = vmatpush1.bf16.msra.mxu0 0
    %1974 = vmatprep.subr.bf16.mxu0 0
    %1975 = vmatpush1.bf16.msra.mxu0 0
    %1976 = vmatprep.subr.bf16.mxu0 0
    %1977 = vmatpush1.bf16.msra.mxu0 0
    %1978 = vmatprep.subr.bf16.mxu0 0
    %1979 = vmatpush1.bf16.msra.mxu0 0
    %1980 = vmatprep.subr.bf16.mxu0 0
    %1981 = vmatpush1.bf16.msra.mxu0 0
    %1982 = vmatprep.subr.bf16.mxu0 0
    %1983 = vmatpush1.bf16.msra.mxu0 0
    %1984 = vmatprep.subr.bf16.mxu0 0
    %1985 = vmatpush1.bf16.msra.mxu0 0
    %1986 = vmatprep.subr.bf16.mxu0 0
    %1987 = vmatpush1.bf16.msra.mxu0 0
    %1988 = vmatprep.subr.bf16.mxu0 0
    %1989 = vmatpush1.bf16.msra.mxu0 0
    %1990 = vmatprep.subr.bf16.mxu0 0
    %1991 = vmatpush1.bf16.msra.mxu0 0
    %1992 = vmatprep.subr.bf16.mxu0 0
    %1993 = vmatpush1.bf16.msra.mxu0 0
    %1994 = vmatprep.mubr.bf16.mxu0 0
    %1995 = vmatmul.mubr.bf16.gmra.mrb[0].mxu0 %v1960
    %v1996 = vpop.f32.mrb[0].mxu0
    %v1997 = vadd.f32 0.0, %v1996
    %v1998 = vpop.f32.mrb[0].mxu0
    %v1999 = vpop.f32.mrb[0].mxu0
    %v2000 = vpop.f32.mrb[0].mxu0
    %2001 = vdwg.mxu0
    %v2002 = vadd.f32 %v1453, %v1997
    %v2003 = vxor.u32 %v2002, 2147483648
    %v2004 = vmul.f32 %v2003, 1.442695
    %v2005 = vpow.pop %v2004
    %v2006 = vadd.f32 %v2005, 1.0
    %v2007 = vrcp.pop %v2006
    %v2008 = vmul.f32 1.0, %v2007
    %v2009 = vtanh.pop %v2002
    %v2010 = vmul.f32 %v2008, %v1948
    %2012 = vrot.lane.b32.xlu0 %v2009, 64
    %v2013 = vpop.permute.xlu0 %2012
    %v2015 = vmul.f32 %v2008, %v2013
    %2017 = vrot.lane.b32.xlu0 %v2015, 32
    %v2018 = vpop.permute.xlu0 %2017
    %v2020 = vadd.f32 %v2010, %v2018
    %v2021 = vtanh.pop %v2020
    %2023 = vrot.lane.b32.xlu0 %v2021, 64
    %v2024 = vpop.permute.xlu0 %2023
    %v2026 = vmul.f32 %v2008, %v2024
    %v2027 = vpack.c.bf16 %v2026, %v2026
    %2029 = vrot.lane.b32.xlu0 %v2027, 32
    %v2030 = vpop.permute.xlu0 %2029
    %v2032 = vsel %vm71, %v2030, 0
    %2034 = vmatprep.subr.bf16.mxu0 0
    %2035 = vmatpush1.bf16.msra.mxu0 %v1523
    %2036 = vmatprep.subr.bf16.mxu0 0
    %2037 = vmatpush1.bf16.msra.mxu0 %v1524
    %2038 = vmatprep.subr.bf16.mxu0 0
    %2039 = vmatpush1.bf16.msra.mxu0 0
    %2040 = vmatprep.subr.bf16.mxu0 0
    %2041 = vmatpush1.bf16.msra.mxu0 0
    %2042 = vmatprep.subr.bf16.mxu0 0
    %2043 = vmatpush1.bf16.msra.mxu0 0
    %2044 = vmatprep.subr.bf16.mxu0 0
    %2045 = vmatpush1.bf16.msra.mxu0 0
    %2046 = vmatprep.subr.bf16.mxu0 0
    %2047 = vmatpush1.bf16.msra.mxu0 0
    %2048 = vmatprep.subr.bf16.mxu0 0
    %2049 = vmatpush1.bf16.msra.mxu0 0
    %2050 = vmatprep.subr.bf16.mxu0 0
    %2051 = vmatpush1.bf16.msra.mxu0 0
    %2052 = vmatprep.subr.bf16.mxu0 0
    %2053 = vmatpush1.bf16.msra.mxu0 0
    %2054 = vmatprep.subr.bf16.mxu0 0
    %2055 = vmatpush1.bf16.msra.mxu0 0
    %2056 = vmatprep.subr.bf16.mxu0 0
    %2057 = vmatpush1.bf16.msra.mxu0 0
    %2058 = vmatprep.subr.bf16.mxu0 0
    %2059 = vmatpush1.bf16.msra.mxu0 0
    %2060 = vmatprep.subr.bf16.mxu0 0
    %2061 = vmatpush1.bf16.msra.mxu0 0
    %2062 = vmatprep.subr.bf16.mxu0 0
    %2063 = vmatpush1.bf16.msra.mxu0 0
    %2064 = vmatprep.subr.bf16.mxu0 0
    %2065 = vmatpush1.bf16.msra.mxu0 0
    %2066 = vmatprep.mubr.bf16.mxu0 0
    %2067 = vmatmul.mubr.bf16.gmra.mrb[0].mxu0 %v2032
    %v2068 = vpop.f32.mrb[0].mxu0
    %v2069 = vadd.f32 0.0, %v2068
    %v2070 = vpop.f32.mrb[0].mxu0
    %v2071 = vpop.f32.mrb[0].mxu0
    %v2072 = vpop.f32.mrb[0].mxu0
    %2073 = vdwg.mxu0
    %v2074 = vadd.f32 %v1458, %v2069
    %v2075 = vxor.u32 %v2074, 2147483648
    %v2076 = vmul.f32 %v2075, 1.442695
    %v2077 = vpow.pop %v2076
    %v2078 = vadd.f32 %v2077, 1.0
    %v2079 = vrcp.pop %v2078
    %v2080 = vmul.f32 1.0, %v2079
    %v2081 = vtanh.pop %v2074
    %v2082 = vmul.f32 %v2080, %v2020
    %2084 = vrot.lane.b32.xlu0 %v2081, 64
    %v2085 = vpop.permute.xlu0 %2084
    %v2087 = vmul.f32 %v2080, %v2085
    %2089 = vrot.lane.b32.xlu0 %v2087, 32
    %v2090 = vpop.permute.xlu0 %2089
    %v2092 = vadd.f32 %v2082, %v2090
    %v2093 = vtanh.pop %v2092
    %2095 = vrot.lane.b32.xlu0 %v2093, 64
    %v2096 = vpop.permute.xlu0 %2095
    %v2098 = vmul.f32 %v2080, %v2096
    %v2099 = vpack.c.bf16 %v2098, %v2098
    %2101 = vrot.lane.b32.xlu0 %v2099, 32
    %v2102 = vpop.permute.xlu0 %2101
    %v2104 = vsel %vm71, %v2102, 0
    %2106 = vmatprep.subr.bf16.mxu0 0
    %2107 = vmatpush1.bf16.msra.mxu0 %v1523
    %2108 = vmatprep.subr.bf16.mxu0 0
    %2109 = vmatpush1.bf16.msra.mxu0 %v1524
    %2110 = vmatprep.subr.bf16.mxu0 0
    %2111 = vmatpush1.bf16.msra.mxu0 0
    %2112 = vmatprep.subr.bf16.mxu0 0
    %2113 = vmatpush1.bf16.msra.mxu0 0
    %2114 = vmatprep.subr.bf16.mxu0 0
    %2115 = vmatpush1.bf16.msra.mxu0 0
    %2116 = vmatprep.subr.bf16.mxu0 0
    %2117 = vmatpush1.bf16.msra.mxu0 0
    %2118 = vmatprep.subr.bf16.mxu0 0
    %2119 = vmatpush1.bf16.msra.mxu0 0
    %2120 = vmatprep.subr.bf16.mxu0 0
    %2121 = vmatpush1.bf16.msra.mxu0 0
    %2122 = vmatprep.subr.bf16.mxu0 0
    %2123 = vmatpush1.bf16.msra.mxu0 0
    %2124 = vmatprep.subr.bf16.mxu0 0
    %2125 = vmatpush1.bf16.msra.mxu0 0
    %2126 = vmatprep.subr.bf16.mxu0 0
    %2127 = vmatpush1.bf16.msra.mxu0 0
    %2128 = vmatprep.subr.bf16.mxu0 0
    %2129 = vmatpush1.bf16.msra.mxu0 0
    %2130 = vmatprep.subr.bf16.mxu0 0
    %2131 = vmatpush1.bf16.msra.mxu0 0
    %2132 = vmatprep.subr.bf16.mxu0 0
    %2133 = vmatpush1.bf16.msra.mxu0 0
    %2134 = vmatprep.subr.bf16.mxu0 0
    %2135 = vmatpush1.bf16.msra.mxu0 0
    %2136 = vmatprep.subr.bf16.mxu0 0
    %2137 = vmatpush1.bf16.msra.mxu0 0
    %2138 = vmatprep.mubr.bf16.mxu0 0
    %2139 = vmatmul.mubr.bf16.gmra.mrb[0].mxu0 %v2104
    %v2140 = vpop.f32.mrb[0].mxu0
    %v2141 = vadd.f32 0.0, %v2140
    %v2142 = vpop.f32.mrb[0].mxu0
    %v2143 = vpop.f32.mrb[0].mxu0
    %v2144 = vpop.f32.mrb[0].mxu0
    %2145 = vdwg.mxu0
    %v2146 = vadd.f32 %v1463, %v2141
    %v2147 = vxor.u32 %v2146, 2147483648
    %v2148 = vmul.f32 %v2147, 1.442695
    %v2149 = vpow.pop %v2148
    %v2150 = vadd.f32 %v2149, 1.0
    %v2151 = vrcp.pop %v2150
    %v2152 = vmul.f32 1.0, %v2151
    %v2153 = vtanh.pop %v2146
    %v2154 = vmul.f32 %v2152, %v2092
    %2156 = vrot.lane.b32.xlu0 %v2153, 64
    %v2157 = vpop.permute.xlu0 %2156
    %v2159 = vmul.f32 %v2152, %v2157
    %2161 = vrot.lane.b32.xlu0 %v2159, 32
    %v2162 = vpop.permute.xlu0 %2161
    %v2164 = vadd.f32 %v2154, %v2162
    %v2165 = vtanh.pop %v2164
    %2167 = vrot.lane.b32.xlu0 %v2165, 64
    %v2168 = vpop.permute.xlu0 %2167
    %v2170 = vmul.f32 %v2152, %v2168
    %v2171 = vpack.c.bf16 %v2170, %v2170
    %2173 = vrot.lane.b32.xlu0 %v2171, 32
    %v2174 = vpop.permute.xlu0 %2173
    %v2176 = vsel %vm71, %v2174, 0
    %2178 = vmatprep.subr.bf16.mxu0 0
    %2179 = vmatpush1.bf16.msra.mxu0 %v1523
    %2180 = vmatprep.subr.bf16.mxu0 0
    %2181 = vmatpush1.bf16.msra.mxu0 %v1524
    %2182 = vmatprep.subr.bf16.mxu0 0
    %2183 = vmatpush1.bf16.msra.mxu0 0
    %2184 = vmatprep.subr.bf16.mxu0 0
    %2185 = vmatpush1.bf16.msra.mxu0 0
    %2186 = vmatprep.subr.bf16.mxu0 0
    %2187 = vmatpush1.bf16.msra.mxu0 0
    %2188 = vmatprep.subr.bf16.mxu0 0
    %2189 = vmatpush1.bf16.msra.mxu0 0
    %2190 = vmatprep.subr.bf16.mxu0 0
    %2191 = vmatpush1.bf16.msra.mxu0 0
    %2192 = vmatprep.subr.bf16.mxu0 0
    %2193 = vmatpush1.bf16.msra.mxu0 0
    %2194 = vmatprep.subr.bf16.mxu0 0
    %2195 = vmatpush1.bf16.msra.mxu0 0
    %2196 = vmatprep.subr.bf16.mxu0 0
    %2197 = vmatpush1.bf16.msra.mxu0 0
    %2198 = vmatprep.subr.bf16.mxu0 0
    %2199 = vmatpush1.bf16.msra.mxu0 0
    %2200 = vmatprep.subr.bf16.mxu0 0
    %2201 = vmatpush1.bf16.msra.mxu0 0
    %2202 = vmatprep.subr.bf16.mxu0 0
    %2203 = vmatpush1.bf16.msra.mxu0 0
    %2204 = vmatprep.subr.bf16.mxu0 0
    %2205 = vmatpush1.bf16.msra.mxu0 0
    %2206 = vmatprep.subr.bf16.mxu0 0
    %2207 = vmatpush1.bf16.msra.mxu0 0
    %2208 = vmatprep.subr.bf16.mxu0 0
    %2209 = vmatpush1.bf16.msra.mxu0 0
    %2210 = vmatprep.mubr.bf16.mxu0 0
    %2211 = vmatmul.mubr.bf16.gmra.mrb[0].mxu0 %v2176
    %v2212 = vpop.f32.mrb[0].mxu0
    %v2213 = vadd.f32 0.0, %v2212
    %v2214 = vpop.f32.mrb[0].mxu0
    %v2215 = vpop.f32.mrb[0].mxu0
    %v2216 = vpop.f32.mrb[0].mxu0
    %2217 = vdwg.mxu0
    %v2218 = vadd.f32 %v1468, %v2213
    %v2219 = vxor.u32 %v2218, 2147483648
    %v2220 = vmul.f32 %v2219, 1.442695
    %v2221 = vpow.pop %v2220
    %v2222 = vadd.f32 %v2221, 1.0
    %v2223 = vrcp.pop %v2222
    %v2224 = vmul.f32 1.0, %v2223
    %v2225 = vtanh.pop %v2218
    %v2226 = vmul.f32 %v2224, %v2164
    %2228 = vrot.lane.b32.xlu0 %v2225, 64
    %v2229 = vpop.permute.xlu0 %2228
    %v2231 = vmul.f32 %v2224, %v2229
    %2233 = vrot.lane.b32.xlu0 %v2231, 32
    %v2234 = vpop.permute.xlu0 %2233
    %v2236 = vadd.f32 %v2226, %v2234
    %v2237 = vtanh.pop %v2236
    %2239 = vrot.lane.b32.xlu0 %v2237, 64
    %v2240 = vpop.permute.xlu0 %2239
    %v2242 = vmul.f32 %v2224, %v2240
    %v2243 = vpack.c.bf16 %v2242, %v2242
    %2245 = vrot.lane.b32.xlu0 %v2243, 32
    %v2246 = vpop.permute.xlu0 %2245
    %v2248 = vsel %vm71, %v2246, 0
    %2250 = vmatprep.subr.bf16.mxu0 0
    %2251 = vmatpush1.bf16.msra.mxu0 %v1523
    %2252 = vmatprep.subr.bf16.mxu0 0
    %2253 = vmatpush1.bf16.msra.mxu0 %v1524
    %2254 = vmatprep.subr.bf16.mxu0 0
    %2255 = vmatpush1.bf16.msra.mxu0 0
    %2256 = vmatprep.subr.bf16.mxu0 0
    %2257 = vmatpush1.bf16.msra.mxu0 0
    %2258 = vmatprep.subr.bf16.mxu0 0
    %2259 = vmatpush1.bf16.msra.mxu0 0
    %2260 = vmatprep.subr.bf16.mxu0 0
    %2261 = vmatpush1.bf16.msra.mxu0 0
    %2262 = vmatprep.subr.bf16.mxu0 0
    %2263 = vmatpush1.bf16.msra.mxu0 0
    %2264 = vmatprep.subr.bf16.mxu0 0
    %2265 = vmatpush1.bf16.msra.mxu0 0
    %2266 = vmatprep.subr.bf16.mxu0 0
    %2267 = vmatpush1.bf16.msra.mxu0 0
    %2268 = vmatprep.subr.bf16.mxu0 0
    %2269 = vmatpush1.bf16.msra.mxu0 0
    %2270 = vmatprep.subr.bf16.mxu0 0
    %2271 = vmatpush1.bf16.msra.mxu0 0
    %2272 = vmatprep.subr.bf16.mxu0 0
    %2273 = vmatpush1.bf16.msra.mxu0 0
    %2274 = vmatprep.subr.bf16.mxu0 0
    %2275 = vmatpush1.bf16.msra.mxu0 0
    %2276 = vmatprep.subr.bf16.mxu0 0
    %2277 = vmatpush1.bf16.msra.mxu0 0
    %2278 = vmatprep.subr.bf16.mxu0 0
    %2279 = vmatpush1.bf16.msra.mxu0 0
    %2280 = vmatprep.subr.bf16.mxu0 0
    %2281 = vmatpush1.bf16.msra.mxu0 0
    %2282 = vmatprep.mubr.bf16.mxu0 0
    %2283 = vmatmul.mubr.bf16.gmra.mrb[0].mxu0 %v2248
    %v2284 = vpop.f32.mrb[0].mxu0
    %v2285 = vadd.f32 0.0, %v2284
    %v2286 = vpop.f32.mrb[0].mxu0
    %v2287 = vpop.f32.mrb[0].mxu0
    %v2288 = vpop.f32.mrb[0].mxu0
    %2289 = vdwg.mxu0
    %v2290 = vadd.f32 %v1473, %v2285
    %v2291 = vxor.u32 %v2290, 2147483648
    %v2292 = vmul.f32 %v2291, 1.442695
    %v2293 = vpow.pop %v2292
    %v2294 = vadd.f32 %v2293, 1.0
    %v2295 = vrcp.pop %v2294
    %v2296 = vmul.f32 1.0, %v2295
    %v2297 = vtanh.pop %v2290
    %v2298 = vmul.f32 %v2296, %v2236
    %2300 = vrot.lane.b32.xlu0 %v2297, 64
    %v2301 = vpop.permute.xlu0 %2300
    %v2303 = vmul.f32 %v2296, %v2301
    %2305 = vrot.lane.b32.xlu0 %v2303, 32
    %v2306 = vpop.permute.xlu0 %2305
    %v2308 = vadd.f32 %v2298, %v2306
    %v2309 = vtanh.pop %v2308
    %2311 = vrot.lane.b32.xlu0 %v2309, 64
    %v2312 = vpop.permute.xlu0 %2311
    %v2314 = vmul.f32 %v2296, %v2312
    %v2315 = vpack.c.bf16 %v2314, %v2314
    %2317 = vrot.lane.b32.xlu0 %v2315, 32
    %v2318 = vpop.permute.xlu0 %2317
    %v2320 = vsel %vm71, %v2318, 0
    %2322 = vmatprep.subr.bf16.mxu0 0
    %2323 = vmatpush1.bf16.msra.mxu0 %v1523
    %2324 = vmatprep.subr.bf16.mxu0 0
    %2325 = vmatpush1.bf16.msra.mxu0 %v1524
    %2326 = vmatprep.subr.bf16.mxu0 0
    %2327 = vmatpush1.bf16.msra.mxu0 0
    %2328 = vmatprep.subr.bf16.mxu0 0
    %2329 = vmatpush1.bf16.msra.mxu0 0
    %2330 = vmatprep.subr.bf16.mxu0 0
    %2331 = vmatpush1.bf16.msra.mxu0 0
    %2332 = vmatprep.subr.bf16.mxu0 0
    %2333 = vmatpush1.bf16.msra.mxu0 0
    %2334 = vmatprep.subr.bf16.mxu0 0
    %2335 = vmatpush1.bf16.msra.mxu0 0
    %2336 = vmatprep.subr.bf16.mxu0 0
    %2337 = vmatpush1.bf16.msra.mxu0 0
    %2338 = vmatprep.subr.bf16.mxu0 0
    %2339 = vmatpush1.bf16.msra.mxu0 0
    %2340 = vmatprep.subr.bf16.mxu0 0
    %2341 = vmatpush1.bf16.msra.mxu0 0
    %2342 = vmatprep.subr.bf16.mxu0 0
    %2343 = vmatpush1.bf16.msra.mxu0 0
    %2344 = vmatprep.subr.bf16.mxu0 0
    %2345 = vmatpush1.bf16.msra.mxu0 0
    %2346 = vmatprep.subr.bf16.mxu0 0
    %2347 = vmatpush1.bf16.msra.mxu0 0
    %2348 = vmatprep.subr.bf16.mxu0 0
    %2349 = vmatpush1.bf16.msra.mxu0 0
    %2350 = vmatprep.subr.bf16.mxu0 0
    %2351 = vmatpush1.bf16.msra.mxu0 0
    %2352 = vmatprep.subr.bf16.mxu0 0
    %2353 = vmatpush1.bf16.msra.mxu0 0
    %2354 = vmatprep.mubr.bf16.mxu0 0
    %2355 = vmatmul.mubr.bf16.gmra.mrb[0].mxu0 %v2320
    %v2356 = vpop.f32.mrb[0].mxu0
    %v2357 = vadd.f32 0.0, %v2356
    %v2358 = vpop.f32.mrb[0].mxu0
    %v2359 = vpop.f32.mrb[0].mxu0
    %v2360 = vpop.f32.mrb[0].mxu0
    %2361 = vdwg.mxu0
    %v2362 = vadd.f32 %v1478, %v2357
    %v2363 = vxor.u32 %v2362, 2147483648
    %v2364 = vmul.f32 %v2363, 1.442695
    %v2365 = vpow.pop %v2364
    %v2366 = vadd.f32 %v2365, 1.0
    %v2367 = vrcp.pop %v2366
    %v2368 = vmul.f32 1.0, %v2367
    %v2369 = vtanh.pop %v2362
    %v2370 = vmul.f32 %v2368, %v2308
    %2372 = vrot.lane.b32.xlu0 %v2369, 64
    %v2373 = vpop.permute.xlu0 %2372
    %v2375 = vmul.f32 %v2368, %v2373
    %2377 = vrot.lane.b32.xlu0 %v2375, 32
    %v2378 = vpop.permute.xlu0 %2377
    %v2380 = vadd.f32 %v2370, %v2378
    %v2381 = vtanh.pop %v2380
    %2383 = vrot.lane.b32.xlu0 %v2381, 64
    %v2384 = vpop.permute.xlu0 %2383
    %v2386 = vmul.f32 %v2368, %v2384
    %v2387 = vpack.c.bf16 %v2386, %v2386
    %2389 = vrot.lane.b32.xlu0 %v2387, 32
    %v2390 = vpop.permute.xlu0 %2389
    %v2392 = vsel %vm71, %v2390, 0
    %2394 = vmatprep.subr.bf16.mxu0 0
    %2395 = vmatpush1.bf16.msra.mxu0 %v1523
    %2396 = vmatprep.subr.bf16.mxu0 0
    %2397 = vmatpush1.bf16.msra.mxu0 %v1524
    %2398 = vmatprep.subr.bf16.mxu0 0
    %2399 = vmatpush1.bf16.msra.mxu0 0
    %2400 = vmatprep.subr.bf16.mxu0 0
    %2401 = vmatpush1.bf16.msra.mxu0 0
    %2402 = vmatprep.subr.bf16.mxu0 0
    %2403 = vmatpush1.bf16.msra.mxu0 0
    %2404 = vmatprep.subr.bf16.mxu0 0
    %2405 = vmatpush1.bf16.msra.mxu0 0
    %2406 = vmatprep.subr.bf16.mxu0 0
    %2407 = vmatpush1.bf16.msra.mxu0 0
    %2408 = vmatprep.subr.bf16.mxu0 0
    %2409 = vmatpush1.bf16.msra.mxu0 0
    %2410 = vmatprep.subr.bf16.mxu0 0
    %2411 = vmatpush1.bf16.msra.mxu0 0
    %2412 = vmatprep.subr.bf16.mxu0 0
    %2413 = vmatpush1.bf16.msra.mxu0 0
    %2414 = vmatprep.subr.bf16.mxu0 0
    %2415 = vmatpush1.bf16.msra.mxu0 0
    %2416 = vmatprep.subr.bf16.mxu0 0
    %2417 = vmatpush1.bf16.msra.mxu0 0
    %2418 = vmatprep.subr.bf16.mxu0 0
    %2419 = vmatpush1.bf16.msra.mxu0 0
    %2420 = vmatprep.subr.bf16.mxu0 0
    %2421 = vmatpush1.bf16.msra.mxu0 0
    %2422 = vmatprep.subr.bf16.mxu0 0
    %2423 = vmatpush1.bf16.msra.mxu0 0
    %2424 = vmatprep.subr.bf16.mxu0 0
    %2425 = vmatpush1.bf16.msra.mxu0 0
    %2426 = vmatprep.mubr.bf16.mxu0 0
    %2427 = vmatmul.mubr.bf16.gmra.mrb[0].mxu0 %v2392
    %v2428 = vpop.f32.mrb[0].mxu0
    %v2429 = vadd.f32 0.0, %v2428
    %v2430 = vpop.f32.mrb[0].mxu0
    %v2431 = vpop.f32.mrb[0].mxu0
    %v2432 = vpop.f32.mrb[0].mxu0
    %2433 = vdwg.mxu0
    %v2434 = vadd.f32 %v1483, %v2429
    %v2435 = vxor.u32 %v2434, 2147483648
    %v2436 = vmul.f32 %v2435, 1.442695
    %v2437 = vpow.pop %v2436
    %v2438 = vadd.f32 %v2437, 1.0
    %v2439 = vrcp.pop %v2438
    %v2440 = vmul.f32 1.0, %v2439
    %v2441 = vtanh.pop %v2434
    %v2442 = vmul.f32 %v2440, %v2380
    %2444 = vrot.lane.b32.xlu0 %v2441, 64
    %v2445 = vpop.permute.xlu0 %2444
    %v2447 = vmul.f32 %v2440, %v2445
    %2449 = vrot.lane.b32.xlu0 %v2447, 32
    %v2450 = vpop.permute.xlu0 %2449
    %v2452 = vadd.f32 %v2442, %v2450
    %v2453 = vtanh.pop %v2452
    %2455 = vrot.lane.b32.xlu0 %v2453, 64
    %v2456 = vpop.permute.xlu0 %2455
    %v2458 = vmul.f32 %v2440, %v2456
    %v2459 = vpack.c.bf16 %v2458, %v2458
    %2461 = vrot.lane.b32.xlu0 %v2459, 32
    %v2462 = vpop.permute.xlu0 %2461
    %v2464 = vsel %vm71, %v2462, 0
    %2466 = vmatprep.subr.bf16.mxu0 0
    %2467 = vmatpush1.bf16.msra.mxu0 %v1523
    %2468 = vmatprep.subr.bf16.mxu0 0
    %2469 = vmatpush1.bf16.msra.mxu0 %v1524
    %2470 = vmatprep.subr.bf16.mxu0 0
    %2471 = vmatpush1.bf16.msra.mxu0 0
    %2472 = vmatprep.subr.bf16.mxu0 0
    %2473 = vmatpush1.bf16.msra.mxu0 0
    %2474 = vmatprep.subr.bf16.mxu0 0
    %2475 = vmatpush1.bf16.msra.mxu0 0
    %2476 = vmatprep.subr.bf16.mxu0 0
    %2477 = vmatpush1.bf16.msra.mxu0 0
    %2478 = vmatprep.subr.bf16.mxu0 0
    %2479 = vmatpush1.bf16.msra.mxu0 0
    %2480 = vmatprep.subr.bf16.mxu0 0
    %2481 = vmatpush1.bf16.msra.mxu0 0
    %2482 = vmatprep.subr.bf16.mxu0 0
    %2483 = vmatpush1.bf16.msra.mxu0 0
    %2484 = vmatprep.subr.bf16.mxu0 0
    %2485 = vmatpush1.bf16.msra.mxu0 0
    %2486 = vmatprep.subr.bf16.mxu0 0
    %2487 = vmatpush1.bf16.msra.mxu0 0
    %2488 = vmatprep.subr.bf16.mxu0 0
    %2489 = vmatpush1.bf16.msra.mxu0 0
    %2490 = vmatprep.subr.bf16.mxu0 0
    %2491 = vmatpush1.bf16.msra.mxu0 0
    %2492 = vmatprep.subr.bf16.mxu0 0
    %2493 = vmatpush1.bf16.msra.mxu0 0
    %2494 = vmatprep.subr.bf16.mxu0 0
    %2495 = vmatpush1.bf16.msra.mxu0 0
    %2496 = vmatprep.subr.bf16.mxu0 0
    %2497 = vmatpush1.bf16.msra.mxu0 0
    %2498 = vmatprep.mubr.bf16.mxu0 0
    %2499 = vmatmul.mubr.bf16.gmra.mrb[0].mxu0 %v2464
    %v2500 = vpop.f32.mrb[0].mxu0
    %v2501 = vadd.f32 0.0, %v2500
    %v2502 = vpop.f32.mrb[0].mxu0
    %v2503 = vpop.f32.mrb[0].mxu0
    %v2504 = vpop.f32.mrb[0].mxu0
    %2505 = vdwg.mxu0
    %v2506 = vadd.f32 %v1488, %v2501
    %v2507 = vxor.u32 %v2506, 2147483648
    %v2508 = vmul.f32 %v2507, 1.442695
    %v2509 = vpow.pop %v2508
    %v2510 = vadd.f32 %v2509, 1.0
    %v2511 = vrcp.pop %v2510
    %v2512 = vmul.f32 1.0, %v2511
    %v2513 = vtanh.pop %v2506
    %v2514 = vmul.f32 %v2512, %v2452
    %2516 = vrot.lane.b32.xlu0 %v2513, 64
    %v2517 = vpop.permute.xlu0 %2516
    %v2519 = vmul.f32 %v2512, %v2517
    %2521 = vrot.lane.b32.xlu0 %v2519, 32
    %v2522 = vpop.permute.xlu0 %2521
    %v2524 = vadd.f32 %v2514, %v2522
    %v2525 = vtanh.pop %v2524
    %2527 = vrot.lane.b32.xlu0 %v2525, 64
    %v2528 = vpop.permute.xlu0 %2527
    %v2530 = vmul.f32 %v2512, %v2528
    %v2531 = vpack.c.bf16 %v2530, %v2530
    %2533 = vrot.lane.b32.xlu0 %v2531, 32
    %v2534 = vpop.permute.xlu0 %2533
    %v2536 = vsel %vm71, %v2534, 0
    %2538 = vmatprep.subr.bf16.mxu0 0
    %2539 = vmatpush1.bf16.msra.mxu0 %v1523
    %2540 = vmatprep.subr.bf16.mxu0 0
    %2541 = vmatpush1.bf16.msra.mxu0 %v1524
    %2542 = vmatprep.subr.bf16.mxu0 0
    %2543 = vmatpush1.bf16.msra.mxu0 0
    %2544 = vmatprep.subr.bf16.mxu0 0
    %2545 = vmatpush1.bf16.msra.mxu0 0
    %2546 = vmatprep.subr.bf16.mxu0 0
    %2547 = vmatpush1.bf16.msra.mxu0 0
    %2548 = vmatprep.subr.bf16.mxu0 0
    %2549 = vmatpush1.bf16.msra.mxu0 0
    %2550 = vmatprep.subr.bf16.mxu0 0
    %2551 = vmatpush1.bf16.msra.mxu0 0
    %2552 = vmatprep.subr.bf16.mxu0 0
    %2553 = vmatpush1.bf16.msra.mxu0 0
    %2554 = vmatprep.subr.bf16.mxu0 0
    %2555 = vmatpush1.bf16.msra.mxu0 0
    %2556 = vmatprep.subr.bf16.mxu0 0
    %2557 = vmatpush1.bf16.msra.mxu0 0
    %2558 = vmatprep.subr.bf16.mxu0 0
    %2559 = vmatpush1.bf16.msra.mxu0 0
    %2560 = vmatprep.subr.bf16.mxu0 0
    %2561 = vmatpush1.bf16.msra.mxu0 0
    %2562 = vmatprep.subr.bf16.mxu0 0
    %2563 = vmatpush1.bf16.msra.mxu0 0
    %2564 = vmatprep.subr.bf16.mxu0 0
    %2565 = vmatpush1.bf16.msra.mxu0 0
    %2566 = vmatprep.subr.bf16.mxu0 0
    %2567 = vmatpush1.bf16.msra.mxu0 0
    %2568 = vmatprep.subr.bf16.mxu0 0
    %2569 = vmatpush1.bf16.msra.mxu0 0
    %2570 = vmatprep.mubr.bf16.mxu0 0
    %2571 = vmatmul.mubr.bf16.gmra.mrb[0].mxu0 %v2536
    %v2572 = vpop.f32.mrb[0].mxu0
    %v2573 = vadd.f32 0.0, %v2572
    %v2574 = vpop.f32.mrb[0].mxu0
    %v2575 = vpop.f32.mrb[0].mxu0
    %v2576 = vpop.f32.mrb[0].mxu0
    %2577 = vdwg.mxu0
    %v2578 = vadd.f32 %v1493, %v2573
    %v2579 = vxor.u32 %v2578, 2147483648
    %v2580 = vmul.f32 %v2579, 1.442695
    %v2581 = vpow.pop %v2580
    %v2582 = vadd.f32 %v2581, 1.0
    %v2583 = vrcp.pop %v2582
    %v2584 = vmul.f32 1.0, %v2583
    %v2585 = vtanh.pop %v2578
    %v2586 = vmul.f32 %v2584, %v2524
    %2588 = vrot.lane.b32.xlu0 %v2585, 64
    %v2589 = vpop.permute.xlu0 %2588
    %v2591 = vmul.f32 %v2584, %v2589
    %2593 = vrot.lane.b32.xlu0 %v2591, 32
    %v2594 = vpop.permute.xlu0 %2593
    %v2596 = vadd.f32 %v2586, %v2594
    %v2597 = vtanh.pop %v2596
    %2599 = vrot.lane.b32.xlu0 %v2597, 64
    %v2600 = vpop.permute.xlu0 %2599
    %v2602 = vmul.f32 %v2584, %v2600
    %v2603 = vpack.c.bf16 %v2602, %v2602
    %2605 = vrot.lane.b32.xlu0 %v2603, 32
    %v2606 = vpop.permute.xlu0 %2605
    %v2608 = vsel %vm71, %v2606, 0
    %2610 = vmatprep.subr.bf16.mxu0 0
    %2611 = vmatpush1.bf16.msra.mxu0 %v1523
    %2612 = vmatprep.subr.bf16.mxu0 0
    %2613 = vmatpush1.bf16.msra.mxu0 %v1524
    %2614 = vmatprep.subr.bf16.mxu0 0
    %2615 = vmatpush1.bf16.msra.mxu0 0
    %2616 = vmatprep.subr.bf16.mxu0 0
    %2617 = vmatpush1.bf16.msra.mxu0 0
    %2618 = vmatprep.subr.bf16.mxu0 0
    %2619 = vmatpush1.bf16.msra.mxu0 0
    %2620 = vmatprep.subr.bf16.mxu0 0
    %2621 = vmatpush1.bf16.msra.mxu0 0
    %2622 = vmatprep.subr.bf16.mxu0 0
    %2623 = vmatpush1.bf16.msra.mxu0 0
    %2624 = vmatprep.subr.bf16.mxu0 0
    %2625 = vmatpush1.bf16.msra.mxu0 0
    %2626 = vmatprep.subr.bf16.mxu0 0
    %2627 = vmatpush1.bf16.msra.mxu0 0
    %2628 = vmatprep.subr.bf16.mxu0 0
    %2629 = vmatpush1.bf16.msra.mxu0 0
    %2630 = vmatprep.subr.bf16.mxu0 0
    %2631 = vmatpush1.bf16.msra.mxu0 0
    %2632 = vmatprep.subr.bf16.mxu0 0
    %2633 = vmatpush1.bf16.msra.mxu0 0
    %2634 = vmatprep.subr.bf16.mxu0 0
    %2635 = vmatpush1.bf16.msra.mxu0 0
    %2636 = vmatprep.subr.bf16.mxu0 0
    %2637 = vmatpush1.bf16.msra.mxu0 0
    %2638 = vmatprep.subr.bf16.mxu0 0
    %2639 = vmatpush1.bf16.msra.mxu0 0
    %2640 = vmatprep.subr.bf16.mxu0 0
    %2641 = vmatpush1.bf16.msra.mxu0 0
    %2642 = vmatprep.mubr.bf16.mxu0 0
    %2643 = vmatmul.mubr.bf16.gmra.mrb[0].mxu0 %v2608
    %v2644 = vpop.f32.mrb[0].mxu0
    %v2645 = vadd.f32 0.0, %v2644
    %v2646 = vpop.f32.mrb[0].mxu0
    %v2647 = vpop.f32.mrb[0].mxu0
    %v2648 = vpop.f32.mrb[0].mxu0
    %2649 = vdwg.mxu0
    %v2650 = vadd.f32 %v1498, %v2645
    %v2651 = vxor.u32 %v2650, 2147483648
    %v2652 = vmul.f32 %v2651, 1.442695
    %v2653 = vpow.pop %v2652
    %v2654 = vadd.f32 %v2653, 1.0
    %v2655 = vrcp.pop %v2654
    %v2656 = vmul.f32 1.0, %v2655
    %v2657 = vtanh.pop %v2650
    %v2658 = vmul.f32 %v2656, %v2596
    %2660 = vrot.lane.b32.xlu0 %v2657, 64
    %v2661 = vpop.permute.xlu0 %2660
    %v2663 = vmul.f32 %v2656, %v2661
    %2665 = vrot.lane.b32.xlu0 %v2663, 32
    %v2666 = vpop.permute.xlu0 %2665
    %v2668 = vadd.f32 %v2658, %v2666
    %v2669 = vtanh.pop %v2668
    %2671 = vrot.lane.b32.xlu0 %v2669, 64
    %v2672 = vpop.permute.xlu0 %2671
    %v2674 = vmul.f32 %v2656, %v2672
    %v2675 = vpack.c.bf16 %v2674, %v2674
    %2677 = vrot.lane.b32.xlu0 %v2675, 32
    %v2678 = vpop.permute.xlu0 %2677
    %v2680 = vsel %vm71, %v2678, 0
    %2682 = vmatprep.subr.bf16.mxu0 0
    %2683 = vmatpush1.bf16.msra.mxu0 %v1523
    %2684 = vmatprep.subr.bf16.mxu0 0
    %2685 = vmatpush1.bf16.msra.mxu0 %v1524
    %2686 = vmatprep.subr.bf16.mxu0 0
    %2687 = vmatpush1.bf16.msra.mxu0 0
    %2688 = vmatprep.subr.bf16.mxu0 0
    %2689 = vmatpush1.bf16.msra.mxu0 0
    %2690 = vmatprep.subr.bf16.mxu0 0
    %2691 = vmatpush1.bf16.msra.mxu0 0
    %2692 = vmatprep.subr.bf16.mxu0 0
    %2693 = vmatpush1.bf16.msra.mxu0 0
    %2694 = vmatprep.subr.bf16.mxu0 0
    %2695 = vmatpush1.bf16.msra.mxu0 0
    %2696 = vmatprep.subr.bf16.mxu0 0
    %2697 = vmatpush1.bf16.msra.mxu0 0
    %2698 = vmatprep.subr.bf16.mxu0 0
    %2699 = vmatpush1.bf16.msra.mxu0 0
    %2700 = vmatprep.subr.bf16.mxu0 0
    %2701 = vmatpush1.bf16.msra.mxu0 0
    %2702 = vmatprep.subr.bf16.mxu0 0
    %2703 = vmatpush1.bf16.msra.mxu0 0
    %2704 = vmatprep.subr.bf16.mxu0 0
    %2705 = vmatpush1.bf16.msra.mxu0 0
    %2706 = vmatprep.subr.bf16.mxu0 0
    %2707 = vmatpush1.bf16.msra.mxu0 0
    %2708 = vmatprep.subr.bf16.mxu0 0
    %2709 = vmatpush1.bf16.msra.mxu0 0
    %2710 = vmatprep.subr.bf16.mxu0 0
    %2711 = vmatpush1.bf16.msra.mxu0 0
    %2712 = vmatprep.subr.bf16.mxu0 0
    %2713 = vmatpush1.bf16.msra.mxu0 0
    %2714 = vmatprep.mubr.bf16.mxu0 0
    %2715 = vmatmul.mubr.bf16.gmra.mrb[0].mxu0 %v2680
    %v2716 = vpop.f32.mrb[0].mxu0
    %v2717 = vadd.f32 0.0, %v2716
    %v2718 = vpop.f32.mrb[0].mxu0
    %v2719 = vpop.f32.mrb[0].mxu0
    %v2720 = vpop.f32.mrb[0].mxu0
    %2721 = vdwg.mxu0
    %v2722 = vadd.f32 %v1503, %v2717
    %v2723 = vxor.u32 %v2722, 2147483648
    %v2724 = vmul.f32 %v2723, 1.442695
    %v2725 = vpow.pop %v2724
    %v2726 = vadd.f32 %v2725, 1.0
    %v2727 = vrcp.pop %v2726
    %v2728 = vmul.f32 1.0, %v2727
    %v2729 = vtanh.pop %v2722
    %v2730 = vmul.f32 %v2728, %v2668
    %2732 = vrot.lane.b32.xlu0 %v2729, 64
    %v2733 = vpop.permute.xlu0 %2732
    %v2735 = vmul.f32 %v2728, %v2733
    %2737 = vrot.lane.b32.xlu0 %v2735, 32
    %v2738 = vpop.permute.xlu0 %2737
    %v2740 = vadd.f32 %v2730, %v2738
    %v2741 = vtanh.pop %v2740
    %2743 = vrot.lane.b32.xlu0 %v2741, 64
    %v2744 = vpop.permute.xlu0 %2743
    %v2746 = vmul.f32 %v2728, %v2744
    %v2747 = vpack.c.bf16 %v2746, %v2746
    %2749 = vrot.lane.b32.xlu0 %v2747, 32
    %v2750 = vpop.permute.xlu0 %2749
    %v2752 = vsel %vm71, %v2750, 0
    %2754 = vmatprep.subr.bf16.mxu0 0
    %2755 = vmatpush1.bf16.msra.mxu0 %v1523
    %2756 = vmatprep.subr.bf16.mxu0 0
    %2757 = vmatpush1.bf16.msra.mxu0 %v1524
    %2758 = vmatprep.subr.bf16.mxu0 0
    %2759 = vmatpush1.bf16.msra.mxu0 0
    %2760 = vmatprep.subr.bf16.mxu0 0
    %2761 = vmatpush1.bf16.msra.mxu0 0
    %2762 = vmatprep.subr.bf16.mxu0 0
    %2763 = vmatpush1.bf16.msra.mxu0 0
    %2764 = vmatprep.subr.bf16.mxu0 0
    %2765 = vmatpush1.bf16.msra.mxu0 0
    %2766 = vmatprep.subr.bf16.mxu0 0
    %2767 = vmatpush1.bf16.msra.mxu0 0
    %2768 = vmatprep.subr.bf16.mxu0 0
    %2769 = vmatpush1.bf16.msra.mxu0 0
    %2770 = vmatprep.subr.bf16.mxu0 0
    %2771 = vmatpush1.bf16.msra.mxu0 0
    %2772 = vmatprep.subr.bf16.mxu0 0
    %2773 = vmatpush1.bf16.msra.mxu0 0
    %2774 = vmatprep.subr.bf16.mxu0 0
    %2775 = vmatpush1.bf16.msra.mxu0 0
    %2776 = vmatprep.subr.bf16.mxu0 0
    %2777 = vmatpush1.bf16.msra.mxu0 0
    %2778 = vmatprep.subr.bf16.mxu0 0
    %2779 = vmatpush1.bf16.msra.mxu0 0
    %2780 = vmatprep.subr.bf16.mxu0 0
    %2781 = vmatpush1.bf16.msra.mxu0 0
    %2782 = vmatprep.subr.bf16.mxu0 0
    %2783 = vmatpush1.bf16.msra.mxu0 0
    %2784 = vmatprep.subr.bf16.mxu0 0
    %2785 = vmatpush1.bf16.msra.mxu0 0
    %2786 = vmatprep.mubr.bf16.mxu0 0
    %2787 = vmatmul.mubr.bf16.gmra.mrb[0].mxu0 %v2752
    %v2788 = vpop.f32.mrb[0].mxu0
    %v2789 = vadd.f32 0.0, %v2788
    %v2790 = vpop.f32.mrb[0].mxu0
    %v2791 = vpop.f32.mrb[0].mxu0
    %v2792 = vpop.f32.mrb[0].mxu0
    %2793 = vdwg.mxu0
    %v2794 = vadd.f32 %v1508, %v2789
    %v2795 = vxor.u32 %v2794, 2147483648
    %v2796 = vmul.f32 %v2795, 1.442695
    %v2797 = vpow.pop %v2796
    %v2798 = vadd.f32 %v2797, 1.0
    %v2799 = vrcp.pop %v2798
    %v2800 = vmul.f32 1.0, %v2799
    %v2801 = vtanh.pop %v2794
    %v2802 = vmul.f32 %v2800, %v2740
    %2804 = vrot.lane.b32.xlu0 %v2801, 64
    %v2805 = vpop.permute.xlu0 %2804
    %v2807 = vmul.f32 %v2800, %v2805
    %2809 = vrot.lane.b32.xlu0 %v2807, 32
    %v2810 = vpop.permute.xlu0 %2809
    %v2812 = vadd.f32 %v2802, %v2810
    %v2813 = vtanh.pop %v2812
    %2815 = vrot.lane.b32.xlu0 %v2813, 64
    %v2816 = vpop.permute.xlu0 %2815
    %v2818 = vmul.f32 %v2800, %v2816
    %v2820 = vrot.slane %v2818, 2
    %v2822 = vmax.f32 %v2818, %v2820
    %v2823 = vld [vmem:[%s8] sm:$0xff]
    %v2824 = vld [vmem:[%s8 + $0x8] sm:$0xff]
    %v2825 = vld [vmem:[%s8 + $0x10] sm:$0xff]
    %v2826 = vld [vmem:[%s8 + $0x18] sm:$0xff]
    %v2827 = vld [vmem:[%s9] sm:$0x1]
    %v2829 = vlaneseq
    %v2830 = vshrl.u32 %v2829, 7
    %v2831 = vsub.s32 0, %v2830
    %v2832 = vrot.slane %v2827, %v2831
    %2835 = vrot.lane.b32.xlu0 %v2822, 32
    %v2836 = vpop.permute.xlu0 %2835
    %v2837 = vsel %vm71, %v2836, 0
    %2839 = vmatprep.subr.mxu0 0.0
    %2840 = vmatpush1.msra.mxu0 %v2823
    %2841 = vmatprep.subr.mxu0 0.0
    %2842 = vmatpush1.msra.mxu0 %v2824
    %2843 = vmatprep.subr.mxu0 0.0
    %2844 = vmatpush1.msra.mxu0 %v2825
    %2845 = vmatprep.subr.mxu0 0.0
    %2846 = vmatpush1.msra.mxu0 %v2826
    %2847 = vmatprep.subr.mxu0 0.0
    %2848 = vmatpush1.msra.mxu0 0.0
    %2849 = vmatprep.subr.mxu0 0.0
    %2850 = vmatpush1.msra.mxu0 0.0
    %2851 = vmatprep.subr.mxu0 0.0
    %2852 = vmatpush1.msra.mxu0 0.0
    %2853 = vmatprep.subr.mxu0 0.0
    %2854 = vmatpush1.msra.mxu0 0.0
    %2855 = vmatprep.subr.mxu0 0.0
    %2856 = vmatpush1.msra.mxu0 0.0
    %2857 = vmatprep.subr.mxu0 0.0
    %2858 = vmatpush1.msra.mxu0 0.0
    %2859 = vmatprep.subr.mxu0 0.0
    %2860 = vmatpush1.msra.mxu0 0.0
    %2861 = vmatprep.subr.mxu0 0.0
    %2862 = vmatpush1.msra.mxu0 0.0
    %2863 = vmatprep.subr.mxu0 0.0
    %2864 = vmatpush1.msra.mxu0 0.0
    %2865 = vmatprep.subr.mxu0 0.0
    %2866 = vmatpush1.msra.mxu0 0.0
    %2867 = vmatprep.subr.mxu0 0.0
    %2868 = vmatpush1.msra.mxu0 0.0
    %2869 = vmatprep.subr.mxu0 0.0
    %2870 = vmatpush1.msra.mxu0 0.0
    %2871 = vmatprep.subr.mxu0 0.0
    %2872 = vmatpush1.msra.mxu0 0.0
    %2873 = vmatprep.subr.mxu0 0.0
    %2874 = vmatpush1.msra.mxu0 0.0
    %2875 = vmatprep.subr.mxu0 0.0
    %2876 = vmatpush1.msra.mxu0 0.0
    %2877 = vmatprep.subr.mxu0 0.0
    %2878 = vmatpush1.msra.mxu0 0.0
    %2879 = vmatprep.subr.mxu0 0.0
    %2880 = vmatpush1.msra.mxu0 0.0
    %2881 = vmatprep.subr.mxu0 0.0
    %2882 = vmatpush1.msra.mxu0 0.0
    %2883 = vmatprep.subr.mxu0 0.0
    %2884 = vmatpush1.msra.mxu0 0.0
    %2885 = vmatprep.subr.mxu0 0.0
    %2886 = vmatpush1.msra.mxu0 0.0
    %2887 = vmatprep.subr.mxu0 0.0
    %2888 = vmatpush1.msra.mxu0 0.0
    %2889 = vmatprep.subr.mxu0 0.0
    %2890 = vmatpush1.msra.mxu0 0.0
    %2891 = vmatprep.subr.mxu0 0.0
    %2892 = vmatpush1.msra.mxu0 0.0
    %2893 = vmatprep.subr.mxu0 0.0
    %2894 = vmatpush1.msra.mxu0 0.0
    %2895 = vmatprep.subr.mxu0 0.0
    %2896 = vmatpush1.msra.mxu0 0.0
    %2897 = vmatprep.subr.mxu0 0.0
    %2898 = vmatpush1.msra.mxu0 0.0
    %2899 = vmatprep.subr.mxu0 0.0
    %2900 = vmatpush1.msra.mxu0 0.0
    %2901 = vmatprep.subr.mxu0 0.0
    %2902 = vmatpush1.msra.mxu0 0.0
    %2903 = vmatprep.mubr.f32.mxu0 0.0
    %2904 = vmatmul.mubr.f32.gmra.mrb[0].mxu0 %v2837
    %v2905 = vpop.f32.mrb[0].mxu0
    %v2906 = vadd.f32 %v2832, %v2905
    %v2907 = vpop.f32.mrb[0].mxu0
    %2908 = vdwg.mxu0
    %v2909 = vmax.f32 %v2906, 0.0
    %v2910 = vld [vmem:[%s10] sm:$0xff]
    %v2911 = vld [vmem:[%s10 + $0x8] sm:$0xff]
    %v2912 = vld [vmem:[%s10 + $0x10] sm:$0xff]
    %v2913 = vld [vmem:[%s10 + $0x18] sm:$0xff]
    %v2914 = vld [vmem:[%s10 + $0x20] sm:$0xff]
    %v2915 = vld [vmem:[%s10 + $0x28] sm:$0xff]
    %v2916 = vld [vmem:[%s10 + $0x30] sm:$0xff]
    %v2917 = vld [vmem:[%s10 + $0x38] sm:$0xff]
    %v2918 = vld [vmem:[%s10 + $0x40] sm:$0xff]
    %v2919 = vld [vmem:[%s10 + $0x48] sm:$0xff]
    %v2920 = vld [vmem:[%s10 + $0x50] sm:$0xff]
    %v2921 = vld [vmem:[%s10 + $0x58] sm:$0xff]
    %v2922 = vld [vmem:[%s10 + $0x60] sm:$0xff]
    %v2923 = vld [vmem:[%s10 + $0x68] sm:$0xff]
    %v2924 = vld [vmem:[%s10 + $0x70] sm:$0xff]
    %v2925 = vld [vmem:[%s10 + $0x78] sm:$0xff]
    %v2926 = vld [vmem:[%s11] sm:$0x1]
    %v2928 = vlaneseq
    %v2929 = vshrl.u32 %v2928, 7
    %v2930 = vsub.s32 0, %v2929
    %v2931 = vrot.slane %v2926, %v2930
    %2933 = vmatprep.subr.mxu0 0.0
    %2934 = vmatpush1.msra.mxu0 %v2910
    %2935 = vmatprep.subr.mxu0 0.0
    %2936 = vmatpush1.msra.mxu0 %v2911
    %2937 = vmatprep.subr.mxu0 0.0
    %2938 = vmatpush1.msra.mxu0 %v2912
    %2939 = vmatprep.subr.mxu0 0.0
    %2940 = vmatpush1.msra.mxu0 %v2913
    %2941 = vmatprep.subr.mxu0 0.0
    %2942 = vmatpush1.msra.mxu0 %v2914
    %2943 = vmatprep.subr.mxu0 0.0
    %2944 = vmatpush1.msra.mxu0 %v2915
    %2945 = vmatprep.subr.mxu0 0.0
    %2946 = vmatpush1.msra.mxu0 %v2916
    %2947 = vmatprep.subr.mxu0 0.0
    %2948 = vmatpush1.msra.mxu0 %v2917
    %2949 = vmatprep.subr.mxu0 0.0
    %2950 = vmatpush1.msra.mxu0 %v2918
    %2951 = vmatprep.subr.mxu0 0.0
    %2952 = vmatpush1.msra.mxu0 %v2919
    %2953 = vmatprep.subr.mxu0 0.0
    %2954 = vmatpush1.msra.mxu0 %v2920
    %2955 = vmatprep.subr.mxu0 0.0
    %2956 = vmatpush1.msra.mxu0 %v2921
    %2957 = vmatprep.subr.mxu0 0.0
    %2958 = vmatpush1.msra.mxu0 %v2922
    %2959 = vmatprep.subr.mxu0 0.0
    %2960 = vmatpush1.msra.mxu0 %v2923
    %2961 = vmatprep.subr.mxu0 0.0
    %2962 = vmatpush1.msra.mxu0 %v2924
    %2963 = vmatprep.subr.mxu0 0.0
    %2964 = vmatpush1.msra.mxu0 %v2925
    %2965 = vmatprep.subr.mxu0 0.0
    %2966 = vmatpush1.msra.mxu0 0.0
    %2967 = vmatprep.subr.mxu0 0.0
    %2968 = vmatpush1.msra.mxu0 0.0
    %2969 = vmatprep.subr.mxu0 0.0
    %2970 = vmatpush1.msra.mxu0 0.0
    %2971 = vmatprep.subr.mxu0 0.0
    %2972 = vmatpush1.msra.mxu0 0.0
    %2973 = vmatprep.subr.mxu0 0.0
    %2974 = vmatpush1.msra.mxu0 0.0
    %2975 = vmatprep.subr.mxu0 0.0
    %2976 = vmatpush1.msra.mxu0 0.0
    %2977 = vmatprep.subr.mxu0 0.0
    %2978 = vmatpush1.msra.mxu0 0.0
    %2979 = vmatprep.subr.mxu0 0.0
    %2980 = vmatpush1.msra.mxu0 0.0
    %2981 = vmatprep.subr.mxu0 0.0
    %2982 = vmatpush1.msra.mxu0 0.0
    %2983 = vmatprep.subr.mxu0 0.0
    %2984 = vmatpush1.msra.mxu0 0.0
    %2985 = vmatprep.subr.mxu0 0.0
    %2986 = vmatpush1.msra.mxu0 0.0
    %2987 = vmatprep.subr.mxu0 0.0
    %2988 = vmatpush1.msra.mxu0 0.0
    %2989 = vmatprep.subr.mxu0 0.0
    %2990 = vmatpush1.msra.mxu0 0.0
    %2991 = vmatprep.subr.mxu0 0.0
    %2992 = vmatpush1.msra.mxu0 0.0
    %2993 = vmatprep.subr.mxu0 0.0
    %2994 = vmatpush1.msra.mxu0 0.0
    %2995 = vmatprep.subr.mxu0 0.0
    %2996 = vmatpush1.msra.mxu0 0.0
    %2997 = vmatprep.mubr.f32.mxu0 0.0
    %2998 = vmatmul.mubr.f32.gmra.mrb[0].mxu0 %v2909
    %v2999 = vpop.f32.mrb[0].mxu0
    %v3000 = vadd.f32 %v2931, %v2999
    %v3001 = vpop.f32.mrb[0].mxu0
    %3002 = vdwg.mxu0
    %vm3003 = vcmask 9216
    %3004 = vst.msk [vmem:[#allocation4] sm:$0x3] %vm3003, %v3000
    // Predicated region
    $region50: #{model_forward.1} parent=1 // pred_check
      _
    $region51: #{model_forward.1} parent=1 // pred_check_branch
      %3006 = sbr.rel (0) target = $region53
    $region52: #{model_forward.1} parent=1 // pred_region
      %s3008 = ssub.s32 32, 32
      %3009 = vsyncadd [#allocation5], %s3008
      %s3011 = sshll.u32 [#allocation4], 4
      %s3012 = int_to_ptr.vmem [resolvable:$true] %s3011
      %3014 = dma.vmem_to_hbm [thread:$0]  %s3012, 32, %s12, [#allocation5]
    $region53: #{model_forward.1} parent=1 // pred_fallthru
      _
    // Predicated region
    $region54: #{model_forward.1} parent=1 // pred_check
      _
    $region55: #{model_forward.1} parent=1 // pred_check_branch
      %3016 = sbr.rel (0) target = $region57
    $region56: #{model_forward.1} parent=1 // pred_region
      %3017 = dma.done [#allocation5], 32
    $region57: #{model_forward.1} parent=1 // pred_fallthru
      _
    %3018 = vsyncpa [#allocation5], 1

</llo_original>
